<compile_context>
chip_gen: v7x
topology: tpu7x:2x2x1
jax: 0.10.0
libtpu: 0.0.40
codegen_flags: <defaults>
</compile_context>

<pallas_src>
import functools

import numpy as np
import jax
import jax.numpy as jnp
from jax import lax
from jax.experimental import pallas as pl
from jax.experimental.pallas import tpu as pltpu

NODE_DIM = 32
HIDDEN_DIM = 64
NUM_HEADS = 8
HEAD_DIM = HIDDEN_DIM // NUM_HEADS   # 8
OUT_LANES = 128                      # lane-dense output width (node_dim padded to 128)
NEG_INF = -1e30                      # stands in for -inf in the key padding mask


def tgn_kernel(x_ref, key_neg_ref, neg_static_ref,
               kexp_mask_ref, vexp_mask_ref, head_onehot_ref, head_expand_ref,
               wih0_ref, whh0_ref, b0_ref,
               w1cat_ref, b1_ref,
               wqkv_ref, bqkv_ref, wo_ref, bo_ref,
               wm1_ref, bm1_ref, wm2_ref, bm2_ref,
               out_ref,
               lstm_scr,
               *, seq_len, batch_pad):
    f32 = jnp.float32
    H, NH, HD = HIDDEN_DIM, NUM_HEADS, HEAD_DIM
    S, BP = seq_len, batch_pad
    SB = S * BP            # time-major activation rows: r = t*BP + b
    G = NH * SB            # fused attention columns:    j = h*SB + r_key

    x = x_ref[...]                                     # [SB, D] f32

    # ---------------- 2-layer LSTM, wavefront-interleaved ----------------
    # Layer-0 input projection hoisted: ONE slab matmul for all timesteps.
    xg0 = jnp.dot(x, wih0_ref[...], preferred_element_type=f32) + b0_ref[...]   # [SB, 4H]

    whh0 = whh0_ref[...]      # [H, 4H]   gate-concatenated (i,f,g,o)
    w1cat = w1cat_ref[...]    # [2H, 4H]  = [Wih1.T ; Whh1.T]
    b1 = b1_ref[...]          # [1, 4H]

    def split_gates(g):
        gi = jax.nn.sigmoid(g[:, 0:H])
        gf = jax.nn.sigmoid(g[:, H:2 * H])
        gg = jnp.tanh(g[:, 2 * H:3 * H])
        go = jax.nn.sigmoid(g[:, 3 * H:4 * H])
        return gi, gf, gg, go

    h0 = jnp.zeros((BP, H), f32)
    c0 = jnp.zeros((BP, H), f32)
    h1 = jnp.zeros((BP, H), f32)
    c1 = jnp.zeros((BP, H), f32)

    # Wavefront: iteration t computes layer-0 time t and layer-1 time t-1.
    # The two per-iteration matmuls are independent, so their latencies overlap.
    for t in range(S + 1):
        if t < S:
            # layer-0 step t: single fused-gate matmul on the recurrence path
            g0 = xg0[t * BP:(t + 1) * BP, :] + jnp.dot(h0, whh0, preferred_element_type=f32)
            i0, f0, gg0, o0 = split_gates(g0)
            c0_new = f0 * c0 + i0 * gg0
            h0_new = o0 * jnp.tanh(c0_new)
        if t >= 1:
            # layer-1 step t-1: input projection folded into the recurrent matmul
            inp1 = jnp.concatenate([h0, h1], axis=-1)                  # [BP, 2H]
            g1 = jnp.dot(inp1, w1cat, preferred_element_type=f32) + b1
            i1, f1, gg1, o1 = split_gates(g1)
            c1 = f1 * c1 + i1 * gg1
            h1 = o1 * jnp.tanh(c1)
            lstm_scr[(t - 1) * BP:t * BP, :] = h1                      # sublane-aligned store
        if t < S:
            h0, c0 = h0_new, c0_new

    lstm_out = lstm_scr[...]                                           # [SB, H]

    # -------- multi-head self-attention, fused over batch and heads --------
    # (nn.MultiheadAttention with key_padding_mask; dropout = identity.)
    qkv = jnp.dot(lstm_out, wqkv_ref[...], preferred_element_type=f32) + bqkv_ref[...]   # [SB, 3H]
    q = qkv[:, 0:H]
    k = qkv[:, H:2 * H]
    v = qkv[:, 2 * H:3 * H]

    # Block-diagonal "expanded" K / V via precomputed static 0/1 masks.
    k_exp = jnp.tile(k.T, (1, NH)) * kexp_mask_ref[...]                # [H, G]
    v_exp = jnp.tile(v, (NH, 1)) * vexp_mask_ref[...]                  # [G, H]

    scale = 1.0 / (HD ** 0.5)
    scores = (jnp.dot(q, k_exp, preferred_element_type=f32) * scale
              + neg_static_ref[...]                                    # same-batch mask (static)
              + key_neg_ref[...])                                      # key-padding mask (runtime)

    # per-(row, head) softmax without relayouts: row max + matmul group-sums
    m = jnp.max(scores, axis=-1, keepdims=True)                        # [SB, 1]
    e = jnp.exp(scores - m)                                            # masked -> 0
    gsum = jnp.dot(e, head_onehot_ref[...], preferred_element_type=f32)      # [SB, NH]
    ctx_un = jnp.dot(e, v_exp, preferred_element_type=f32)                   # [SB, H]
    denom = jnp.dot(gsum, head_expand_ref[...], preferred_element_type=f32)  # [SB, H]
    ctx = ctx_un * pl.reciprocal(denom, approx=True)

    attn = jnp.dot(ctx, wo_ref[...], preferred_element_type=f32) + bo_ref[...]
    combined = lstm_out + attn                                         # residual

    # ------------- output MLP: Linear -> ReLU -> Linear (lane-padded) -------------
    hmid = jnp.maximum(jnp.dot(combined, wm1_ref[...], preferred_element_type=f32) + bm1_ref[...], 0.0)
    y = jnp.dot(hmid, wm2_ref[...], preferred_element_type=f32) + bm2_ref[...]   # [SB, 128]
    out_ref[...] = y.astype(out_ref.dtype)         # single full-lane, unmasked store


def _static_attention_geometry(S, BP):
    """Purely shape-dependent attention constants (numpy, baked at trace time)."""
    H, NH, HD = HIDDEN_DIM, NUM_HEADS, HEAD_DIM
    SB = S * BP
    G = NH * SB
    i = np.arange(SB)
    j = np.arange(G)
    d = np.arange(H)
    col_key = j % SB
    col_head = j // SB
    same_batch = (i[:, None] % BP) == (col_key[None, :] % BP)
    neg_static = np.where(same_batch, 0.0, NEG_INF).astype(np.float32)              # [SB, G]
    kexp_mask = ((d[:, None] // HD) == col_head[None, :]).astype(np.float32)        # [H, G]
    vexp_mask = np.ascontiguousarray(kexp_mask.T)                                   # [G, H]
    head_onehot = (col_head[:, None] == np.arange(NH)[None, :]).astype(np.float32)  # [G, NH]
    head_expand = (np.arange(NH)[:, None] == (d[None, :] // HD)).astype(np.float32) # [NH, H]
    return neg_static, kexp_mask, vexp_mask, head_onehot, head_expand


def make_params(key, node_dim=NODE_DIM, hidden_dim=HIDDEN_DIM):
    """Parameters in PyTorch-native layout."""
    H = hidden_dim
    ks = jax.random.split(key, 16)

    def init(k, shape, scale=0.1):
        return scale * jax.random.normal(k, shape, dtype=jnp.float32)

    return dict(
        w_ih_l0=init(ks[0], (4 * H, node_dim)), w_hh_l0=init(ks[1], (4 * H, H)),
        b_ih_l0=init(ks[2], (4 * H,)), b_hh_l0=init(ks[3], (4 * H,)),
        w_ih_l1=init(ks[4], (4 * H, H)), w_hh_l1=init(ks[5], (4 * H, H)),
        b_ih_l1=init(ks[6], (4 * H,)), b_hh_l1=init(ks[7], (4 * H,)),
        in_proj_w=init(ks[8], (3 * H, H)), in_proj_b=init(ks[9], (3 * H,)),
        out_proj_w=init(ks[10], (H, H)), out_proj_b=init(ks[11], (H,)),
        mlp_w1=init(ks[12], (H, H)), mlp_b1=init(ks[13], (H,)),
        mlp_w2=init(ks[14], (node_dim, H)), mlp_b2=init(ks[15], (node_dim,)),
    )


@jax.jit
def temporal_graph_network(node_sequences, attention_mask, params):
    """node_sequences: [B, S, node_dim] f32; attention_mask: [B, S] (1.0 = valid)."""
    B, S, D = node_sequences.shape
    H, NH = HIDDEN_DIM, NUM_HEADS
    BP = ((B + 7) // 8) * 8          # pad batch to a sublane multiple (8)
    SB = S * BP
    G = NH * SB

    # ---- wrapper-side layout plumbing (XLA ops, cheap) ----
    # pad batch: inputs with zeros, mask with ones (padded rows are discarded later)
    x_pad = jnp.pad(node_sequences.astype(jnp.float32), ((0, BP - B), (0, 0), (0, 0)))
    mask_pad = jnp.pad(attention_mask.astype(jnp.float32), ((0, BP - B), (0, 0)),
                       constant_values=1.0)

    # time-major rows: r = t*BP + b
    x_tm = jnp.transpose(x_pad, (1, 0, 2)).reshape(SB, D)
    key_valid = jnp.transpose(mask_pad, (1, 0)).reshape(1, SB)
    key_neg = jnp.tile(jnp.where(key_valid > 0.5, 0.0, NEG_INF), (1, NH))   # [1, G]

    neg_static, kexp_mask, vexp_mask, head_onehot, head_expand = _static_attention_geometry(S, BP)

    # LSTM weights: gate-concatenated (i,f,g,o) and pre-transposed for plain x @ W
    wih0 = params['w_ih_l0'].T                                              # [D, 4H]
    whh0 = params['w_hh_l0'].T                                              # [H, 4H]
    b0 = (params['b_ih_l0'] + params['b_hh_l0']).reshape(1, 4 * H)
    w1cat = jnp.concatenate([params['w_ih_l1'].T, params['w_hh_l1'].T], axis=0)   # [2H, 4H]
    b1 = (params['b_ih_l1'] + params['b_hh_l1']).reshape(1, 4 * H)

    # Attention weights: fused QKV projection, pre-transposed
    wqkv = params['in_proj_w'].T                                            # [H, 3H]
    bqkv = params['in_proj_b'].reshape(1, 3 * H)
    wo = params['out_proj_w'].T
    bo = params['out_proj_b'].reshape(1, H)

    # MLP weights; final projection lane-padded to 128 for an unmasked output store
    wm1 = params['mlp_w1'].T
    bm1 = params['mlp_b1'].reshape(1, H)
    wm2 = jnp.zeros((H, OUT_LANES), jnp.float32).at[:, :D].set(params['mlp_w2'].T)
    bm2 = jnp.zeros((1, OUT_LANES), jnp.float32).at[:, :D].set(params['mlp_b2'].reshape(1, D))

    inputs = (x_tm, key_neg,
              jnp.asarray(neg_static), jnp.asarray(kexp_mask), jnp.asarray(vexp_mask),
              jnp.asarray(head_onehot), jnp.asarray(head_expand),
              wih0, whh0, b0, w1cat, b1,
              wqkv, bqkv, wo, bo, wm1, bm1, wm2, bm2)

    flops = int(2 * SB * D * 4 * H                 # hoisted layer-0 input projection
                + S * (2 * BP * H * 4 * H          # layer-0 recurrent matmuls
                       + 2 * BP * 2 * H * 4 * H)   # layer-1 fused input+recurrent matmuls
                + 2 * SB * H * 3 * H               # QKV projection
                + 2 * SB * H * G                   # fused scores
                + 2 * SB * G * (H + NH)            # e @ V_exp + group sums
                + 2 * SB * NH * H                  # denominator expansion
                + 2 * 2 * SB * H * H               # attn out-proj + MLP hidden
                + 2 * SB * H * OUT_LANES)          # MLP output (lane-padded)
    transcendentals = int(2 * S * 5 * BP * H + SB * G + SB * H)
    bytes_accessed = int(sum(int(np.prod(a.shape)) for a in inputs) * 4 + SB * OUT_LANES * 4)

    vmem = pl.BlockSpec(memory_space=pltpu.MemorySpace.VMEM)
    kernel = functools.partial(tgn_kernel, seq_len=S, batch_pad=BP)

    out_tm = pl.pallas_call(
        kernel,
        out_shape=jax.ShapeDtypeStruct((SB, OUT_LANES), jnp.float32),
        in_specs=[vmem] * len(inputs),
        out_specs=vmem,
        scratch_shapes=[pltpu.VMEM((SB, H), jnp.float32)],
        cost_estimate=pl.CostEstimate(flops=flops,
                                      transcendentals=transcendentals,
                                      bytes_accessed=bytes_accessed),
    )(*inputs)

    # back to PyTorch layout [B, S, D]: drop batch padding and output lane padding
    out = out_tm.reshape(S, BP, OUT_LANES)[:, :B, :D]
    return jnp.transpose(out, (1, 0, 2))


if __name__ == "__main__":
    key = jax.random.PRNGKey(0)
    kx, kp = jax.random.split(key)
    B, S = 2, 8
    x = jax.random.normal(kx, (B, S, NODE_DIM), dtype=jnp.float32)
    mask = jnp.ones((B, S), dtype=jnp.float32).at[1, 6:].set(0.0)   # last 2 steps of row 1 padded
    params = make_params(kp)

    out = temporal_graph_network(x, mask, params)
    out = jax.block_until_ready(out)
    assert out.shape == (B, S, NODE_DIM) and out.dtype == jnp.float32
    assert bool(jnp.all(jnp.isfinite(out)))
    print("KERNEL_OK")
</pallas_src>

<mosaic_0001>
module attributes {stable_mosaic.version = 11 : i64} {
  func.func @tgn_kernel(%arg0: memref<64x32xf32, #tpu.memory_space<vmem>>, %arg1: memref<1x512xf32, #tpu.memory_space<vmem>>, %arg2: memref<64x512xf32, #tpu.memory_space<vmem>>, %arg3: memref<64x512xf32, #tpu.memory_space<vmem>>, %arg4: memref<512x64xf32, #tpu.memory_space<vmem>>, %arg5: memref<512x8xf32, #tpu.memory_space<vmem>>, %arg6: memref<8x64xf32, #tpu.memory_space<vmem>>, %arg7: memref<32x256xf32, #tpu.memory_space<vmem>>, %arg8: memref<64x256xf32, #tpu.memory_space<vmem>>, %arg9: memref<1x256xf32, #tpu.memory_space<vmem>>, %arg10: memref<128x256xf32, #tpu.memory_space<vmem>>, %arg11: memref<1x256xf32, #tpu.memory_space<vmem>>, %arg12: memref<64x192xf32, #tpu.memory_space<vmem>>, %arg13: memref<1x192xf32, #tpu.memory_space<vmem>>, %arg14: memref<64x64xf32, #tpu.memory_space<vmem>>, %arg15: memref<1x64xf32, #tpu.memory_space<vmem>>, %arg16: memref<64x64xf32, #tpu.memory_space<vmem>>, %arg17: memref<1x64xf32, #tpu.memory_space<vmem>>, %arg18: memref<64x128xf32, #tpu.memory_space<vmem>>, %arg19: memref<1x128xf32, #tpu.memory_space<vmem>>, %arg20: memref<64x128xf32, #tpu.memory_space<vmem>>, %arg21: memref<64x64xf32, #tpu.memory_space<vmem>>) attributes {dimension_semantics = [], scalar_prefetch = 0 : i64, scratch_operands = 1 : i64, tpu.core_type = #tpu.core_type<tc>} {
    %c0 = arith.constant 0 : index
    %c0_0 = arith.constant 0 : index
    %0 = vector.load %arg0[%c0, %c0_0] : memref<64x32xf32, #tpu.memory_space<vmem>>, vector<64x32xf32>
    %c0_1 = arith.constant 0 : index
    %c0_2 = arith.constant 0 : index
    %1 = vector.load %arg7[%c0_1, %c0_2] : memref<32x256xf32, #tpu.memory_space<vmem>>, vector<32x256xf32>
    %cst = arith.constant dense<0.000000e+00> : vector<64x256xf32>
    %2 = tpu.matmul %0, %1, %cst {dimension_numbers = #tpu.dot_dimension_numbers<[1], [0], [0], [1], [0, 0, 1, 1], [], []>} : vector<64x32xf32>, vector<32x256xf32>, vector<64x256xf32> -> vector<64x256xf32>
    %c0_3 = arith.constant 0 : index
    %c0_4 = arith.constant 0 : index
    %3 = vector.load %arg9[%c0_3, %c0_4] : memref<1x256xf32, #tpu.memory_space<vmem>>, vector<1x256xf32>
    %4 = vector.broadcast %3 : vector<1x256xf32> to vector<64x256xf32>
    %5 = arith.addf %2, %4 : vector<64x256xf32>
    %c0_5 = arith.constant 0 : index
    %c0_6 = arith.constant 0 : index
    %6 = vector.load %arg8[%c0_5, %c0_6] : memref<64x256xf32, #tpu.memory_space<vmem>>, vector<64x256xf32>
    %c0_7 = arith.constant 0 : index
    %c0_8 = arith.constant 0 : index
    %7 = vector.load %arg10[%c0_7, %c0_8] : memref<128x256xf32, #tpu.memory_space<vmem>>, vector<128x256xf32>
    %c0_9 = arith.constant 0 : index
    %c0_10 = arith.constant 0 : index
    %8 = vector.load %arg11[%c0_9, %c0_10] : memref<1x256xf32, #tpu.memory_space<vmem>>, vector<1x256xf32>
    %cst_11 = arith.constant 0.000000e+00 : f32
    %9 = vector.broadcast %cst_11 : f32 to vector<8x64xf32>
    %cst_12 = arith.constant 0.000000e+00 : f32
    %10 = vector.broadcast %cst_12 : f32 to vector<8x64xf32>
    %cst_13 = arith.constant 0.000000e+00 : f32
    %11 = vector.broadcast %cst_13 : f32 to vector<8x64xf32>
    %cst_14 = arith.constant 0.000000e+00 : f32
    %12 = vector.broadcast %cst_14 : f32 to vector<8x64xf32>
    %13 = vector.extract_strided_slice %5 {offsets = [0, 0], sizes = [8, 256], strides = [1, 1]} : vector<64x256xf32> to vector<8x256xf32>
    %cst_15 = arith.constant dense<0.000000e+00> : vector<8x256xf32>
    %14 = tpu.matmul %9, %6, %cst_15 {dimension_numbers = #tpu.dot_dimension_numbers<[1], [0], [0], [1], [0, 0, 1, 1], [], []>} : vector<8x64xf32>, vector<64x256xf32>, vector<8x256xf32> -> vector<8x256xf32>
    %15 = arith.addf %13, %14 : vector<8x256xf32>
    %16 = vector.extract_strided_slice %15 {offsets = [0, 0], sizes = [8, 64], strides = [1, 1]} : vector<8x256xf32> to vector<8x64xf32>
    %17 = arith.negf %16 : vector<8x64xf32>
    %18 = math.exp %17 : vector<8x64xf32>
    %cst_16 = arith.constant 1.000000e+00 : f32
    %19 = vector.broadcast %cst_16 : f32 to vector<8x64xf32>
    %20 = arith.addf %19, %18 : vector<8x64xf32>
    %21 = arith.divf %19, %20 : vector<8x64xf32>
    %22 = vector.extract_strided_slice %15 {offsets = [0, 64], sizes = [8, 64], strides = [1, 1]} : vector<8x256xf32> to vector<8x64xf32>
    %23 = arith.negf %22 : vector<8x64xf32>
    %24 = math.exp %23 : vector<8x64xf32>
    %cst_17 = arith.constant 1.000000e+00 : f32
    %25 = vector.broadcast %cst_17 : f32 to vector<8x64xf32>
    %26 = arith.addf %25, %24 : vector<8x64xf32>
    %27 = arith.divf %25, %26 : vector<8x64xf32>
    %28 = vector.extract_strided_slice %15 {offsets = [0, 128], sizes = [8, 64], strides = [1, 1]} : vector<8x256xf32> to vector<8x64xf32>
    %29 = math.tanh %28 : vector<8x64xf32>
    %30 = vector.extract_strided_slice %15 {offsets = [0, 192], sizes = [8, 64], strides = [1, 1]} : vector<8x256xf32> to vector<8x64xf32>
    %31 = arith.negf %30 : vector<8x64xf32>
    %32 = math.exp %31 : vector<8x64xf32>
    %cst_18 = arith.constant 1.000000e+00 : f32
    %33 = vector.broadcast %cst_18 : f32 to vector<8x64xf32>
    %34 = arith.addf %33, %32 : vector<8x64xf32>
    %35 = arith.divf %33, %34 : vector<8x64xf32>
    %36 = arith.mulf %27, %10 : vector<8x64xf32>
    %37 = arith.mulf %21, %29 : vector<8x64xf32>
    %38 = arith.addf %36, %37 : vector<8x64xf32>
    %39 = math.tanh %38 : vector<8x64xf32>
    %40 = arith.mulf %35, %39 : vector<8x64xf32>
    %41 = vector.extract_strided_slice %5 {offsets = [8, 0], sizes = [8, 256], strides = [1, 1]} : vector<64x256xf32> to vector<8x256xf32>
    %cst_19 = arith.constant dense<0.000000e+00> : vector<8x256xf32>
    %42 = tpu.matmul %40, %6, %cst_19 {dimension_numbers = #tpu.dot_dimension_numbers<[1], [0], [0], [1], [0, 0, 1, 1], [], []>} : vector<8x64xf32>, vector<64x256xf32>, vector<8x256xf32> -> vector<8x256xf32>
    %43 = arith.addf %41, %42 : vector<8x256xf32>
    %44 = vector.extract_strided_slice %43 {offsets = [0, 0], sizes = [8, 64], strides = [1, 1]} : vector<8x256xf32> to vector<8x64xf32>
    %45 = arith.negf %44 : vector<8x64xf32>
    %46 = math.exp %45 : vector<8x64xf32>
    %cst_20 = arith.constant 1.000000e+00 : f32
    %47 = vector.broadcast %cst_20 : f32 to vector<8x64xf32>
    %48 = arith.addf %47, %46 : vector<8x64xf32>
    %49 = arith.divf %47, %48 : vector<8x64xf32>
    %50 = vector.extract_strided_slice %43 {offsets = [0, 64], sizes = [8, 64], strides = [1, 1]} : vector<8x256xf32> to vector<8x64xf32>
    %51 = arith.negf %50 : vector<8x64xf32>
    %52 = math.exp %51 : vector<8x64xf32>
    %cst_21 = arith.constant 1.000000e+00 : f32
    %53 = vector.broadcast %cst_21 : f32 to vector<8x64xf32>
    %54 = arith.addf %53, %52 : vector<8x64xf32>
    %55 = arith.divf %53, %54 : vector<8x64xf32>
    %56 = vector.extract_strided_slice %43 {offsets = [0, 128], sizes = [8, 64], strides = [1, 1]} : vector<8x256xf32> to vector<8x64xf32>
    %57 = math.tanh %56 : vector<8x64xf32>
    %58 = vector.extract_strided_slice %43 {offsets = [0, 192], sizes = [8, 64], strides = [1, 1]} : vector<8x256xf32> to vector<8x64xf32>
    %59 = arith.negf %58 : vector<8x64xf32>
    %60 = math.exp %59 : vector<8x64xf32>
    %cst_22 = arith.constant 1.000000e+00 : f32
    %61 = vector.broadcast %cst_22 : f32 to vector<8x64xf32>
    %62 = arith.addf %61, %60 : vector<8x64xf32>
    %63 = arith.divf %61, %62 : vector<8x64xf32>
    %64 = arith.mulf %55, %38 : vector<8x64xf32>
    %65 = arith.mulf %49, %57 : vector<8x64xf32>
    %66 = arith.addf %64, %65 : vector<8x64xf32>
    %67 = math.tanh %66 : vector<8x64xf32>
    %68 = arith.mulf %63, %67 : vector<8x64xf32>
    %69 = tpu.concatenate %40, %11 in 1 : vector<8x64xf32>, vector<8x64xf32> -> vector<8x128xf32>
    %cst_23 = arith.constant dense<0.000000e+00> : vector<8x256xf32>
    %70 = tpu.matmul %69, %7, %cst_23 {dimension_numbers = #tpu.dot_dimension_numbers<[1], [0], [0], [1], [0, 0, 1, 1], [], []>} : vector<8x128xf32>, vector<128x256xf32>, vector<8x256xf32> -> vector<8x256xf32>
    %71 = vector.broadcast %8 : vector<1x256xf32> to vector<8x256xf32>
    %72 = arith.addf %70, %71 : vector<8x256xf32>
    %73 = vector.extract_strided_slice %72 {offsets = [0, 0], sizes = [8, 64], strides = [1, 1]} : vector<8x256xf32> to vector<8x64xf32>
    %74 = arith.negf %73 : vector<8x64xf32>
    %75 = math.exp %74 : vector<8x64xf32>
    %cst_24 = arith.constant 1.000000e+00 : f32
    %76 = vector.broadcast %cst_24 : f32 to vector<8x64xf32>
    %77 = arith.addf %76, %75 : vector<8x64xf32>
    %78 = arith.divf %76, %77 : vector<8x64xf32>
    %79 = vector.extract_strided_slice %72 {offsets = [0, 64], sizes = [8, 64], strides = [1, 1]} : vector<8x256xf32> to vector<8x64xf32>
    %80 = arith.negf %79 : vector<8x64xf32>
    %81 = math.exp %80 : vector<8x64xf32>
    %cst_25 = arith.constant 1.000000e+00 : f32
    %82 = vector.broadcast %cst_25 : f32 to vector<8x64xf32>
    %83 = arith.addf %82, %81 : vector<8x64xf32>
    %84 = arith.divf %82, %83 : vector<8x64xf32>
    %85 = vector.extract_strided_slice %72 {offsets = [0, 128], sizes = [8, 64], strides = [1, 1]} : vector<8x256xf32> to vector<8x64xf32>
    %86 = math.tanh %85 : vector<8x64xf32>
    %87 = vector.extract_strided_slice %72 {offsets = [0, 192], sizes = [8, 64], strides = [1, 1]} : vector<8x256xf32> to vector<8x64xf32>
    %88 = arith.negf %87 : vector<8x64xf32>
    %89 = math.exp %88 : vector<8x64xf32>
    %cst_26 = arith.constant 1.000000e+00 : f32
    %90 = vector.broadcast %cst_26 : f32 to vector<8x64xf32>
    %91 = arith.addf %90, %89 : vector<8x64xf32>
    %92 = arith.divf %90, %91 : vector<8x64xf32>
    %93 = arith.mulf %84, %12 : vector<8x64xf32>
    %94 = arith.mulf %78, %86 : vector<8x64xf32>
    %95 = arith.addf %93, %94 : vector<8x64xf32>
    %96 = math.tanh %95 : vector<8x64xf32>
    %97 = arith.mulf %92, %96 : vector<8x64xf32>
    %c0_27 = arith.constant 0 : index
    %c0_28 = arith.constant 0 : index
    %98 = vector.load %arg21[%c0_27, %c0_28] : memref<64x64xf32, #tpu.memory_space<vmem>>, vector<8x64xf32>
    tpu.vector_store %arg21[%c0_27, %c0_28], %97 {strides = array<i32>} : memref<64x64xf32, #tpu.memory_space<vmem>>, vector<8x64xf32>,
    %99 = vector.extract_strided_slice %5 {offsets = [16, 0], sizes = [8, 256], strides = [1, 1]} : vector<64x256xf32> to vector<8x256xf32>
    %cst_29 = arith.constant dense<0.000000e+00> : vector<8x256xf32>
    %100 = tpu.matmul %68, %6, %cst_29 {dimension_numbers = #tpu.dot_dimension_numbers<[1], [0], [0], [1], [0, 0, 1, 1], [], []>} : vector<8x64xf32>, vector<64x256xf32>, vector<8x256xf32> -> vector<8x256xf32>
    %101 = arith.addf %99, %100 : vector<8x256xf32>
    %102 = vector.extract_strided_slice %101 {offsets = [0, 0], sizes = [8, 64], strides = [1, 1]} : vector<8x256xf32> to vector<8x64xf32>
    %103 = arith.negf %102 : vector<8x64xf32>
    %104 = math.exp %103 : vector<8x64xf32>
    %cst_30 = arith.constant 1.000000e+00 : f32
    %105 = vector.broadcast %cst_30 : f32 to vector<8x64xf32>
    %106 = arith.addf %105, %104 : vector<8x64xf32>
    %107 = arith.divf %105, %106 : vector<8x64xf32>
    %108 = vector.extract_strided_slice %101 {offsets = [0, 64], sizes = [8, 64], strides = [1, 1]} : vector<8x256xf32> to vector<8x64xf32>
    %109 = arith.negf %108 : vector<8x64xf32>
    %110 = math.exp %109 : vector<8x64xf32>
    %cst_31 = arith.constant 1.000000e+00 : f32
    %111 = vector.broadcast %cst_31 : f32 to vector<8x64xf32>
    %112 = arith.addf %111, %110 : vector<8x64xf32>
    %113 = arith.divf %111, %112 : vector<8x64xf32>
    %114 = vector.extract_strided_slice %101 {offsets = [0, 128], sizes = [8, 64], strides = [1, 1]} : vector<8x256xf32> to vector<8x64xf32>
    %115 = math.tanh %114 : vector<8x64xf32>
    %116 = vector.extract_strided_slice %101 {offsets = [0, 192], sizes = [8, 64], strides = [1, 1]} : vector<8x256xf32> to vector<8x64xf32>
    %117 = arith.negf %116 : vector<8x64xf32>
    %118 = math.exp %117 : vector<8x64xf32>
    %cst_32 = arith.constant 1.000000e+00 : f32
    %119 = vector.broadcast %cst_32 : f32 to vector<8x64xf32>
    %120 = arith.addf %119, %118 : vector<8x64xf32>
    %121 = arith.divf %119, %120 : vector<8x64xf32>
    %122 = arith.mulf %113, %66 : vector<8x64xf32>
    %123 = arith.mulf %107, %115 : vector<8x64xf32>
    %124 = arith.addf %122, %123 : vector<8x64xf32>
    %125 = math.tanh %124 : vector<8x64xf32>
    %126 = arith.mulf %121, %125 : vector<8x64xf32>
    %127 = tpu.concatenate %68, %97 in 1 : vector<8x64xf32>, vector<8x64xf32> -> vector<8x128xf32>
    %cst_33 = arith.constant dense<0.000000e+00> : vector<8x256xf32>
    %128 = tpu.matmul %127, %7, %cst_33 {dimension_numbers = #tpu.dot_dimension_numbers<[1], [0], [0], [1], [0, 0, 1, 1], [], []>} : vector<8x128xf32>, vector<128x256xf32>, vector<8x256xf32> -> vector<8x256xf32>
    %129 = vector.broadcast %8 : vector<1x256xf32> to vector<8x256xf32>
    %130 = arith.addf %128, %129 : vector<8x256xf32>
    %131 = vector.extract_strided_slice %130 {offsets = [0, 0], sizes = [8, 64], strides = [1, 1]} : vector<8x256xf32> to vector<8x64xf32>
    %132 = arith.negf %131 : vector<8x64xf32>
    %133 = math.exp %132 : vector<8x64xf32>
    %cst_34 = arith.constant 1.000000e+00 : f32
    %134 = vector.broadcast %cst_34 : f32 to vector<8x64xf32>
    %135 = arith.addf %134, %133 : vector<8x64xf32>
    %136 = arith.divf %134, %135 : vector<8x64xf32>
    %137 = vector.extract_strided_slice %130 {offsets = [0, 64], sizes = [8, 64], strides = [1, 1]} : vector<8x256xf32> to vector<8x64xf32>
    %138 = arith.negf %137 : vector<8x64xf32>
    %139 = math.exp %138 : vector<8x64xf32>
    %cst_35 = arith.constant 1.000000e+00 : f32
    %140 = vector.broadcast %cst_35 : f32 to vector<8x64xf32>
    %141 = arith.addf %140, %139 : vector<8x64xf32>
    %142 = arith.divf %140, %141 : vector<8x64xf32>
    %143 = vector.extract_strided_slice %130 {offsets = [0, 128], sizes = [8, 64], strides = [1, 1]} : vector<8x256xf32> to vector<8x64xf32>
    %144 = math.tanh %143 : vector<8x64xf32>
    %145 = vector.extract_strided_slice %130 {offsets = [0, 192], sizes = [8, 64], strides = [1, 1]} : vector<8x256xf32> to vector<8x64xf32>
    %146 = arith.negf %145 : vector<8x64xf32>
    %147 = math.exp %146 : vector<8x64xf32>
    %cst_36 = arith.constant 1.000000e+00 : f32
    %148 = vector.broadcast %cst_36 : f32 to vector<8x64xf32>
    %149 = arith.addf %148, %147 : vector<8x64xf32>
    %150 = arith.divf %148, %149 : vector<8x64xf32>
    %151 = arith.mulf %142, %95 : vector<8x64xf32>
    %152 = arith.mulf %136, %144 : vector<8x64xf32>
    %153 = arith.addf %151, %152 : vector<8x64xf32>
    %154 = math.tanh %153 : vector<8x64xf32>
    %155 = arith.mulf %150, %154 : vector<8x64xf32>
    %c8 = arith.constant 8 : index
    %c0_37 = arith.constant 0 : index
    %156 = vector.load %arg21[%c8, %c0_37] : memref<64x64xf32, #tpu.memory_space<vmem>>, vector<8x64xf32>
    tpu.vector_store %arg21[%c8, %c0_37], %155 {strides = array<i32>} : memref<64x64xf32, #tpu.memory_space<vmem>>, vector<8x64xf32>,
    %157 = vector.extract_strided_slice %5 {offsets = [24, 0], sizes = [8, 256], strides = [1, 1]} : vector<64x256xf32> to vector<8x256xf32>
    %cst_38 = arith.constant dense<0.000000e+00> : vector<8x256xf32>
    %158 = tpu.matmul %126, %6, %cst_38 {dimension_numbers = #tpu.dot_dimension_numbers<[1], [0], [0], [1], [0, 0, 1, 1], [], []>} : vector<8x64xf32>, vector<64x256xf32>, vector<8x256xf32> -> vector<8x256xf32>
    %159 = arith.addf %157, %158 : vector<8x256xf32>
    %160 = vector.extract_strided_slice %159 {offsets = [0, 0], sizes = [8, 64], strides = [1, 1]} : vector<8x256xf32> to vector<8x64xf32>
    %161 = arith.negf %160 : vector<8x64xf32>
    %162 = math.exp %161 : vector<8x64xf32>
    %cst_39 = arith.constant 1.000000e+00 : f32
    %163 = vector.broadcast %cst_39 : f32 to vector<8x64xf32>
    %164 = arith.addf %163, %162 : vector<8x64xf32>
    %165 = arith.divf %163, %164 : vector<8x64xf32>
    %166 = vector.extract_strided_slice %159 {offsets = [0, 64], sizes = [8, 64], strides = [1, 1]} : vector<8x256xf32> to vector<8x64xf32>
    %167 = arith.negf %166 : vector<8x64xf32>
    %168 = math.exp %167 : vector<8x64xf32>
    %cst_40 = arith.constant 1.000000e+00 : f32
    %169 = vector.broadcast %cst_40 : f32 to vector<8x64xf32>
    %170 = arith.addf %169, %168 : vector<8x64xf32>
    %171 = arith.divf %169, %170 : vector<8x64xf32>
    %172 = vector.extract_strided_slice %159 {offsets = [0, 128], sizes = [8, 64], strides = [1, 1]} : vector<8x256xf32> to vector<8x64xf32>
    %173 = math.tanh %172 : vector<8x64xf32>
    %174 = vector.extract_strided_slice %159 {offsets = [0, 192], sizes = [8, 64], strides = [1, 1]} : vector<8x256xf32> to vector<8x64xf32>
    %175 = arith.negf %174 : vector<8x64xf32>
    %176 = math.exp %175 : vector<8x64xf32>
    %cst_41 = arith.constant 1.000000e+00 : f32
    %177 = vector.broadcast %cst_41 : f32 to vector<8x64xf32>
    %178 = arith.addf %177, %176 : vector<8x64xf32>
    %179 = arith.divf %177, %178 : vector<8x64xf32>
    %180 = arith.mulf %171, %124 : vector<8x64xf32>
    %181 = arith.mulf %165, %173 : vector<8x64xf32>
    %182 = arith.addf %180, %181 : vector<8x64xf32>
    %183 = math.tanh %182 : vector<8x64xf32>
    %184 = arith.mulf %179, %183 : vector<8x64xf32>
    %185 = tpu.concatenate %126, %155 in 1 : vector<8x64xf32>, vector<8x64xf32> -> vector<8x128xf32>
    %cst_42 = arith.constant dense<0.000000e+00> : vector<8x256xf32>
    %186 = tpu.matmul %185, %7, %cst_42 {dimension_numbers = #tpu.dot_dimension_numbers<[1], [0], [0], [1], [0, 0, 1, 1], [], []>} : vector<8x128xf32>, vector<128x256xf32>, vector<8x256xf32> -> vector<8x256xf32>
    %187 = vector.broadcast %8 : vector<1x256xf32> to vector<8x256xf32>
    %188 = arith.addf %186, %187 : vector<8x256xf32>
    %189 = vector.extract_strided_slice %188 {offsets = [0, 0], sizes = [8, 64], strides = [1, 1]} : vector<8x256xf32> to vector<8x64xf32>
    %190 = arith.negf %189 : vector<8x64xf32>
    %191 = math.exp %190 : vector<8x64xf32>
    %cst_43 = arith.constant 1.000000e+00 : f32
    %192 = vector.broadcast %cst_43 : f32 to vector<8x64xf32>
    %193 = arith.addf %192, %191 : vector<8x64xf32>
    %194 = arith.divf %192, %193 : vector<8x64xf32>
    %195 = vector.extract_strided_slice %188 {offsets = [0, 64], sizes = [8, 64], strides = [1, 1]} : vector<8x256xf32> to vector<8x64xf32>
    %196 = arith.negf %195 : vector<8x64xf32>
    %197 = math.exp %196 : vector<8x64xf32>
    %cst_44 = arith.constant 1.000000e+00 : f32
    %198 = vector.broadcast %cst_44 : f32 to vector<8x64xf32>
    %199 = arith.addf %198, %197 : vector<8x64xf32>
    %200 = arith.divf %198, %199 : vector<8x64xf32>
    %201 = vector.extract_strided_slice %188 {offsets = [0, 128], sizes = [8, 64], strides = [1, 1]} : vector<8x256xf32> to vector<8x64xf32>
    %202 = math.tanh %201 : vector<8x64xf32>
    %203 = vector.extract_strided_slice %188 {offsets = [0, 192], sizes = [8, 64], strides = [1, 1]} : vector<8x256xf32> to vector<8x64xf32>
    %204 = arith.negf %203 : vector<8x64xf32>
    %205 = math.exp %204 : vector<8x64xf32>
    %cst_45 = arith.constant 1.000000e+00 : f32
    %206 = vector.broadcast %cst_45 : f32 to vector<8x64xf32>
    %207 = arith.addf %206, %205 : vector<8x64xf32>
    %208 = arith.divf %206, %207 : vector<8x64xf32>
    %209 = arith.mulf %200, %153 : vector<8x64xf32>
    %210 = arith.mulf %194, %202 : vector<8x64xf32>
    %211 = arith.addf %209, %210 : vector<8x64xf32>
    %212 = math.tanh %211 : vector<8x64xf32>
    %213 = arith.mulf %208, %212 : vector<8x64xf32>
    %c16 = arith.constant 16 : index
    %c0_46 = arith.constant 0 : index
    %214 = vector.load %arg21[%c16, %c0_46] : memref<64x64xf32, #tpu.memory_space<vmem>>, vector<8x64xf32>
    tpu.vector_store %arg21[%c16, %c0_46], %213 {strides = array<i32>} : memref<64x64xf32, #tpu.memory_space<vmem>>, vector<8x64xf32>,
    %215 = vector.extract_strided_slice %5 {offsets = [32, 0], sizes = [8, 256], strides = [1, 1]} : vector<64x256xf32> to vector<8x256xf32>
    %cst_47 = arith.constant dense<0.000000e+00> : vector<8x256xf32>
    %216 = tpu.matmul %184, %6, %cst_47 {dimension_numbers = #tpu.dot_dimension_numbers<[1], [0], [0], [1], [0, 0, 1, 1], [], []>} : vector<8x64xf32>, vector<64x256xf32>, vector<8x256xf32> -> vector<8x256xf32>
    %217 = arith.addf %215, %216 : vector<8x256xf32>
    %218 = vector.extract_strided_slice %217 {offsets = [0, 0], sizes = [8, 64], strides = [1, 1]} : vector<8x256xf32> to vector<8x64xf32>
    %219 = arith.negf %218 : vector<8x64xf32>
    %220 = math.exp %219 : vector<8x64xf32>
    %cst_48 = arith.constant 1.000000e+00 : f32
    %221 = vector.broadcast %cst_48 : f32 to vector<8x64xf32>
    %222 = arith.addf %221, %220 : vector<8x64xf32>
    %223 = arith.divf %221, %222 : vector<8x64xf32>
    %224 = vector.extract_strided_slice %217 {offsets = [0, 64], sizes = [8, 64], strides = [1, 1]} : vector<8x256xf32> to vector<8x64xf32>
    %225 = arith.negf %224 : vector<8x64xf32>
    %226 = math.exp %225 : vector<8x64xf32>
    %cst_49 = arith.constant 1.000000e+00 : f32
    %227 = vector.broadcast %cst_49 : f32 to vector<8x64xf32>
    %228 = arith.addf %227, %226 : vector<8x64xf32>
    %229 = arith.divf %227, %228 : vector<8x64xf32>
    %230 = vector.extract_strided_slice %217 {offsets = [0, 128], sizes = [8, 64], strides = [1, 1]} : vector<8x256xf32> to vector<8x64xf32>
    %231 = math.tanh %230 : vector<8x64xf32>
    %232 = vector.extract_strided_slice %217 {offsets = [0, 192], sizes = [8, 64], strides = [1, 1]} : vector<8x256xf32> to vector<8x64xf32>
    %233 = arith.negf %232 : vector<8x64xf32>
    %234 = math.exp %233 : vector<8x64xf32>
    %cst_50 = arith.constant 1.000000e+00 : f32
    %235 = vector.broadcast %cst_50 : f32 to vector<8x64xf32>
    %236 = arith.addf %235, %234 : vector<8x64xf32>
    %237 = arith.divf %235, %236 : vector<8x64xf32>
    %238 = arith.mulf %229, %182 : vector<8x64xf32>
    %239 = arith.mulf %223, %231 : vector<8x64xf32>
    %240 = arith.addf %238, %239 : vector<8x64xf32>
    %241 = math.tanh %240 : vector<8x64xf32>
    %242 = arith.mulf %237, %241 : vector<8x64xf32>
    %243 = tpu.concatenate %184, %213 in 1 : vector<8x64xf32>, vector<8x64xf32> -> vector<8x128xf32>
    %cst_51 = arith.constant dense<0.000000e+00> : vector<8x256xf32>
    %244 = tpu.matmul %243, %7, %cst_51 {dimension_numbers = #tpu.dot_dimension_numbers<[1], [0], [0], [1], [0, 0, 1, 1], [], []>} : vector<8x128xf32>, vector<128x256xf32>, vector<8x256xf32> -> vector<8x256xf32>
    %245 = vector.broadcast %8 : vector<1x256xf32> to vector<8x256xf32>
    %246 = arith.addf %244, %245 : vector<8x256xf32>
    %247 = vector.extract_strided_slice %246 {offsets = [0, 0], sizes = [8, 64], strides = [1, 1]} : vector<8x256xf32> to vector<8x64xf32>
    %248 = arith.negf %247 : vector<8x64xf32>
    %249 = math.exp %248 : vector<8x64xf32>
    %cst_52 = arith.constant 1.000000e+00 : f32
    %250 = vector.broadcast %cst_52 : f32 to vector<8x64xf32>
    %251 = arith.addf %250, %249 : vector<8x64xf32>
    %252 = arith.divf %250, %251 : vector<8x64xf32>
    %253 = vector.extract_strided_slice %246 {offsets = [0, 64], sizes = [8, 64], strides = [1, 1]} : vector<8x256xf32> to vector<8x64xf32>
    %254 = arith.negf %253 : vector<8x64xf32>
    %255 = math.exp %254 : vector<8x64xf32>
    %cst_53 = arith.constant 1.000000e+00 : f32
    %256 = vector.broadcast %cst_53 : f32 to vector<8x64xf32>
    %257 = arith.addf %256, %255 : vector<8x64xf32>
    %258 = arith.divf %256, %257 : vector<8x64xf32>
    %259 = vector.extract_strided_slice %246 {offsets = [0, 128], sizes = [8, 64], strides = [1, 1]} : vector<8x256xf32> to vector<8x64xf32>
    %260 = math.tanh %259 : vector<8x64xf32>
    %261 = vector.extract_strided_slice %246 {offsets = [0, 192], sizes = [8, 64], strides = [1, 1]} : vector<8x256xf32> to vector<8x64xf32>
    %262 = arith.negf %261 : vector<8x64xf32>
    %263 = math.exp %262 : vector<8x64xf32>
    %cst_54 = arith.constant 1.000000e+00 : f32
    %264 = vector.broadcast %cst_54 : f32 to vector<8x64xf32>
    %265 = arith.addf %264, %263 : vector<8x64xf32>
    %266 = arith.divf %264, %265 : vector<8x64xf32>
    %267 = arith.mulf %258, %211 : vector<8x64xf32>
    %268 = arith.mulf %252, %260 : vector<8x64xf32>
    %269 = arith.addf %267, %268 : vector<8x64xf32>
    %270 = math.tanh %269 : vector<8x64xf32>
    %271 = arith.mulf %266, %270 : vector<8x64xf32>
    %c24 = arith.constant 24 : index
    %c0_55 = arith.constant 0 : index
    %272 = vector.load %arg21[%c24, %c0_55] : memref<64x64xf32, #tpu.memory_space<vmem>>, vector<8x64xf32>
    tpu.vector_store %arg21[%c24, %c0_55], %271 {strides = array<i32>} : memref<64x64xf32, #tpu.memory_space<vmem>>, vector<8x64xf32>,
    %273 = vector.extract_strided_slice %5 {offsets = [40, 0], sizes = [8, 256], strides = [1, 1]} : vector<64x256xf32> to vector<8x256xf32>
    %cst_56 = arith.constant dense<0.000000e+00> : vector<8x256xf32>
    %274 = tpu.matmul %242, %6, %cst_56 {dimension_numbers = #tpu.dot_dimension_numbers<[1], [0], [0], [1], [0, 0, 1, 1], [], []>} : vector<8x64xf32>, vector<64x256xf32>, vector<8x256xf32> -> vector<8x256xf32>
    %275 = arith.addf %273, %274 : vector<8x256xf32>
    %276 = vector.extract_strided_slice %275 {offsets = [0, 0], sizes = [8, 64], strides = [1, 1]} : vector<8x256xf32> to vector<8x64xf32>
    %277 = arith.negf %276 : vector<8x64xf32>
    %278 = math.exp %277 : vector<8x64xf32>
    %cst_57 = arith.constant 1.000000e+00 : f32
    %279 = vector.broadcast %cst_57 : f32 to vector<8x64xf32>
    %280 = arith.addf %279, %278 : vector<8x64xf32>
    %281 = arith.divf %279, %280 : vector<8x64xf32>
    %282 = vector.extract_strided_slice %275 {offsets = [0, 64], sizes = [8, 64], strides = [1, 1]} : vector<8x256xf32> to vector<8x64xf32>
    %283 = arith.negf %282 : vector<8x64xf32>
    %284 = math.exp %283 : vector<8x64xf32>
    %cst_58 = arith.constant 1.000000e+00 : f32
    %285 = vector.broadcast %cst_58 : f32 to vector<8x64xf32>
    %286 = arith.addf %285, %284 : vector<8x64xf32>
    %287 = arith.divf %285, %286 : vector<8x64xf32>
    %288 = vector.extract_strided_slice %275 {offsets = [0, 128], sizes = [8, 64], strides = [1, 1]} : vector<8x256xf32> to vector<8x64xf32>
    %289 = math.tanh %288 : vector<8x64xf32>
    %290 = vector.extract_strided_slice %275 {offsets = [0, 192], sizes = [8, 64], strides = [1, 1]} : vector<8x256xf32> to vector<8x64xf32>
    %291 = arith.negf %290 : vector<8x64xf32>
    %292 = math.exp %291 : vector<8x64xf32>
    %cst_59 = arith.constant 1.000000e+00 : f32
    %293 = vector.broadcast %cst_59 : f32 to vector<8x64xf32>
    %294 = arith.addf %293, %292 : vector<8x64xf32>
    %295 = arith.divf %293, %294 : vector<8x64xf32>
    %296 = arith.mulf %287, %240 : vector<8x64xf32>
    %297 = arith.mulf %281, %289 : vector<8x64xf32>
    %298 = arith.addf %296, %297 : vector<8x64xf32>
    %299 = math.tanh %298 : vector<8x64xf32>
    %300 = arith.mulf %295, %299 : vector<8x64xf32>
    %301 = tpu.concatenate %242, %271 in 1 : vector<8x64xf32>, vector<8x64xf32> -> vector<8x128xf32>
    %cst_60 = arith.constant dense<0.000000e+00> : vector<8x256xf32>
    %302 = tpu.matmul %301, %7, %cst_60 {dimension_numbers = #tpu.dot_dimension_numbers<[1], [0], [0], [1], [0, 0, 1, 1], [], []>} : vector<8x128xf32>, vector<128x256xf32>, vector<8x256xf32> -> vector<8x256xf32>
    %303 = vector.broadcast %8 : vector<1x256xf32> to vector<8x256xf32>
    %304 = arith.addf %302, %303 : vector<8x256xf32>
    %305 = vector.extract_strided_slice %304 {offsets = [0, 0], sizes = [8, 64], strides = [1, 1]} : vector<8x256xf32> to vector<8x64xf32>
    %306 = arith.negf %305 : vector<8x64xf32>
    %307 = math.exp %306 : vector<8x64xf32>
    %cst_61 = arith.constant 1.000000e+00 : f32
    %308 = vector.broadcast %cst_61 : f32 to vector<8x64xf32>
    %309 = arith.addf %308, %307 : vector<8x64xf32>
    %310 = arith.divf %308, %309 : vector<8x64xf32>
    %311 = vector.extract_strided_slice %304 {offsets = [0, 64], sizes = [8, 64], strides = [1, 1]} : vector<8x256xf32> to vector<8x64xf32>
    %312 = arith.negf %311 : vector<8x64xf32>
    %313 = math.exp %312 : vector<8x64xf32>
    %cst_62 = arith.constant 1.000000e+00 : f32
    %314 = vector.broadcast %cst_62 : f32 to vector<8x64xf32>
    %315 = arith.addf %314, %313 : vector<8x64xf32>
    %316 = arith.divf %314, %315 : vector<8x64xf32>
    %317 = vector.extract_strided_slice %304 {offsets = [0, 128], sizes = [8, 64], strides = [1, 1]} : vector<8x256xf32> to vector<8x64xf32>
    %318 = math.tanh %317 : vector<8x64xf32>
    %319 = vector.extract_strided_slice %304 {offsets = [0, 192], sizes = [8, 64], strides = [1, 1]} : vector<8x256xf32> to vector<8x64xf32>
    %320 = arith.negf %319 : vector<8x64xf32>
    %321 = math.exp %320 : vector<8x64xf32>
    %cst_63 = arith.constant 1.000000e+00 : f32
    %322 = vector.broadcast %cst_63 : f32 to vector<8x64xf32>
    %323 = arith.addf %322, %321 : vector<8x64xf32>
    %324 = arith.divf %322, %323 : vector<8x64xf32>
    %325 = arith.mulf %316, %269 : vector<8x64xf32>
    %326 = arith.mulf %310, %318 : vector<8x64xf32>
    %327 = arith.addf %325, %326 : vector<8x64xf32>
    %328 = math.tanh %327 : vector<8x64xf32>
    %329 = arith.mulf %324, %328 : vector<8x64xf32>
    %c32 = arith.constant 32 : index
    %c0_64 = arith.constant 0 : index
    %330 = vector.load %arg21[%c32, %c0_64] : memref<64x64xf32, #tpu.memory_space<vmem>>, vector<8x64xf32>
    tpu.vector_store %arg21[%c32, %c0_64], %329 {strides = array<i32>} : memref<64x64xf32, #tpu.memory_space<vmem>>, vector<8x64xf32>,
    %331 = vector.extract_strided_slice %5 {offsets = [48, 0], sizes = [8, 256], strides = [1, 1]} : vector<64x256xf32> to vector<8x256xf32>
    %cst_65 = arith.constant dense<0.000000e+00> : vector<8x256xf32>
    %332 = tpu.matmul %300, %6, %cst_65 {dimension_numbers = #tpu.dot_dimension_numbers<[1], [0], [0], [1], [0, 0, 1, 1], [], []>} : vector<8x64xf32>, vector<64x256xf32>, vector<8x256xf32> -> vector<8x256xf32>
    %333 = arith.addf %331, %332 : vector<8x256xf32>
    %334 = vector.extract_strided_slice %333 {offsets = [0, 0], sizes = [8, 64], strides = [1, 1]} : vector<8x256xf32> to vector<8x64xf32>
    %335 = arith.negf %334 : vector<8x64xf32>
    %336 = math.exp %335 : vector<8x64xf32>
    %cst_66 = arith.constant 1.000000e+00 : f32
    %337 = vector.broadcast %cst_66 : f32 to vector<8x64xf32>
    %338 = arith.addf %337, %336 : vector<8x64xf32>
    %339 = arith.divf %337, %338 : vector<8x64xf32>
    %340 = vector.extract_strided_slice %333 {offsets = [0, 64], sizes = [8, 64], strides = [1, 1]} : vector<8x256xf32> to vector<8x64xf32>
    %341 = arith.negf %340 : vector<8x64xf32>
    %342 = math.exp %341 : vector<8x64xf32>
    %cst_67 = arith.constant 1.000000e+00 : f32
    %343 = vector.broadcast %cst_67 : f32 to vector<8x64xf32>
    %344 = arith.addf %343, %342 : vector<8x64xf32>
    %345 = arith.divf %343, %344 : vector<8x64xf32>
    %346 = vector.extract_strided_slice %333 {offsets = [0, 128], sizes = [8, 64], strides = [1, 1]} : vector<8x256xf32> to vector<8x64xf32>
    %347 = math.tanh %346 : vector<8x64xf32>
    %348 = vector.extract_strided_slice %333 {offsets = [0, 192], sizes = [8, 64], strides = [1, 1]} : vector<8x256xf32> to vector<8x64xf32>
    %349 = arith.negf %348 : vector<8x64xf32>
    %350 = math.exp %349 : vector<8x64xf32>
    %cst_68 = arith.constant 1.000000e+00 : f32
    %351 = vector.broadcast %cst_68 : f32 to vector<8x64xf32>
    %352 = arith.addf %351, %350 : vector<8x64xf32>
    %353 = arith.divf %351, %352 : vector<8x64xf32>
    %354 = arith.mulf %345, %298 : vector<8x64xf32>
    %355 = arith.mulf %339, %347 : vector<8x64xf32>
    %356 = arith.addf %354, %355 : vector<8x64xf32>
    %357 = math.tanh %356 : vector<8x64xf32>
    %358 = arith.mulf %353, %357 : vector<8x64xf32>
    %359 = tpu.concatenate %300, %329 in 1 : vector<8x64xf32>, vector<8x64xf32> -> vector<8x128xf32>
    %cst_69 = arith.constant dense<0.000000e+00> : vector<8x256xf32>
    %360 = tpu.matmul %359, %7, %cst_69 {dimension_numbers = #tpu.dot_dimension_numbers<[1], [0], [0], [1], [0, 0, 1, 1], [], []>} : vector<8x128xf32>, vector<128x256xf32>, vector<8x256xf32> -> vector<8x256xf32>
    %361 = vector.broadcast %8 : vector<1x256xf32> to vector<8x256xf32>
    %362 = arith.addf %360, %361 : vector<8x256xf32>
    %363 = vector.extract_strided_slice %362 {offsets = [0, 0], sizes = [8, 64], strides = [1, 1]} : vector<8x256xf32> to vector<8x64xf32>
    %364 = arith.negf %363 : vector<8x64xf32>
    %365 = math.exp %364 : vector<8x64xf32>
    %cst_70 = arith.constant 1.000000e+00 : f32
    %366 = vector.broadcast %cst_70 : f32 to vector<8x64xf32>
    %367 = arith.addf %366, %365 : vector<8x64xf32>
    %368 = arith.divf %366, %367 : vector<8x64xf32>
    %369 = vector.extract_strided_slice %362 {offsets = [0, 64], sizes = [8, 64], strides = [1, 1]} : vector<8x256xf32> to vector<8x64xf32>
    %370 = arith.negf %369 : vector<8x64xf32>
    %371 = math.exp %370 : vector<8x64xf32>
    %cst_71 = arith.constant 1.000000e+00 : f32
    %372 = vector.broadcast %cst_71 : f32 to vector<8x64xf32>
    %373 = arith.addf %372, %371 : vector<8x64xf32>
    %374 = arith.divf %372, %373 : vector<8x64xf32>
    %375 = vector.extract_strided_slice %362 {offsets = [0, 128], sizes = [8, 64], strides = [1, 1]} : vector<8x256xf32> to vector<8x64xf32>
    %376 = math.tanh %375 : vector<8x64xf32>
    %377 = vector.extract_strided_slice %362 {offsets = [0, 192], sizes = [8, 64], strides = [1, 1]} : vector<8x256xf32> to vector<8x64xf32>
    %378 = arith.negf %377 : vector<8x64xf32>
    %379 = math.exp %378 : vector<8x64xf32>
    %cst_72 = arith.constant 1.000000e+00 : f32
    %380 = vector.broadcast %cst_72 : f32 to vector<8x64xf32>
    %381 = arith.addf %380, %379 : vector<8x64xf32>
    %382 = arith.divf %380, %381 : vector<8x64xf32>
    %383 = arith.mulf %374, %327 : vector<8x64xf32>
    %384 = arith.mulf %368, %376 : vector<8x64xf32>
    %385 = arith.addf %383, %384 : vector<8x64xf32>
    %386 = math.tanh %385 : vector<8x64xf32>
    %387 = arith.mulf %382, %386 : vector<8x64xf32>
    %c40 = arith.constant 40 : index
    %c0_73 = arith.constant 0 : index
    %388 = vector.load %arg21[%c40, %c0_73] : memref<64x64xf32, #tpu.memory_space<vmem>>, vector<8x64xf32>
    tpu.vector_store %arg21[%c40, %c0_73], %387 {strides = array<i32>} : memref<64x64xf32, #tpu.memory_space<vmem>>, vector<8x64xf32>,
    %389 = vector.extract_strided_slice %5 {offsets = [56, 0], sizes = [8, 256], strides = [1, 1]} : vector<64x256xf32> to vector<8x256xf32>
    %cst_74 = arith.constant dense<0.000000e+00> : vector<8x256xf32>
    %390 = tpu.matmul %358, %6, %cst_74 {dimension_numbers = #tpu.dot_dimension_numbers<[1], [0], [0], [1], [0, 0, 1, 1], [], []>} : vector<8x64xf32>, vector<64x256xf32>, vector<8x256xf32> -> vector<8x256xf32>
    %391 = arith.addf %389, %390 : vector<8x256xf32>
    %392 = vector.extract_strided_slice %391 {offsets = [0, 0], sizes = [8, 64], strides = [1, 1]} : vector<8x256xf32> to vector<8x64xf32>
    %393 = arith.negf %392 : vector<8x64xf32>
    %394 = math.exp %393 : vector<8x64xf32>
    %cst_75 = arith.constant 1.000000e+00 : f32
    %395 = vector.broadcast %cst_75 : f32 to vector<8x64xf32>
    %396 = arith.addf %395, %394 : vector<8x64xf32>
    %397 = arith.divf %395, %396 : vector<8x64xf32>
    %398 = vector.extract_strided_slice %391 {offsets = [0, 64], sizes = [8, 64], strides = [1, 1]} : vector<8x256xf32> to vector<8x64xf32>
    %399 = arith.negf %398 : vector<8x64xf32>
    %400 = math.exp %399 : vector<8x64xf32>
    %cst_76 = arith.constant 1.000000e+00 : f32
    %401 = vector.broadcast %cst_76 : f32 to vector<8x64xf32>
    %402 = arith.addf %401, %400 : vector<8x64xf32>
    %403 = arith.divf %401, %402 : vector<8x64xf32>
    %404 = vector.extract_strided_slice %391 {offsets = [0, 128], sizes = [8, 64], strides = [1, 1]} : vector<8x256xf32> to vector<8x64xf32>
    %405 = math.tanh %404 : vector<8x64xf32>
    %406 = vector.extract_strided_slice %391 {offsets = [0, 192], sizes = [8, 64], strides = [1, 1]} : vector<8x256xf32> to vector<8x64xf32>
    %407 = arith.negf %406 : vector<8x64xf32>
    %408 = math.exp %407 : vector<8x64xf32>
    %cst_77 = arith.constant 1.000000e+00 : f32
    %409 = vector.broadcast %cst_77 : f32 to vector<8x64xf32>
    %410 = arith.addf %409, %408 : vector<8x64xf32>
    %411 = arith.divf %409, %410 : vector<8x64xf32>
    %412 = arith.mulf %403, %356 : vector<8x64xf32>
    %413 = arith.mulf %397, %405 : vector<8x64xf32>
    %414 = arith.addf %412, %413 : vector<8x64xf32>
    %415 = math.tanh %414 : vector<8x64xf32>
    %416 = arith.mulf %411, %415 : vector<8x64xf32>
    %417 = tpu.concatenate %358, %387 in 1 : vector<8x64xf32>, vector<8x64xf32> -> vector<8x128xf32>
    %cst_78 = arith.constant dense<0.000000e+00> : vector<8x256xf32>
    %418 = tpu.matmul %417, %7, %cst_78 {dimension_numbers = #tpu.dot_dimension_numbers<[1], [0], [0], [1], [0, 0, 1, 1], [], []>} : vector<8x128xf32>, vector<128x256xf32>, vector<8x256xf32> -> vector<8x256xf32>
    %419 = vector.broadcast %8 : vector<1x256xf32> to vector<8x256xf32>
    %420 = arith.addf %418, %419 : vector<8x256xf32>
    %421 = vector.extract_strided_slice %420 {offsets = [0, 0], sizes = [8, 64], strides = [1, 1]} : vector<8x256xf32> to vector<8x64xf32>
    %422 = arith.negf %421 : vector<8x64xf32>
    %423 = math.exp %422 : vector<8x64xf32>
    %cst_79 = arith.constant 1.000000e+00 : f32
    %424 = vector.broadcast %cst_79 : f32 to vector<8x64xf32>
    %425 = arith.addf %424, %423 : vector<8x64xf32>
    %426 = arith.divf %424, %425 : vector<8x64xf32>
    %427 = vector.extract_strided_slice %420 {offsets = [0, 64], sizes = [8, 64], strides = [1, 1]} : vector<8x256xf32> to vector<8x64xf32>
    %428 = arith.negf %427 : vector<8x64xf32>
    %429 = math.exp %428 : vector<8x64xf32>
    %cst_80 = arith.constant 1.000000e+00 : f32
    %430 = vector.broadcast %cst_80 : f32 to vector<8x64xf32>
    %431 = arith.addf %430, %429 : vector<8x64xf32>
    %432 = arith.divf %430, %431 : vector<8x64xf32>
    %433 = vector.extract_strided_slice %420 {offsets = [0, 128], sizes = [8, 64], strides = [1, 1]} : vector<8x256xf32> to vector<8x64xf32>
    %434 = math.tanh %433 : vector<8x64xf32>
    %435 = vector.extract_strided_slice %420 {offsets = [0, 192], sizes = [8, 64], strides = [1, 1]} : vector<8x256xf32> to vector<8x64xf32>
    %436 = arith.negf %435 : vector<8x64xf32>
    %437 = math.exp %436 : vector<8x64xf32>
    %cst_81 = arith.constant 1.000000e+00 : f32
    %438 = vector.broadcast %cst_81 : f32 to vector<8x64xf32>
    %439 = arith.addf %438, %437 : vector<8x64xf32>
    %440 = arith.divf %438, %439 : vector<8x64xf32>
    %441 = arith.mulf %432, %385 : vector<8x64xf32>
    %442 = arith.mulf %426, %434 : vector<8x64xf32>
    %443 = arith.addf %441, %442 : vector<8x64xf32>
    %444 = math.tanh %443 : vector<8x64xf32>
    %445 = arith.mulf %440, %444 : vector<8x64xf32>
    %c48 = arith.constant 48 : index
    %c0_82 = arith.constant 0 : index
    %446 = vector.load %arg21[%c48, %c0_82] : memref<64x64xf32, #tpu.memory_space<vmem>>, vector<8x64xf32>
    tpu.vector_store %arg21[%c48, %c0_82], %445 {strides = array<i32>} : memref<64x64xf32, #tpu.memory_space<vmem>>, vector<8x64xf32>,
    %447 = tpu.concatenate %416, %445 in 1 : vector<8x64xf32>, vector<8x64xf32> -> vector<8x128xf32>
    %cst_83 = arith.constant dense<0.000000e+00> : vector<8x256xf32>
    %448 = tpu.matmul %447, %7, %cst_83 {dimension_numbers = #tpu.dot_dimension_numbers<[1], [0], [0], [1], [0, 0, 1, 1], [], []>} : vector<8x128xf32>, vector<128x256xf32>, vector<8x256xf32> -> vector<8x256xf32>
    %449 = vector.broadcast %8 : vector<1x256xf32> to vector<8x256xf32>
    %450 = arith.addf %448, %449 : vector<8x256xf32>
    %451 = vector.extract_strided_slice %450 {offsets = [0, 0], sizes = [8, 64], strides = [1, 1]} : vector<8x256xf32> to vector<8x64xf32>
    %452 = arith.negf %451 : vector<8x64xf32>
    %453 = math.exp %452 : vector<8x64xf32>
    %cst_84 = arith.constant 1.000000e+00 : f32
    %454 = vector.broadcast %cst_84 : f32 to vector<8x64xf32>
    %455 = arith.addf %454, %453 : vector<8x64xf32>
    %456 = arith.divf %454, %455 : vector<8x64xf32>
    %457 = vector.extract_strided_slice %450 {offsets = [0, 64], sizes = [8, 64], strides = [1, 1]} : vector<8x256xf32> to vector<8x64xf32>
    %458 = arith.negf %457 : vector<8x64xf32>
    %459 = math.exp %458 : vector<8x64xf32>
    %cst_85 = arith.constant 1.000000e+00 : f32
    %460 = vector.broadcast %cst_85 : f32 to vector<8x64xf32>
    %461 = arith.addf %460, %459 : vector<8x64xf32>
    %462 = arith.divf %460, %461 : vector<8x64xf32>
    %463 = vector.extract_strided_slice %450 {offsets = [0, 128], sizes = [8, 64], strides = [1, 1]} : vector<8x256xf32> to vector<8x64xf32>
    %464 = math.tanh %463 : vector<8x64xf32>
    %465 = vector.extract_strided_slice %450 {offsets = [0, 192], sizes = [8, 64], strides = [1, 1]} : vector<8x256xf32> to vector<8x64xf32>
    %466 = arith.negf %465 : vector<8x64xf32>
    %467 = math.exp %466 : vector<8x64xf32>
    %cst_86 = arith.constant 1.000000e+00 : f32
    %468 = vector.broadcast %cst_86 : f32 to vector<8x64xf32>
    %469 = arith.addf %468, %467 : vector<8x64xf32>
    %470 = arith.divf %468, %469 : vector<8x64xf32>
    %471 = arith.mulf %462, %443 : vector<8x64xf32>
    %472 = arith.mulf %456, %464 : vector<8x64xf32>
    %473 = arith.addf %471, %472 : vector<8x64xf32>
    %474 = math.tanh %473 : vector<8x64xf32>
    %475 = arith.mulf %470, %474 : vector<8x64xf32>
    %c56 = arith.constant 56 : index
    %c0_87 = arith.constant 0 : index
    %476 = vector.load %arg21[%c56, %c0_87] : memref<64x64xf32, #tpu.memory_space<vmem>>, vector<8x64xf32>
    tpu.vector_store %arg21[%c56, %c0_87], %475 {strides = array<i32>} : memref<64x64xf32, #tpu.memory_space<vmem>>, vector<8x64xf32>,
    %c0_88 = arith.constant 0 : index
    %c0_89 = arith.constant 0 : index
    %477 = vector.load %arg21[%c0_88, %c0_89] : memref<64x64xf32, #tpu.memory_space<vmem>>, vector<64x64xf32>
    %c0_90 = arith.constant 0 : index
    %c0_91 = arith.constant 0 : index
    %478 = vector.load %arg12[%c0_90, %c0_91] : memref<64x192xf32, #tpu.memory_space<vmem>>, vector<64x192xf32>
    %cst_92 = arith.constant dense<0.000000e+00> : vector<64x192xf32>
    %479 = tpu.matmul %477, %478, %cst_92 {dimension_numbers = #tpu.dot_dimension_numbers<[1], [0], [0], [1], [0, 0, 1, 1], [], []>} : vector<64x64xf32>, vector<64x192xf32>, vector<64x192xf32> -> vector<64x192xf32>
    %c0_93 = arith.constant 0 : index
    %c0_94 = arith.constant 0 : index
    %480 = vector.load %arg13[%c0_93, %c0_94] : memref<1x192xf32, #tpu.memory_space<vmem>>, vector<1x192xf32>
    %481 = vector.broadcast %480 : vector<1x192xf32> to vector<64x192xf32>
    %482 = arith.addf %479, %481 : vector<64x192xf32>
    %483 = vector.extract_strided_slice %482 {offsets = [0, 0], sizes = [64, 64], strides = [1, 1]} : vector<64x192xf32> to vector<64x64xf32>
    %484 = vector.extract_strided_slice %482 {offsets = [0, 64], sizes = [64, 64], strides = [1, 1]} : vector<64x192xf32> to vector<64x64xf32>
    %485 = vector.extract_strided_slice %482 {offsets = [0, 128], sizes = [64, 64], strides = [1, 1]} : vector<64x192xf32> to vector<64x64xf32>
    %486 = tpu.transpose %484, [1, 0] : vector<64x64xf32> -> vector<64x64xf32>
    %487 = tpu.concatenate %486, %486, %486, %486, %486, %486, %486, %486 in 1 : vector<64x64xf32>, vector<64x64xf32>, vector<64x64xf32>, vector<64x64xf32>, vector<64x64xf32>, vector<64x64xf32>, vector<64x64xf32>, vector<64x64xf32> -> vector<64x512xf32>
    %c0_95 = arith.constant 0 : index
    %c0_96 = arith.constant 0 : index
    %488 = vector.load %arg3[%c0_95, %c0_96] : memref<64x512xf32, #tpu.memory_space<vmem>>, vector<64x512xf32>
    %489 = arith.mulf %487, %488 : vector<64x512xf32>
    %490 = tpu.concatenate %485, %485, %485, %485, %485, %485, %485, %485 in 0 : vector<64x64xf32>, vector<64x64xf32>, vector<64x64xf32>, vector<64x64xf32>, vector<64x64xf32>, vector<64x64xf32>, vector<64x64xf32>, vector<64x64xf32> -> vector<512x64xf32>
    %c0_97 = arith.constant 0 : index
    %c0_98 = arith.constant 0 : index
    %491 = vector.load %arg4[%c0_97, %c0_98] : memref<512x64xf32, #tpu.memory_space<vmem>>, vector<512x64xf32>
    %492 = arith.mulf %490, %491 : vector<512x64xf32>
    %cst_99 = arith.constant dense<0.000000e+00> : vector<64x512xf32>
    %493 = tpu.matmul %483, %489, %cst_99 {dimension_numbers = #tpu.dot_dimension_numbers<[1], [0], [0], [1], [0, 0, 1, 1], [], []>} : vector<64x64xf32>, vector<64x512xf32>, vector<64x512xf32> -> vector<64x512xf32>
    %cst_100 = arith.constant 0.353553385 : f32
    %494 = vector.broadcast %cst_100 : f32 to vector<64x512xf32>
    %495 = arith.mulf %493, %494 : vector<64x512xf32>
    %c0_101 = arith.constant 0 : index
    %c0_102 = arith.constant 0 : index
    %496 = vector.load %arg2[%c0_101, %c0_102] : memref<64x512xf32, #tpu.memory_space<vmem>>, vector<64x512xf32>
    %497 = arith.addf %495, %496 : vector<64x512xf32>
    %c0_103 = arith.constant 0 : index
    %c0_104 = arith.constant 0 : index
    %498 = vector.load %arg1[%c0_103, %c0_104] : memref<1x512xf32, #tpu.memory_space<vmem>>, vector<1x512xf32>
    %499 = vector.shape_cast %498 : vector<1x512xf32> to vector<1x512xf32>
    %500 = vector.broadcast %499 : vector<1x512xf32> to vector<64x512xf32>
    %501 = arith.addf %497, %500 : vector<64x512xf32>
    %cst_105 = arith.constant dense<0xFF800000> : vector<64xf32>
    %502 = vector.multi_reduction <maximumf>, %501, %cst_105 [1] : vector<64x512xf32> to vector<64xf32>
    %503 = vector.shape_cast %502 : vector<64xf32> to vector<64x1xf32>
    %504 = vector.broadcast %503 : vector<64x1xf32> to vector<64x512xf32>
    %505 = arith.subf %501, %504 : vector<64x512xf32>
    %506 = math.exp %505 : vector<64x512xf32>
    %c0_106 = arith.constant 0 : index
    %c0_107 = arith.constant 0 : index
    %507 = vector.load %arg5[%c0_106, %c0_107] : memref<512x8xf32, #tpu.memory_space<vmem>>, vector<512x8xf32>
    %cst_108 = arith.constant dense<0.000000e+00> : vector<64x8xf32>
    %508 = tpu.matmul %506, %507, %cst_108 {dimension_numbers = #tpu.dot_dimension_numbers<[1], [0], [0], [1], [0, 0, 1, 1], [], []>} : vector<64x512xf32>, vector<512x8xf32>, vector<64x8xf32> -> vector<64x8xf32>
    %cst_109 = arith.constant dense<0.000000e+00> : vector<64x64xf32>
    %509 = tpu.matmul %506, %492, %cst_109 {dimension_numbers = #tpu.dot_dimension_numbers<[1], [0], [0], [1], [0, 0, 1, 1], [], []>} : vector<64x512xf32>, vector<512x64xf32>, vector<64x64xf32> -> vector<64x64xf32>
    %c0_110 = arith.constant 0 : index
    %c0_111 = arith.constant 0 : index
    %510 = vector.load %arg6[%c0_110, %c0_111] : memref<8x64xf32, #tpu.memory_space<vmem>>, vector<8x64xf32>
    %cst_112 = arith.constant dense<0.000000e+00> : vector<64x64xf32>
    %511 = tpu.matmul %508, %510, %cst_112 {dimension_numbers = #tpu.dot_dimension_numbers<[1], [0], [0], [1], [0, 0, 1, 1], [], []>} : vector<64x8xf32>, vector<8x64xf32>, vector<64x64xf32> -> vector<64x64xf32>
    %512 = tpu.reciprocal %511 {approx = true} : vector<64x64xf32> -> vector<64x64xf32>
    %513 = arith.mulf %509, %512 : vector<64x64xf32>
    %c0_113 = arith.constant 0 : index
    %c0_114 = arith.constant 0 : index
    %514 = vector.load %arg14[%c0_113, %c0_114] : memref<64x64xf32, #tpu.memory_space<vmem>>, vector<64x64xf32>
    %cst_115 = arith.constant dense<0.000000e+00> : vector<64x64xf32>
    %515 = tpu.matmul %513, %514, %cst_115 {dimension_numbers = #tpu.dot_dimension_numbers<[1], [0], [0], [1], [0, 0, 1, 1], [], []>} : vector<64x64xf32>, vector<64x64xf32>, vector<64x64xf32> -> vector<64x64xf32>
    %c0_116 = arith.constant 0 : index
    %c0_117 = arith.constant 0 : index
    %516 = vector.load %arg15[%c0_116, %c0_117] : memref<1x64xf32, #tpu.memory_space<vmem>>, vector<1x64xf32>
    %517 = vector.broadcast %516 : vector<1x64xf32> to vector<64x64xf32>
    %518 = arith.addf %515, %517 : vector<64x64xf32>
    %519 = arith.addf %477, %518 : vector<64x64xf32>
    %c0_118 = arith.constant 0 : index
    %c0_119 = arith.constant 0 : index
    %520 = vector.load %arg16[%c0_118, %c0_119] : memref<64x64xf32, #tpu.memory_space<vmem>>, vector<64x64xf32>
    %cst_120 = arith.constant dense<0.000000e+00> : vector<64x64xf32>
    %521 = tpu.matmul %519, %520, %cst_120 {dimension_numbers = #tpu.dot_dimension_numbers<[1], [0], [0], [1], [0, 0, 1, 1], [], []>} : vector<64x64xf32>, vector<64x64xf32>, vector<64x64xf32> -> vector<64x64xf32>
    %c0_121 = arith.constant 0 : index
    %c0_122 = arith.constant 0 : index
    %522 = vector.load %arg17[%c0_121, %c0_122] : memref<1x64xf32, #tpu.memory_space<vmem>>, vector<1x64xf32>
    %523 = vector.broadcast %522 : vector<1x64xf32> to vector<64x64xf32>
    %524 = arith.addf %521, %523 : vector<64x64xf32>
    %cst_123 = arith.constant 0.000000e+00 : f32
    %525 = vector.broadcast %cst_123 : f32 to vector<64x64xf32>
    %526 = arith.maximumf %524, %525 : vector<64x64xf32>
    %c0_124 = arith.constant 0 : index
    %c0_125 = arith.constant 0 : index
    %527 = vector.load %arg18[%c0_124, %c0_125] : memref<64x128xf32, #tpu.memory_space<vmem>>, vector<64x128xf32>
    %cst_126 = arith.constant dense<0.000000e+00> : vector<64x128xf32>
    %528 = tpu.matmul %526, %527, %cst_126 {dimension_numbers = #tpu.dot_dimension_numbers<[1], [0], [0], [1], [0, 0, 1, 1], [], []>} : vector<64x64xf32>, vector<64x128xf32>, vector<64x128xf32> -> vector<64x128xf32>
    %c0_127 = arith.constant 0 : index
    %c0_128 = arith.constant 0 : index
    %529 = vector.load %arg19[%c0_127, %c0_128] : memref<1x128xf32, #tpu.memory_space<vmem>>, vector<1x128xf32>
    %530 = vector.broadcast %529 : vector<1x128xf32> to vector<64x128xf32>
    %531 = arith.addf %528, %530 : vector<64x128xf32>
    %c0_129 = arith.constant 0 : index
    %c0_130 = arith.constant 0 : index
    %532 = vector.load %arg20[%c0_129, %c0_130] : memref<64x128xf32, #tpu.memory_space<vmem>>, vector<64x128xf32>
    tpu.vector_store %arg20[%c0_129, %c0_130], %531 {strides = array<i32>} : memref<64x128xf32, #tpu.memory_space<vmem>>, vector<64x128xf32>,
    return
  }
}

</mosaic_0001>

<llo_original>
// kernel: temporal_graph_network.1
$region0: #{temporal_graph_network.1}
  #allocation0 [shape = 'u32[]', space=smem, size = 0x4, offset = 0x4, fixed_abs, tag = 'smem constant byte address 0x4 - core index']
  #allocation1 [shape = 'u32[144,128]{1,0:T(1,128)}', space=vmem, size = 0x12000, scoped, tag = 'internal scratch']
  #allocation2 [shape = 'f32[64,64]{1,0:T(8,128)}', space=vmem, size = 0x8000, scoped, tag = 'scratch operand']
  %s0 = inlined_call_operand.vmem [shape: f32[64,32], index: 0, kind: input, shape index: {}]
  %s1 = inlined_call_operand.vmem [shape: f32[1,512], index: 1, kind: input, shape index: {}]
  %s2 = inlined_call_operand.hbm [shape: f32[64,512], index: 2, kind: input, shape index: {}]
  %s3 = inlined_call_operand.vmem [shape: f32[64,512], index: 3, kind: input, shape index: {}]
  %s4 = inlined_call_operand.vmem [shape: f32[512,64], index: 4, kind: input, shape index: {}]
  %s5 = inlined_call_operand.vmem [shape: f32[512,8], index: 5, kind: input, shape index: {}]
  %s6 = inlined_call_operand.vmem [shape: f32[8,64], index: 6, kind: input, shape index: {}]
  %s7 = inlined_call_operand.vmem [shape: f32[32,256], index: 7, kind: input, shape index: {}]
  %s8 = inlined_call_operand.vmem [shape: f32[64,256], index: 8, kind: input, shape index: {}]
  %s9 = inlined_call_operand.vmem [shape: f32[1,256], index: 9, kind: input, shape index: {}]
  %s10 = inlined_call_operand.vmem [shape: f32[128,256], index: 10, kind: input, shape index: {}]
  %s11 = inlined_call_operand.vmem [shape: f32[1,256], index: 11, kind: input, shape index: {}]
  %s12 = inlined_call_operand.hbm [shape: f32[64,192], index: 12, kind: input, shape index: {}]
  %s13 = inlined_call_operand.hbm [shape: f32[1,192], index: 13, kind: input, shape index: {}]
  %s14 = inlined_call_operand.vmem [shape: f32[64,64], index: 14, kind: input, shape index: {}]
  %s15 = inlined_call_operand.vmem [shape: f32[1,64], index: 15, kind: input, shape index: {}]
  %s16 = inlined_call_operand.vmem [shape: f32[64,64], index: 16, kind: input, shape index: {}]
  %s17 = inlined_call_operand.hbm [shape: f32[1,64], index: 17, kind: input, shape index: {}]
  %s18 = inlined_call_operand.vmem [shape: f32[64,128], index: 18, kind: input, shape index: {}]
  %s19 = inlined_call_operand.vmem [shape: f32[1,128], index: 19, kind: input, shape index: {}]
  %s20 = inlined_call_operand.vmem [shape: f32[64,128], index: 20, kind: output, shape index: {}]
  %s21 = sld [smem:[#allocation0]]
  $region106: #{temporal_graph_network.1} parent=0
    _
  %s23 = ssub.s32 1, %s21
  %s24 = scalar_select 0, %s23, %s21
  $region1: #{temporal_graph_network.1} parent=0
    #allocation3 [shape = 'u8[131072]{0}', space=vmem, size = 0x20000, scoped, tag = 'input window, operand 2, single buffered']
    #allocation4 [shape = 's32[1]{0}', space=sflag, size = 0x4, scoped, tag = 'scoped memory for temporal_graph_network.1']
    #allocation5 [shape = 'u8[65536]{0}', space=vmem, size = 0x10000, scoped, tag = 'input window, operand 12, single buffered']
    #allocation6 [shape = 's32[1]{0}', space=sflag, size = 0x4, scoped, tag = 'scoped memory for temporal_graph_network.1']
    #allocation7 [shape = 'u8[1024]{0}', space=vmem, size = 0x400, scoped, tag = 'input window, operand 13, single buffered']
    #allocation8 [shape = 'u8[512]{0}', space=vmem, size = 0x400, scoped, tag = 'input window, operand 17, single buffered']
    #allocation9 [shape = 's32[1]{0}', space=sflag, size = 0x4, scoped, tag = 'scoped memory for temporal_graph_network.1']
    %25 = vsyncpa [#allocation4], 0
    %26 = vsyncpa [#allocation6], 0
    %27 = vsyncpa [#allocation9], 0
    // Predicated region
    $region2: #{temporal_graph_network.1} parent=1 // pred_check
      _
    $region3: #{temporal_graph_network.1} parent=1 // pred_check_branch
      %29 = sbr.rel (0) target = $region5
    $region4: #{temporal_graph_network.1} parent=1 // pred_region
      _
    $region5: #{temporal_graph_network.1} parent=1 // pred_fallthru
      _
    // Predicated region
    $region6: #{temporal_graph_network.1} parent=1 // pred_check
      _
    $region7: #{temporal_graph_network.1} parent=1 // pred_check_branch
      %31 = sbr.rel (0) target = $region9
    $region8: #{temporal_graph_network.1} parent=1 // pred_region
      _
    $region9: #{temporal_graph_network.1} parent=1 // pred_fallthru
      _
    // Predicated region
    $region10: #{temporal_graph_network.1} parent=1 // pred_check
      _
    $region11: #{temporal_graph_network.1} parent=1 // pred_check_branch
      %33 = sbr.rel (0) target = $region13
    $region12: #{temporal_graph_network.1} parent=1 // pred_region
      %s35 = ssub.s32 4096, 4096
      %36 = vsyncadd [#allocation4], %s35
      %s37 = sshll.u32 [#allocation3], 4
      %s38 = int_to_ptr.vmem [resolvable:$true] %s37
      %43 = dma.hbm_to_vmem [thread:$0]  %s2, 4096, %s38, [#allocation4], 512, 512, 32
    $region13: #{temporal_graph_network.1} parent=1 // pred_fallthru
      _
    // Predicated region
    $region14: #{temporal_graph_network.1} parent=1 // pred_check
      _
    $region15: #{temporal_graph_network.1} parent=1 // pred_check_branch
      %45 = sbr.rel (0) target = $region17
    $region16: #{temporal_graph_network.1} parent=1 // pred_region
      _
    $region17: #{temporal_graph_network.1} parent=1 // pred_fallthru
      _
    // Predicated region
    $region18: #{temporal_graph_network.1} parent=1 // pred_check
      _
    $region19: #{temporal_graph_network.1} parent=1 // pred_check_branch
      %47 = sbr.rel (0) target = $region21
    $region20: #{temporal_graph_network.1} parent=1 // pred_region
      _
    $region21: #{temporal_graph_network.1} parent=1 // pred_fallthru
      _
    // Predicated region
    $region22: #{temporal_graph_network.1} parent=1 // pred_check
      _
    $region23: #{temporal_graph_network.1} parent=1 // pred_check_branch
      %49 = sbr.rel (0) target = $region25
    $region24: #{temporal_graph_network.1} parent=1 // pred_region
      _
    $region25: #{temporal_graph_network.1} parent=1 // pred_fallthru
      _
    // Predicated region
    $region26: #{temporal_graph_network.1} parent=1 // pred_check
      _
    $region27: #{temporal_graph_network.1} parent=1 // pred_check_branch
      %51 = sbr.rel (0) target = $region29
    $region28: #{temporal_graph_network.1} parent=1 // pred_region
      _
    $region29: #{temporal_graph_network.1} parent=1 // pred_fallthru
      _
    // Predicated region
    $region30: #{temporal_graph_network.1} parent=1 // pred_check
      _
    $region31: #{temporal_graph_network.1} parent=1 // pred_check_branch
      %53 = sbr.rel (0) target = $region33
    $region32: #{temporal_graph_network.1} parent=1 // pred_region
      _
    $region33: #{temporal_graph_network.1} parent=1 // pred_fallthru
      _
    // Predicated region
    $region34: #{temporal_graph_network.1} parent=1 // pred_check
      _
    $region35: #{temporal_graph_network.1} parent=1 // pred_check_branch
      %55 = sbr.rel (0) target = $region37
    $region36: #{temporal_graph_network.1} parent=1 // pred_region
      _
    $region37: #{temporal_graph_network.1} parent=1 // pred_fallthru
      _
    // Predicated region
    $region38: #{temporal_graph_network.1} parent=1 // pred_check
      _
    $region39: #{temporal_graph_network.1} parent=1 // pred_check_branch
      %57 = sbr.rel (0) target = $region41
    $region40: #{temporal_graph_network.1} parent=1 // pred_region
      _
    $region41: #{temporal_graph_network.1} parent=1 // pred_fallthru
      _
    // Predicated region
    $region42: #{temporal_graph_network.1} parent=1 // pred_check
      _
    $region43: #{temporal_graph_network.1} parent=1 // pred_check_branch
      %59 = sbr.rel (0) target = $region45
    $region44: #{temporal_graph_network.1} parent=1 // pred_region
      _
    $region45: #{temporal_graph_network.1} parent=1 // pred_fallthru
      _
    // Predicated region
    $region46: #{temporal_graph_network.1} parent=1 // pred_check
      _
    $region47: #{temporal_graph_network.1} parent=1 // pred_check_branch
      %61 = sbr.rel (0) target = $region49
    $region48: #{temporal_graph_network.1} parent=1 // pred_region
      _
    $region49: #{temporal_graph_network.1} parent=1 // pred_fallthru
      _
    // Predicated region
    $region50: #{temporal_graph_network.1} parent=1 // pred_check
      _
    $region51: #{temporal_graph_network.1} parent=1 // pred_check_branch
      %63 = sbr.rel (0) target = $region53
    $region52: #{temporal_graph_network.1} parent=1 // pred_region
      %s65 = ssub.s32 2048, 2048
      %66 = vsyncadd [#allocation6], %s65
      %s67 = sshll.u32 [#allocation5], 4
      %s68 = int_to_ptr.vmem [resolvable:$true] %s67
      %73 = dma.hbm_to_vmem [thread:$0]  %s12, 2048, %s68, [#allocation6], 256, 256, 16
    $region53: #{temporal_graph_network.1} parent=1 // pred_fallthru
      _
    // Predicated region
    $region54: #{temporal_graph_network.1} parent=1 // pred_check
      _
    $region55: #{temporal_graph_network.1} parent=1 // pred_check_branch
      %75 = sbr.rel (0) target = $region57
    $region56: #{temporal_graph_network.1} parent=1 // pred_region
      %s77 = ssub.s32 32, 32
      %78 = vsyncadd [#allocation6], %s77
      %s80 = sshll.u32 [#allocation7], 4
      %s81 = int_to_ptr.vmem [resolvable:$true] %s80
      %83 = dma.hbm_to_vmem [thread:$0]  %s13, 32, %s81, [#allocation6]
    $region57: #{temporal_graph_network.1} parent=1 // pred_fallthru
      _
    // Predicated region
    $region58: #{temporal_graph_network.1} parent=1 // pred_check
      _
    $region59: #{temporal_graph_network.1} parent=1 // pred_check_branch
      %85 = sbr.rel (0) target = $region61
    $region60: #{temporal_graph_network.1} parent=1 // pred_region
      _
    $region61: #{temporal_graph_network.1} parent=1 // pred_fallthru
      _
    // Predicated region
    $region62: #{temporal_graph_network.1} parent=1 // pred_check
      _
    $region63: #{temporal_graph_network.1} parent=1 // pred_check_branch
      %87 = sbr.rel (0) target = $region65
    $region64: #{temporal_graph_network.1} parent=1 // pred_region
      _
    $region65: #{temporal_graph_network.1} parent=1 // pred_fallthru
      _
    // Predicated region
    $region66: #{temporal_graph_network.1} parent=1 // pred_check
      _
    $region67: #{temporal_graph_network.1} parent=1 // pred_check_branch
      %89 = sbr.rel (0) target = $region69
    $region68: #{temporal_graph_network.1} parent=1 // pred_region
      _
    $region69: #{temporal_graph_network.1} parent=1 // pred_fallthru
      _
    // Predicated region
    $region70: #{temporal_graph_network.1} parent=1 // pred_check
      _
    $region71: #{temporal_graph_network.1} parent=1 // pred_check_branch
      %91 = sbr.rel (0) target = $region73
    $region72: #{temporal_graph_network.1} parent=1 // pred_region
      %s93 = ssub.s32 16, 16
      %94 = vsyncadd [#allocation9], %s93
      %s96 = sshll.u32 [#allocation8], 4
      %s97 = int_to_ptr.vmem [resolvable:$true] %s96
      %99 = dma.hbm_to_vmem [thread:$0]  %s17, 16, %s97, [#allocation9]
    $region73: #{temporal_graph_network.1} parent=1 // pred_fallthru
      _
    // Predicated region
    $region74: #{temporal_graph_network.1} parent=1 // pred_check
      _
    $region75: #{temporal_graph_network.1} parent=1 // pred_check_branch
      %101 = sbr.rel (0) target = $region77
    $region76: #{temporal_graph_network.1} parent=1 // pred_region
      _
    $region77: #{temporal_graph_network.1} parent=1 // pred_fallthru
      _
    // Predicated region
    $region78: #{temporal_graph_network.1} parent=1 // pred_check
      _
    $region79: #{temporal_graph_network.1} parent=1 // pred_check_branch
      %103 = sbr.rel (0) target = $region81
    $region80: #{temporal_graph_network.1} parent=1 // pred_region
      _
    $region81: #{temporal_graph_network.1} parent=1 // pred_fallthru
      _
    // Predicated region
    $region82: #{temporal_graph_network.1} parent=1 // pred_check
      _
    $region83: #{temporal_graph_network.1} parent=1 // pred_check_branch
      %105 = sbr.rel (0) target = $region85
    $region84: #{temporal_graph_network.1} parent=1 // pred_region
      %106 = dma.done [#allocation4], 4096
    $region85: #{temporal_graph_network.1} parent=1 // pred_fallthru
      _
    // Predicated region
    $region86: #{temporal_graph_network.1} parent=1 // pred_check
      _
    $region87: #{temporal_graph_network.1} parent=1 // pred_check_branch
      %108 = sbr.rel (0) target = $region89
    $region88: #{temporal_graph_network.1} parent=1 // pred_region
      %109 = dma.done [#allocation6], 2048
    $region89: #{temporal_graph_network.1} parent=1 // pred_fallthru
      _
    // Predicated region
    $region90: #{temporal_graph_network.1} parent=1 // pred_check
      _
    $region91: #{temporal_graph_network.1} parent=1 // pred_check_branch
      %111 = sbr.rel (0) target = $region93
    $region92: #{temporal_graph_network.1} parent=1 // pred_region
      %112 = dma.done [#allocation6], 32
    $region93: #{temporal_graph_network.1} parent=1 // pred_fallthru
      _
    // Predicated region
    $region94: #{temporal_graph_network.1} parent=1 // pred_check
      _
    $region95: #{temporal_graph_network.1} parent=1 // pred_check_branch
      %114 = sbr.rel (0) target = $region97
    $region96: #{temporal_graph_network.1} parent=1 // pred_region
      %115 = dma.done [#allocation9], 16
    $region97: #{temporal_graph_network.1} parent=1 // pred_fallthru
      _
    %v116 = vld [vmem:[%s0] sm:$0xff]
    %v117 = vld [vmem:[%s0 + $0x8] sm:$0xff]
    %v118 = vld [vmem:[%s0 + $0x10] sm:$0xff]
    %v119 = vld [vmem:[%s0 + $0x18] sm:$0xff]
    %v120 = vld [vmem:[%s0 + $0x20] sm:$0xff]
    %v121 = vld [vmem:[%s0 + $0x28] sm:$0xff]
    %v122 = vld [vmem:[%s0 + $0x30] sm:$0xff]
    %v123 = vld [vmem:[%s0 + $0x38] sm:$0xff]
    %v124 = vld [vmem:[%s7] sm:$0xff]
    %v125 = vld [vmem:[%s7 + $0x8] sm:$0xff]
    %v126 = vld [vmem:[%s7 + $0x10] sm:$0xff]
    %v127 = vld [vmem:[%s7 + $0x18] sm:$0xff]
    %v128 = vld [vmem:[%s7 + $0x20] sm:$0xff]
    %v129 = vld [vmem:[%s7 + $0x28] sm:$0xff]
    %v130 = vld [vmem:[%s7 + $0x30] sm:$0xff]
    %v131 = vld [vmem:[%s7 + $0x38] sm:$0xff]
    %v132 = vld [vmem:[%s9] sm:$0x3]
    %v134 = vlaneseq
    %v135 = vshrl.u32 %v134, 7
    %v136 = vsub.s32 0, %v135
    %v137 = vrot.slane %v132, %v136
    %v138 = vlaneseq
    %v139 = vshrl.u32 %v138, 7
    %v140 = vsub.s32 1, %v139
    %v141 = vrot.slane %v132, %v140
    %vm144 = vcmask 261120
    %v146 = vsel %vm144, %v116, 0
    %v149 = vsel %vm144, %v117, 0
    %v152 = vsel %vm144, %v118, 0
    %v155 = vsel %vm144, %v119, 0
    %v158 = vsel %vm144, %v120, 0
    %v161 = vsel %vm144, %v121, 0
    %v164 = vsel %vm144, %v122, 0
    %v167 = vsel %vm144, %v123, 0
    %169 = vmatprep.subr.mxu0 %v125
    %170 = vmatpush1.msra.mxu0 %v124
    %171 = vmatprep.subr.mxu0 %v127
    %172 = vmatpush1.msra.mxu0 %v126
    %173 = vmatprep.subr.mxu0 %v129
    %174 = vmatpush1.msra.mxu0 %v128
    %175 = vmatprep.subr.mxu0 %v131
    %176 = vmatpush1.msra.mxu0 %v130
    %177 = vmatprep.subr.mxu0 0.0
    %178 = vmatpush1.msra.mxu0 0.0
    %179 = vmatprep.subr.mxu0 0.0
    %180 = vmatpush1.msra.mxu0 0.0
    %181 = vmatprep.subr.mxu0 0.0
    %182 = vmatpush1.msra.mxu0 0.0
    %183 = vmatprep.subr.mxu0 0.0
    %184 = vmatpush1.msra.mxu0 0.0
    %185 = vmatprep.subr.mxu0 0.0
    %186 = vmatpush1.msra.mxu0 0.0
    %187 = vmatprep.subr.mxu0 0.0
    %188 = vmatpush1.msra.mxu0 0.0
    %189 = vmatprep.subr.mxu0 0.0
    %190 = vmatpush1.msra.mxu0 0.0
    %191 = vmatprep.subr.mxu0 0.0
    %192 = vmatpush1.msra.mxu0 0.0
    %193 = vmatprep.subr.mxu0 0.0
    %194 = vmatpush1.msra.mxu0 0.0
    %195 = vmatprep.subr.mxu0 0.0
    %196 = vmatpush1.msra.mxu0 0.0
    %197 = vmatprep.subr.mxu0 0.0
    %198 = vmatpush1.msra.mxu0 0.0
    %199 = vmatprep.subr.mxu0 0.0
    %200 = vmatpush1.msra.mxu0 0.0
    %201 = vmatprep.subr.mxu0 0.0
    %202 = vmatpush1.msra.mxu0 0.0
    %203 = vmatprep.subr.mxu0 0.0
    %204 = vmatpush1.msra.mxu0 0.0
    %205 = vmatprep.subr.mxu0 0.0
    %206 = vmatpush1.msra.mxu0 0.0
    %207 = vmatprep.subr.mxu0 0.0
    %208 = vmatpush1.msra.mxu0 0.0
    %209 = vmatprep.subr.mxu0 0.0
    %210 = vmatpush1.msra.mxu0 0.0
    %211 = vmatprep.subr.mxu0 0.0
    %212 = vmatpush1.msra.mxu0 0.0
    %213 = vmatprep.subr.mxu0 0.0
    %214 = vmatpush1.msra.mxu0 0.0
    %215 = vmatprep.subr.mxu0 0.0
    %216 = vmatpush1.msra.mxu0 0.0
    %217 = vmatprep.subr.mxu0 0.0
    %218 = vmatpush1.msra.mxu0 0.0
    %219 = vmatprep.subr.mxu0 0.0
    %220 = vmatpush1.msra.mxu0 0.0
    %221 = vmatprep.subr.mxu0 0.0
    %222 = vmatpush1.msra.mxu0 0.0
    %223 = vmatprep.subr.mxu0 0.0
    %224 = vmatpush1.msra.mxu0 0.0
    %225 = vmatprep.subr.mxu0 0.0
    %226 = vmatpush1.msra.mxu0 0.0
    %227 = vmatprep.subr.mxu0 0.0
    %228 = vmatpush1.msra.mxu0 0.0
    %229 = vmatprep.subr.mxu0 0.0
    %230 = vmatpush1.msra.mxu0 0.0
    %231 = vmatprep.subr.mxu0 0.0
    %232 = vmatpush1.msra.mxu0 0.0
    %233 = vmatprep.mubr.f32.mxu0 0.0
    %234 = vmatmul.mubr.f32.gmra.mrb[0].mxu0 %v146
    %v235 = vpop.f32.mrb[0].mxu0
    %v236 = vadd.f32 %v137, %v235
    %v237 = vpop.f32.mrb[0].mxu0
    %v238 = vadd.f32 %v141, %v237
    %239 = vmatprep.mubr.f32.mxu0 0.0
    %240 = vmatmul.mubr.f32.gmra.mrb[0].mxu0 %v149
    %v241 = vpop.f32.mrb[0].mxu0
    %v242 = vadd.f32 %v137, %v241
    %v243 = vpop.f32.mrb[0].mxu0
    %v244 = vadd.f32 %v141, %v243
    %245 = vmatprep.mubr.f32.mxu0 0.0
    %246 = vmatmul.mubr.f32.gmra.mrb[0].mxu0 %v152
    %v247 = vpop.f32.mrb[0].mxu0
    %v248 = vadd.f32 %v137, %v247
    %v249 = vpop.f32.mrb[0].mxu0
    %v250 = vadd.f32 %v141, %v249
    %251 = vmatprep.mubr.f32.mxu0 0.0
    %252 = vmatmul.mubr.f32.gmra.mrb[0].mxu0 %v155
    %v253 = vpop.f32.mrb[0].mxu0
    %v254 = vadd.f32 %v137, %v253
    %v255 = vpop.f32.mrb[0].mxu0
    %v256 = vadd.f32 %v141, %v255
    %257 = vmatprep.mubr.f32.mxu0 0.0
    %258 = vmatmul.mubr.f32.gmra.mrb[0].mxu0 %v158
    %v259 = vpop.f32.mrb[0].mxu0
    %v260 = vadd.f32 %v137, %v259
    %v261 = vpop.f32.mrb[0].mxu0
    %v262 = vadd.f32 %v141, %v261
    %263 = vmatprep.mubr.f32.mxu0 0.0
    %264 = vmatmul.mubr.f32.gmra.mrb[0].mxu0 %v161
    %v265 = vpop.f32.mrb[0].mxu0
    %v266 = vadd.f32 %v137, %v265
    %v267 = vpop.f32.mrb[0].mxu0
    %v268 = vadd.f32 %v141, %v267
    %269 = vmatprep.mubr.f32.mxu0 0.0
    %270 = vmatmul.mubr.f32.gmra.mrb[0].mxu0 %v164
    %v271 = vpop.f32.mrb[0].mxu0
    %v272 = vadd.f32 %v137, %v271
    %v273 = vpop.f32.mrb[0].mxu0
    %v274 = vadd.f32 %v141, %v273
    %275 = vmatprep.mubr.f32.mxu0 0.0
    %276 = vmatmul.mubr.f32.gmra.mrb[0].mxu0 %v167
    %v277 = vpop.f32.mrb[0].mxu0
    %v278 = vadd.f32 %v137, %v277
    %v279 = vpop.f32.mrb[0].mxu0
    %v280 = vadd.f32 %v141, %v279
    %281 = vdwg.mxu0
    %v282 = vld [vmem:[%s8] sm:$0xff]
    %v283 = vld [vmem:[%s8 + $0x8] sm:$0xff]
    %v284 = vld [vmem:[%s8 + $0x10] sm:$0xff]
    %v285 = vld [vmem:[%s8 + $0x18] sm:$0xff]
    %v286 = vld [vmem:[%s8 + $0x20] sm:$0xff]
    %v287 = vld [vmem:[%s8 + $0x28] sm:$0xff]
    %v288 = vld [vmem:[%s8 + $0x30] sm:$0xff]
    %v289 = vld [vmem:[%s8 + $0x38] sm:$0xff]
    %v290 = vld [vmem:[%s8 + $0x40] sm:$0xff]
    %v291 = vld [vmem:[%s8 + $0x48] sm:$0xff]
    %v292 = vld [vmem:[%s8 + $0x50] sm:$0xff]
    %v293 = vld [vmem:[%s8 + $0x58] sm:$0xff]
    %v294 = vld [vmem:[%s8 + $0x60] sm:$0xff]
    %v295 = vld [vmem:[%s8 + $0x68] sm:$0xff]
    %v296 = vld [vmem:[%s8 + $0x70] sm:$0xff]
    %v297 = vld [vmem:[%s8 + $0x78] sm:$0xff]
    %v298 = vld [vmem:[%s10] sm:$0xff]
    %v299 = vld [vmem:[%s10 + $0x8] sm:$0xff]
    %v300 = vld [vmem:[%s10 + $0x10] sm:$0xff]
    %v301 = vld [vmem:[%s10 + $0x18] sm:$0xff]
    %v302 = vld [vmem:[%s10 + $0x20] sm:$0xff]
    %v303 = vld [vmem:[%s10 + $0x28] sm:$0xff]
    %v304 = vld [vmem:[%s10 + $0x30] sm:$0xff]
    %v305 = vld [vmem:[%s10 + $0x38] sm:$0xff]
    %v306 = vld [vmem:[%s10 + $0x40] sm:$0xff]
    %v307 = vld [vmem:[%s10 + $0x48] sm:$0xff]
    %v308 = vld [vmem:[%s10 + $0x50] sm:$0xff]
    %v309 = vld [vmem:[%s10 + $0x58] sm:$0xff]
    %v310 = vld [vmem:[%s10 + $0x60] sm:$0xff]
    %v311 = vld [vmem:[%s10 + $0x68] sm:$0xff]
    %v312 = vld [vmem:[%s10 + $0x70] sm:$0xff]
    %v313 = vld [vmem:[%s10 + $0x78] sm:$0xff]
    %v314 = vld [vmem:[%s10 + $0x80] sm:$0xff]
    %v315 = vld [vmem:[%s10 + $0x88] sm:$0xff]
    %v316 = vld [vmem:[%s10 + $0x90] sm:$0xff]
    %v317 = vld [vmem:[%s10 + $0x98] sm:$0xff]
    %v318 = vld [vmem:[%s10 + $0xa0] sm:$0xff]
    %v319 = vld [vmem:[%s10 + $0xa8] sm:$0xff]
    %v320 = vld [vmem:[%s10 + $0xb0] sm:$0xff]
    %v321 = vld [vmem:[%s10 + $0xb8] sm:$0xff]
    %v322 = vld [vmem:[%s10 + $0xc0] sm:$0xff]
    %v323 = vld [vmem:[%s10 + $0xc8] sm:$0xff]
    %v324 = vld [vmem:[%s10 + $0xd0] sm:$0xff]
    %v325 = vld [vmem:[%s10 + $0xd8] sm:$0xff]
    %v326 = vld [vmem:[%s10 + $0xe0] sm:$0xff]
    %v327 = vld [vmem:[%s10 + $0xe8] sm:$0xff]
    %v328 = vld [vmem:[%s10 + $0xf0] sm:$0xff]
    %v329 = vld [vmem:[%s10 + $0xf8] sm:$0xff]
    %v330 = vld [vmem:[%s11] sm:$0x3]
    %vm331 = vcmask 523264
    %v333 = vsel %vm331, 0.0, 0
    %335 = vmatprep.subr.mxu0 %v283
    %336 = vmatpush1.msra.mxu0 %v282
    %337 = vmatprep.subr.mxu0 %v285
    %338 = vmatpush1.msra.mxu0 %v284
    %339 = vmatprep.subr.mxu0 %v287
    %340 = vmatpush1.msra.mxu0 %v286
    %341 = vmatprep.subr.mxu0 %v289
    %342 = vmatpush1.msra.mxu0 %v288
    %343 = vmatprep.subr.mxu0 %v291
    %344 = vmatpush1.msra.mxu0 %v290
    %345 = vmatprep.subr.mxu0 %v293
    %346 = vmatpush1.msra.mxu0 %v292
    %347 = vmatprep.subr.mxu0 %v295
    %348 = vmatpush1.msra.mxu0 %v294
    %349 = vmatprep.subr.mxu0 %v297
    %350 = vmatpush1.msra.mxu0 %v296
    %351 = vmatprep.subr.mxu0 0.0
    %352 = vmatpush1.msra.mxu0 0.0
    %353 = vmatprep.subr.mxu0 0.0
    %354 = vmatpush1.msra.mxu0 0.0
    %355 = vmatprep.subr.mxu0 0.0
    %356 = vmatpush1.msra.mxu0 0.0
    %357 = vmatprep.subr.mxu0 0.0
    %358 = vmatpush1.msra.mxu0 0.0
    %359 = vmatprep.subr.mxu0 0.0
    %360 = vmatpush1.msra.mxu0 0.0
    %361 = vmatprep.subr.mxu0 0.0
    %362 = vmatpush1.msra.mxu0 0.0
    %363 = vmatprep.subr.mxu0 0.0
    %364 = vmatpush1.msra.mxu0 0.0
    %365 = vmatprep.subr.mxu0 0.0
    %366 = vmatpush1.msra.mxu0 0.0
    %367 = vmatprep.subr.mxu0 0.0
    %368 = vmatpush1.msra.mxu0 0.0
    %369 = vmatprep.subr.mxu0 0.0
    %370 = vmatpush1.msra.mxu0 0.0
    %371 = vmatprep.subr.mxu0 0.0
    %372 = vmatpush1.msra.mxu0 0.0
    %373 = vmatprep.subr.mxu0 0.0
    %374 = vmatpush1.msra.mxu0 0.0
    %375 = vmatprep.subr.mxu0 0.0
    %376 = vmatpush1.msra.mxu0 0.0
    %377 = vmatprep.subr.mxu0 0.0
    %378 = vmatpush1.msra.mxu0 0.0
    %379 = vmatprep.subr.mxu0 0.0
    %380 = vmatpush1.msra.mxu0 0.0
    %381 = vmatprep.subr.mxu0 0.0
    %382 = vmatpush1.msra.mxu0 0.0
    %383 = vmatprep.subr.mxu0 0.0
    %384 = vmatpush1.msra.mxu0 0.0
    %385 = vmatprep.subr.mxu0 0.0
    %386 = vmatpush1.msra.mxu0 0.0
    %387 = vmatprep.subr.mxu0 0.0
    %388 = vmatpush1.msra.mxu0 0.0
    %389 = vmatprep.subr.mxu0 0.0
    %390 = vmatpush1.msra.mxu0 0.0
    %391 = vmatprep.subr.mxu0 0.0
    %392 = vmatpush1.msra.mxu0 0.0
    %393 = vmatprep.subr.mxu0 0.0
    %394 = vmatpush1.msra.mxu0 0.0
    %395 = vmatprep.subr.mxu0 0.0
    %396 = vmatpush1.msra.mxu0 0.0
    %397 = vmatprep.subr.mxu0 0.0
    %398 = vmatpush1.msra.mxu0 0.0
    %399 = vmatprep.mubr.f32.mxu0 0.0
    %400 = vmatmul.mubr.f32.gmra.mrb[0].mxu0 %v333
    %v401 = vpop.f32.mrb[0].mxu0
    %v402 = vadd.f32 0.0, %v401
    %v403 = vpop.f32.mrb[0].mxu0
    %v404 = vadd.f32 0.0, %v403
    %405 = vdwg.mxu0
    %v406 = vadd.f32 %v236, %v402
    %v407 = vadd.f32 %v238, %v404
    %v408 = vxor.u32 %v406, 2147483648
    %v409 = vmul.f32 %v408, 1.442695
    %v410 = vpow.pop %v409
    %v411 = vadd.f32 %v410, 1.0
    %v412 = vrcp.pop %v411
    %v413 = vmul.f32 1.0, %v412
    %v414 = vtanh.pop %v407
    %v415 = vxor.u32 %v407, 2147483648
    %v416 = vmul.f32 %v415, 1.442695
    %v417 = vpow.pop %v416
    %v418 = vadd.f32 %v417, 1.0
    %v419 = vrcp.pop %v418
    %v420 = vmul.f32 1.0, %v419
    %v421 = vmul.f32 %v413, 0.0
    %v422 = vmul.f32 %v413, %v414
    %424 = vrot.lane.b32.xlu0 %v422, 64
    %v425 = vpop.permute.xlu0 %424
    %v427 = vadd.f32 %v421, %v425
    %v428 = vtanh.pop %v427
    %v429 = vmul.f32 %v420, %v428
    %431 = vrot.lane.b32.xlu0 %v429, 64
    %v432 = vpop.permute.xlu0 %431
    %v433 = vsel %vm331, %v432, 0
    %435 = vmatprep.subr.mxu0 %v283
    %436 = vmatpush1.msra.mxu0 %v282
    %437 = vmatprep.subr.mxu0 %v285
    %438 = vmatpush1.msra.mxu0 %v284
    %439 = vmatprep.subr.mxu0 %v287
    %440 = vmatpush1.msra.mxu0 %v286
    %441 = vmatprep.subr.mxu0 %v289
    %442 = vmatpush1.msra.mxu0 %v288
    %443 = vmatprep.subr.mxu0 %v291
    %444 = vmatpush1.msra.mxu0 %v290
    %445 = vmatprep.subr.mxu0 %v293
    %446 = vmatpush1.msra.mxu0 %v292
    %447 = vmatprep.subr.mxu0 %v295
    %448 = vmatpush1.msra.mxu0 %v294
    %449 = vmatprep.subr.mxu0 %v297
    %450 = vmatpush1.msra.mxu0 %v296
    %451 = vmatprep.subr.mxu0 0.0
    %452 = vmatpush1.msra.mxu0 0.0
    %453 = vmatprep.subr.mxu0 0.0
    %454 = vmatpush1.msra.mxu0 0.0
    %455 = vmatprep.subr.mxu0 0.0
    %456 = vmatpush1.msra.mxu0 0.0
    %457 = vmatprep.subr.mxu0 0.0
    %458 = vmatpush1.msra.mxu0 0.0
    %459 = vmatprep.subr.mxu0 0.0
    %460 = vmatpush1.msra.mxu0 0.0
    %461 = vmatprep.subr.mxu0 0.0
    %462 = vmatpush1.msra.mxu0 0.0
    %463 = vmatprep.subr.mxu0 0.0
    %464 = vmatpush1.msra.mxu0 0.0
    %465 = vmatprep.subr.mxu0 0.0
    %466 = vmatpush1.msra.mxu0 0.0
    %467 = vmatprep.subr.mxu0 0.0
    %468 = vmatpush1.msra.mxu0 0.0
    %469 = vmatprep.subr.mxu0 0.0
    %470 = vmatpush1.msra.mxu0 0.0
    %471 = vmatprep.subr.mxu0 0.0
    %472 = vmatpush1.msra.mxu0 0.0
    %473 = vmatprep.subr.mxu0 0.0
    %474 = vmatpush1.msra.mxu0 0.0
    %475 = vmatprep.subr.mxu0 0.0
    %476 = vmatpush1.msra.mxu0 0.0
    %477 = vmatprep.subr.mxu0 0.0
    %478 = vmatpush1.msra.mxu0 0.0
    %479 = vmatprep.subr.mxu0 0.0
    %480 = vmatpush1.msra.mxu0 0.0
    %481 = vmatprep.subr.mxu0 0.0
    %482 = vmatpush1.msra.mxu0 0.0
    %483 = vmatprep.subr.mxu0 0.0
    %484 = vmatpush1.msra.mxu0 0.0
    %485 = vmatprep.subr.mxu0 0.0
    %486 = vmatpush1.msra.mxu0 0.0
    %487 = vmatprep.subr.mxu0 0.0
    %488 = vmatpush1.msra.mxu0 0.0
    %489 = vmatprep.subr.mxu0 0.0
    %490 = vmatpush1.msra.mxu0 0.0
    %491 = vmatprep.subr.mxu0 0.0
    %492 = vmatpush1.msra.mxu0 0.0
    %493 = vmatprep.subr.mxu0 0.0
    %494 = vmatpush1.msra.mxu0 0.0
    %495 = vmatprep.subr.mxu0 0.0
    %496 = vmatpush1.msra.mxu0 0.0
    %497 = vmatprep.subr.mxu0 0.0
    %498 = vmatpush1.msra.mxu0 0.0
    %499 = vmatprep.mubr.f32.mxu0 0.0
    %500 = vmatmul.mubr.f32.gmra.mrb[0].mxu0 %v433
    %v501 = vpop.f32.mrb[0].mxu0
    %v502 = vadd.f32 0.0, %v501
    %v503 = vpop.f32.mrb[0].mxu0
    %v504 = vadd.f32 0.0, %v503
    %505 = vdwg.mxu0
    %v506 = vadd.f32 %v242, %v502
    %v507 = vadd.f32 %v244, %v504
    %v508 = vxor.u32 %v506, 2147483648
    %v509 = vmul.f32 %v508, 1.442695
    %v510 = vpow.pop %v509
    %v511 = vadd.f32 %v510, 1.0
    %v512 = vrcp.pop %v511
    %v513 = vmul.f32 1.0, %v512
    %v514 = vtanh.pop %v507
    %v515 = vxor.u32 %v507, 2147483648
    %v516 = vmul.f32 %v515, 1.442695
    %v517 = vpow.pop %v516
    %v518 = vadd.f32 %v517, 1.0
    %v519 = vrcp.pop %v518
    %v520 = vmul.f32 1.0, %v519
    %v521 = vmul.f32 %v513, %v427
    %v522 = vmul.f32 %v513, %v514
    %524 = vrot.lane.b32.xlu0 %v522, 64
    %v525 = vpop.permute.xlu0 %524
    %v527 = vadd.f32 %v521, %v525
    %v528 = vtanh.pop %v527
    %v529 = vmul.f32 %v520, %v528
    %v531 = vsel %vm331, %v432, 0.0
    %v533 = vlaneseq
    %v534 = vshrl.u32 %v533, 7
    %v535 = vsub.s32 0, %v534
    %v536 = vrot.slane %v330, %v535
    %v537 = vlaneseq
    %v538 = vshrl.u32 %v537, 7
    %v539 = vsub.s32 1, %v538
    %v540 = vrot.slane %v330, %v539
    %543 = vmatprep.subr.mxu0 %v299
    %544 = vmatpush1.msra.mxu0 %v298
    %545 = vmatprep.subr.mxu0 %v301
    %546 = vmatpush1.msra.mxu0 %v300
    %547 = vmatprep.subr.mxu0 %v303
    %548 = vmatpush1.msra.mxu0 %v302
    %549 = vmatprep.subr.mxu0 %v305
    %550 = vmatpush1.msra.mxu0 %v304
    %551 = vmatprep.subr.mxu0 %v307
    %552 = vmatpush1.msra.mxu0 %v306
    %553 = vmatprep.subr.mxu0 %v309
    %554 = vmatpush1.msra.mxu0 %v308
    %555 = vmatprep.subr.mxu0 %v311
    %556 = vmatpush1.msra.mxu0 %v310
    %557 = vmatprep.subr.mxu0 %v313
    %558 = vmatpush1.msra.mxu0 %v312
    %559 = vmatprep.subr.mxu0 %v315
    %560 = vmatpush1.msra.mxu0 %v314
    %561 = vmatprep.subr.mxu0 %v317
    %562 = vmatpush1.msra.mxu0 %v316
    %563 = vmatprep.subr.mxu0 %v319
    %564 = vmatpush1.msra.mxu0 %v318
    %565 = vmatprep.subr.mxu0 %v321
    %566 = vmatpush1.msra.mxu0 %v320
    %567 = vmatprep.subr.mxu0 %v323
    %568 = vmatpush1.msra.mxu0 %v322
    %569 = vmatprep.subr.mxu0 %v325
    %570 = vmatpush1.msra.mxu0 %v324
    %571 = vmatprep.subr.mxu0 %v327
    %572 = vmatpush1.msra.mxu0 %v326
    %573 = vmatprep.subr.mxu0 %v329
    %574 = vmatpush1.msra.mxu0 %v328
    %575 = vmatprep.subr.mxu0 0.0
    %576 = vmatpush1.msra.mxu0 0.0
    %577 = vmatprep.subr.mxu0 0.0
    %578 = vmatpush1.msra.mxu0 0.0
    %579 = vmatprep.subr.mxu0 0.0
    %580 = vmatpush1.msra.mxu0 0.0
    %581 = vmatprep.subr.mxu0 0.0
    %582 = vmatpush1.msra.mxu0 0.0
    %583 = vmatprep.subr.mxu0 0.0
    %584 = vmatpush1.msra.mxu0 0.0
    %585 = vmatprep.subr.mxu0 0.0
    %586 = vmatpush1.msra.mxu0 0.0
    %587 = vmatprep.subr.mxu0 0.0
    %588 = vmatpush1.msra.mxu0 0.0
    %589 = vmatprep.subr.mxu0 0.0
    %590 = vmatpush1.msra.mxu0 0.0
    %591 = vmatprep.subr.mxu0 0.0
    %592 = vmatpush1.msra.mxu0 0.0
    %593 = vmatprep.subr.mxu0 0.0
    %594 = vmatpush1.msra.mxu0 0.0
    %595 = vmatprep.subr.mxu0 0.0
    %596 = vmatpush1.msra.mxu0 0.0
    %597 = vmatprep.subr.mxu0 0.0
    %598 = vmatpush1.msra.mxu0 0.0
    %599 = vmatprep.subr.mxu0 0.0
    %600 = vmatpush1.msra.mxu0 0.0
    %601 = vmatprep.subr.mxu0 0.0
    %602 = vmatpush1.msra.mxu0 0.0
    %603 = vmatprep.subr.mxu0 0.0
    %604 = vmatpush1.msra.mxu0 0.0
    %605 = vmatprep.subr.mxu0 0.0
    %606 = vmatpush1.msra.mxu0 0.0
    %607 = vmatprep.mubr.f32.mxu0 0.0
    %608 = vmatmul.mubr.f32.gmra.mrb[0].mxu0 %v531
    %v609 = vpop.f32.mrb[0].mxu0
    %v610 = vadd.f32 %v536, %v609
    %v611 = vpop.f32.mrb[0].mxu0
    %v612 = vadd.f32 %v540, %v611
    %613 = vdwg.mxu0
    %v614 = vxor.u32 %v610, 2147483648
    %v615 = vmul.f32 %v614, 1.442695
    %v616 = vpow.pop %v615
    %v617 = vadd.f32 %v616, 1.0
    %v618 = vrcp.pop %v617
    %v619 = vmul.f32 1.0, %v618
    %v620 = vtanh.pop %v612
    %v621 = vxor.u32 %v612, 2147483648
    %v622 = vmul.f32 %v621, 1.442695
    %v623 = vpow.pop %v622
    %v624 = vadd.f32 %v623, 1.0
    %v625 = vrcp.pop %v624
    %v626 = vmul.f32 1.0, %v625
    %v627 = vmul.f32 %v619, 0.0
    %v628 = vmul.f32 %v619, %v620
    %630 = vrot.lane.b32.xlu0 %v628, 64
    %v631 = vpop.permute.xlu0 %630
    %v633 = vadd.f32 %v627, %v631
    %v634 = vtanh.pop %v633
    %v635 = vmul.f32 %v626, %v634
    %637 = vrot.lane.b32.xlu0 %v635, 64
    %v638 = vpop.permute.xlu0 %637
    %640 = vst.msk [vmem:[#allocation2] sm:$0xff] %vm331, %v638
    %642 = vrot.lane.b32.xlu0 %v529, 64
    %v643 = vpop.permute.xlu0 %642
    %v644 = vsel %vm331, %v643, 0
    %646 = vmatprep.subr.mxu0 %v283
    %647 = vmatpush1.msra.mxu0 %v282
    %648 = vmatprep.subr.mxu0 %v285
    %649 = vmatpush1.msra.mxu0 %v284
    %650 = vmatprep.subr.mxu0 %v287
    %651 = vmatpush1.msra.mxu0 %v286
    %652 = vmatprep.subr.mxu0 %v289
    %653 = vmatpush1.msra.mxu0 %v288
    %654 = vmatprep.subr.mxu0 %v291
    %655 = vmatpush1.msra.mxu0 %v290
    %656 = vmatprep.subr.mxu0 %v293
    %657 = vmatpush1.msra.mxu0 %v292
    %658 = vmatprep.subr.mxu0 %v295
    %659 = vmatpush1.msra.mxu0 %v294
    %660 = vmatprep.subr.mxu0 %v297
    %661 = vmatpush1.msra.mxu0 %v296
    %662 = vmatprep.subr.mxu0 0.0
    %663 = vmatpush1.msra.mxu0 0.0
    %664 = vmatprep.subr.mxu0 0.0
    %665 = vmatpush1.msra.mxu0 0.0
    %666 = vmatprep.subr.mxu0 0.0
    %667 = vmatpush1.msra.mxu0 0.0
    %668 = vmatprep.subr.mxu0 0.0
    %669 = vmatpush1.msra.mxu0 0.0
    %670 = vmatprep.subr.mxu0 0.0
    %671 = vmatpush1.msra.mxu0 0.0
    %672 = vmatprep.subr.mxu0 0.0
    %673 = vmatpush1.msra.mxu0 0.0
    %674 = vmatprep.subr.mxu0 0.0
    %675 = vmatpush1.msra.mxu0 0.0
    %676 = vmatprep.subr.mxu0 0.0
    %677 = vmatpush1.msra.mxu0 0.0
    %678 = vmatprep.subr.mxu0 0.0
    %679 = vmatpush1.msra.mxu0 0.0
    %680 = vmatprep.subr.mxu0 0.0
    %681 = vmatpush1.msra.mxu0 0.0
    %682 = vmatprep.subr.mxu0 0.0
    %683 = vmatpush1.msra.mxu0 0.0
    %684 = vmatprep.subr.mxu0 0.0
    %685 = vmatpush1.msra.mxu0 0.0
    %686 = vmatprep.subr.mxu0 0.0
    %687 = vmatpush1.msra.mxu0 0.0
    %688 = vmatprep.subr.mxu0 0.0
    %689 = vmatpush1.msra.mxu0 0.0
    %690 = vmatprep.subr.mxu0 0.0
    %691 = vmatpush1.msra.mxu0 0.0
    %692 = vmatprep.subr.mxu0 0.0
    %693 = vmatpush1.msra.mxu0 0.0
    %694 = vmatprep.subr.mxu0 0.0
    %695 = vmatpush1.msra.mxu0 0.0
    %696 = vmatprep.subr.mxu0 0.0
    %697 = vmatpush1.msra.mxu0 0.0
    %698 = vmatprep.subr.mxu0 0.0
    %699 = vmatpush1.msra.mxu0 0.0
    %700 = vmatprep.subr.mxu0 0.0
    %701 = vmatpush1.msra.mxu0 0.0
    %702 = vmatprep.subr.mxu0 0.0
    %703 = vmatpush1.msra.mxu0 0.0
    %704 = vmatprep.subr.mxu0 0.0
    %705 = vmatpush1.msra.mxu0 0.0
    %706 = vmatprep.subr.mxu0 0.0
    %707 = vmatpush1.msra.mxu0 0.0
    %708 = vmatprep.subr.mxu0 0.0
    %709 = vmatpush1.msra.mxu0 0.0
    %710 = vmatprep.mubr.f32.mxu0 0.0
    %711 = vmatmul.mubr.f32.gmra.mrb[0].mxu0 %v644
    %v712 = vpop.f32.mrb[0].mxu0
    %v713 = vadd.f32 0.0, %v712
    %v714 = vpop.f32.mrb[0].mxu0
    %v715 = vadd.f32 0.0, %v714
    %716 = vdwg.mxu0
    %v717 = vadd.f32 %v248, %v713
    %v718 = vadd.f32 %v250, %v715
    %v719 = vxor.u32 %v717, 2147483648
    %v720 = vmul.f32 %v719, 1.442695
    %v721 = vpow.pop %v720
    %v722 = vadd.f32 %v721, 1.0
    %v723 = vrcp.pop %v722
    %v724 = vmul.f32 1.0, %v723
    %v725 = vtanh.pop %v718
    %v726 = vxor.u32 %v718, 2147483648
    %v727 = vmul.f32 %v726, 1.442695
    %v728 = vpow.pop %v727
    %v729 = vadd.f32 %v728, 1.0
    %v730 = vrcp.pop %v729
    %v731 = vmul.f32 1.0, %v730
    %v732 = vmul.f32 %v724, %v527
    %v733 = vmul.f32 %v724, %v725
    %735 = vrot.lane.b32.xlu0 %v733, 64
    %v736 = vpop.permute.xlu0 %735
    %v738 = vadd.f32 %v732, %v736
    %v739 = vtanh.pop %v738
    %v740 = vmul.f32 %v731, %v739
    %v742 = vsel %vm331, %v643, %v635
    %743 = vmatprep.subr.mxu0 %v299
    %744 = vmatpush1.msra.mxu0 %v298
    %745 = vmatprep.subr.mxu0 %v301
    %746 = vmatpush1.msra.mxu0 %v300
    %747 = vmatprep.subr.mxu0 %v303
    %748 = vmatpush1.msra.mxu0 %v302
    %749 = vmatprep.subr.mxu0 %v305
    %750 = vmatpush1.msra.mxu0 %v304
    %751 = vmatprep.subr.mxu0 %v307
    %752 = vmatpush1.msra.mxu0 %v306
    %753 = vmatprep.subr.mxu0 %v309
    %754 = vmatpush1.msra.mxu0 %v308
    %755 = vmatprep.subr.mxu0 %v311
    %756 = vmatpush1.msra.mxu0 %v310
    %757 = vmatprep.subr.mxu0 %v313
    %758 = vmatpush1.msra.mxu0 %v312
    %759 = vmatprep.subr.mxu0 %v315
    %760 = vmatpush1.msra.mxu0 %v314
    %761 = vmatprep.subr.mxu0 %v317
    %762 = vmatpush1.msra.mxu0 %v316
    %763 = vmatprep.subr.mxu0 %v319
    %764 = vmatpush1.msra.mxu0 %v318
    %765 = vmatprep.subr.mxu0 %v321
    %766 = vmatpush1.msra.mxu0 %v320
    %767 = vmatprep.subr.mxu0 %v323
    %768 = vmatpush1.msra.mxu0 %v322
    %769 = vmatprep.subr.mxu0 %v325
    %770 = vmatpush1.msra.mxu0 %v324
    %771 = vmatprep.subr.mxu0 %v327
    %772 = vmatpush1.msra.mxu0 %v326
    %773 = vmatprep.subr.mxu0 %v329
    %774 = vmatpush1.msra.mxu0 %v328
    %775 = vmatprep.subr.mxu0 0.0
    %776 = vmatpush1.msra.mxu0 0.0
    %777 = vmatprep.subr.mxu0 0.0
    %778 = vmatpush1.msra.mxu0 0.0
    %779 = vmatprep.subr.mxu0 0.0
    %780 = vmatpush1.msra.mxu0 0.0
    %781 = vmatprep.subr.mxu0 0.0
    %782 = vmatpush1.msra.mxu0 0.0
    %783 = vmatprep.subr.mxu0 0.0
    %784 = vmatpush1.msra.mxu0 0.0
    %785 = vmatprep.subr.mxu0 0.0
    %786 = vmatpush1.msra.mxu0 0.0
    %787 = vmatprep.subr.mxu0 0.0
    %788 = vmatpush1.msra.mxu0 0.0
    %789 = vmatprep.subr.mxu0 0.0
    %790 = vmatpush1.msra.mxu0 0.0
    %791 = vmatprep.subr.mxu0 0.0
    %792 = vmatpush1.msra.mxu0 0.0
    %793 = vmatprep.subr.mxu0 0.0
    %794 = vmatpush1.msra.mxu0 0.0
    %795 = vmatprep.subr.mxu0 0.0
    %796 = vmatpush1.msra.mxu0 0.0
    %797 = vmatprep.subr.mxu0 0.0
    %798 = vmatpush1.msra.mxu0 0.0
    %799 = vmatprep.subr.mxu0 0.0
    %800 = vmatpush1.msra.mxu0 0.0
    %801 = vmatprep.subr.mxu0 0.0
    %802 = vmatpush1.msra.mxu0 0.0
    %803 = vmatprep.subr.mxu0 0.0
    %804 = vmatpush1.msra.mxu0 0.0
    %805 = vmatprep.subr.mxu0 0.0
    %806 = vmatpush1.msra.mxu0 0.0
    %807 = vmatprep.mubr.f32.mxu0 0.0
    %808 = vmatmul.mubr.f32.gmra.mrb[0].mxu0 %v742
    %v809 = vpop.f32.mrb[0].mxu0
    %v810 = vadd.f32 %v536, %v809
    %v811 = vpop.f32.mrb[0].mxu0
    %v812 = vadd.f32 %v540, %v811
    %813 = vdwg.mxu0
    %v814 = vxor.u32 %v810, 2147483648
    %v815 = vmul.f32 %v814, 1.442695
    %v816 = vpow.pop %v815
    %v817 = vadd.f32 %v816, 1.0
    %v818 = vrcp.pop %v817
    %v819 = vmul.f32 1.0, %v818
    %v820 = vtanh.pop %v812
    %v821 = vxor.u32 %v812, 2147483648
    %v822 = vmul.f32 %v821, 1.442695
    %v823 = vpow.pop %v822
    %v824 = vadd.f32 %v823, 1.0
    %v825 = vrcp.pop %v824
    %v826 = vmul.f32 1.0, %v825
    %v827 = vmul.f32 %v819, %v633
    %v828 = vmul.f32 %v819, %v820
    %830 = vrot.lane.b32.xlu0 %v828, 64
    %v831 = vpop.permute.xlu0 %830
    %v833 = vadd.f32 %v827, %v831
    %v834 = vtanh.pop %v833
    %v835 = vmul.f32 %v826, %v834
    %837 = vrot.lane.b32.xlu0 %v835, 64
    %v838 = vpop.permute.xlu0 %837
    %840 = vst.msk [vmem:[#allocation2 + $0x8] sm:$0xff] %vm331, %v838
    %842 = vrot.lane.b32.xlu0 %v740, 64
    %v843 = vpop.permute.xlu0 %842
    %v844 = vsel %vm331, %v843, 0
    %846 = vmatprep.subr.mxu0 %v283
    %847 = vmatpush1.msra.mxu0 %v282
    %848 = vmatprep.subr.mxu0 %v285
    %849 = vmatpush1.msra.mxu0 %v284
    %850 = vmatprep.subr.mxu0 %v287
    %851 = vmatpush1.msra.mxu0 %v286
    %852 = vmatprep.subr.mxu0 %v289
    %853 = vmatpush1.msra.mxu0 %v288
    %854 = vmatprep.subr.mxu0 %v291
    %855 = vmatpush1.msra.mxu0 %v290
    %856 = vmatprep.subr.mxu0 %v293
    %857 = vmatpush1.msra.mxu0 %v292
    %858 = vmatprep.subr.mxu0 %v295
    %859 = vmatpush1.msra.mxu0 %v294
    %860 = vmatprep.subr.mxu0 %v297
    %861 = vmatpush1.msra.mxu0 %v296
    %862 = vmatprep.subr.mxu0 0.0
    %863 = vmatpush1.msra.mxu0 0.0
    %864 = vmatprep.subr.mxu0 0.0
    %865 = vmatpush1.msra.mxu0 0.0
    %866 = vmatprep.subr.mxu0 0.0
    %867 = vmatpush1.msra.mxu0 0.0
    %868 = vmatprep.subr.mxu0 0.0
    %869 = vmatpush1.msra.mxu0 0.0
    %870 = vmatprep.subr.mxu0 0.0
    %871 = vmatpush1.msra.mxu0 0.0
    %872 = vmatprep.subr.mxu0 0.0
    %873 = vmatpush1.msra.mxu0 0.0
    %874 = vmatprep.subr.mxu0 0.0
    %875 = vmatpush1.msra.mxu0 0.0
    %876 = vmatprep.subr.mxu0 0.0
    %877 = vmatpush1.msra.mxu0 0.0
    %878 = vmatprep.subr.mxu0 0.0
    %879 = vmatpush1.msra.mxu0 0.0
    %880 = vmatprep.subr.mxu0 0.0
    %881 = vmatpush1.msra.mxu0 0.0
    %882 = vmatprep.subr.mxu0 0.0
    %883 = vmatpush1.msra.mxu0 0.0
    %884 = vmatprep.subr.mxu0 0.0
    %885 = vmatpush1.msra.mxu0 0.0
    %886 = vmatprep.subr.mxu0 0.0
    %887 = vmatpush1.msra.mxu0 0.0
    %888 = vmatprep.subr.mxu0 0.0
    %889 = vmatpush1.msra.mxu0 0.0
    %890 = vmatprep.subr.mxu0 0.0
    %891 = vmatpush1.msra.mxu0 0.0
    %892 = vmatprep.subr.mxu0 0.0
    %893 = vmatpush1.msra.mxu0 0.0
    %894 = vmatprep.subr.mxu0 0.0
    %895 = vmatpush1.msra.mxu0 0.0
    %896 = vmatprep.subr.mxu0 0.0
    %897 = vmatpush1.msra.mxu0 0.0
    %898 = vmatprep.subr.mxu0 0.0
    %899 = vmatpush1.msra.mxu0 0.0
    %900 = vmatprep.subr.mxu0 0.0
    %901 = vmatpush1.msra.mxu0 0.0
    %902 = vmatprep.subr.mxu0 0.0
    %903 = vmatpush1.msra.mxu0 0.0
    %904 = vmatprep.subr.mxu0 0.0
    %905 = vmatpush1.msra.mxu0 0.0
    %906 = vmatprep.subr.mxu0 0.0
    %907 = vmatpush1.msra.mxu0 0.0
    %908 = vmatprep.subr.mxu0 0.0
    %909 = vmatpush1.msra.mxu0 0.0
    %910 = vmatprep.mubr.f32.mxu0 0.0
    %911 = vmatmul.mubr.f32.gmra.mrb[0].mxu0 %v844
    %v912 = vpop.f32.mrb[0].mxu0
    %v913 = vadd.f32 0.0, %v912
    %v914 = vpop.f32.mrb[0].mxu0
    %v915 = vadd.f32 0.0, %v914
    %916 = vdwg.mxu0
    %v917 = vadd.f32 %v254, %v913
    %v918 = vadd.f32 %v256, %v915
    %v919 = vxor.u32 %v917, 2147483648
    %v920 = vmul.f32 %v919, 1.442695
    %v921 = vpow.pop %v920
    %v922 = vadd.f32 %v921, 1.0
    %v923 = vrcp.pop %v922
    %v924 = vmul.f32 1.0, %v923
    %v925 = vtanh.pop %v918
    %v926 = vxor.u32 %v918, 2147483648
    %v927 = vmul.f32 %v926, 1.442695
    %v928 = vpow.pop %v927
    %v929 = vadd.f32 %v928, 1.0
    %v930 = vrcp.pop %v929
    %v931 = vmul.f32 1.0, %v930
    %v932 = vmul.f32 %v924, %v738
    %v933 = vmul.f32 %v924, %v925
    %935 = vrot.lane.b32.xlu0 %v933, 64
    %v936 = vpop.permute.xlu0 %935
    %v938 = vadd.f32 %v932, %v936
    %v939 = vtanh.pop %v938
    %v940 = vmul.f32 %v931, %v939
    %v942 = vsel %vm331, %v843, %v835
    %943 = vmatprep.subr.mxu0 %v299
    %944 = vmatpush1.msra.mxu0 %v298
    %945 = vmatprep.subr.mxu0 %v301
    %946 = vmatpush1.msra.mxu0 %v300
    %947 = vmatprep.subr.mxu0 %v303
    %948 = vmatpush1.msra.mxu0 %v302
    %949 = vmatprep.subr.mxu0 %v305
    %950 = vmatpush1.msra.mxu0 %v304
    %951 = vmatprep.subr.mxu0 %v307
    %952 = vmatpush1.msra.mxu0 %v306
    %953 = vmatprep.subr.mxu0 %v309
    %954 = vmatpush1.msra.mxu0 %v308
    %955 = vmatprep.subr.mxu0 %v311
    %956 = vmatpush1.msra.mxu0 %v310
    %957 = vmatprep.subr.mxu0 %v313
    %958 = vmatpush1.msra.mxu0 %v312
    %959 = vmatprep.subr.mxu0 %v315
    %960 = vmatpush1.msra.mxu0 %v314
    %961 = vmatprep.subr.mxu0 %v317
    %962 = vmatpush1.msra.mxu0 %v316
    %963 = vmatprep.subr.mxu0 %v319
    %964 = vmatpush1.msra.mxu0 %v318
    %965 = vmatprep.subr.mxu0 %v321
    %966 = vmatpush1.msra.mxu0 %v320
    %967 = vmatprep.subr.mxu0 %v323
    %968 = vmatpush1.msra.mxu0 %v322
    %969 = vmatprep.subr.mxu0 %v325
    %970 = vmatpush1.msra.mxu0 %v324
    %971 = vmatprep.subr.mxu0 %v327
    %972 = vmatpush1.msra.mxu0 %v326
    %973 = vmatprep.subr.mxu0 %v329
    %974 = vmatpush1.msra.mxu0 %v328
    %975 = vmatprep.subr.mxu0 0.0
    %976 = vmatpush1.msra.mxu0 0.0
    %977 = vmatprep.subr.mxu0 0.0
    %978 = vmatpush1.msra.mxu0 0.0
    %979 = vmatprep.subr.mxu0 0.0
    %980 = vmatpush1.msra.mxu0 0.0
    %981 = vmatprep.subr.mxu0 0.0
    %982 = vmatpush1.msra.mxu0 0.0
    %983 = vmatprep.subr.mxu0 0.0
    %984 = vmatpush1.msra.mxu0 0.0
    %985 = vmatprep.subr.mxu0 0.0
    %986 = vmatpush1.msra.mxu0 0.0
    %987 = vmatprep.subr.mxu0 0.0
    %988 = vmatpush1.msra.mxu0 0.0
    %989 = vmatprep.subr.mxu0 0.0
    %990 = vmatpush1.msra.mxu0 0.0
    %991 = vmatprep.subr.mxu0 0.0
    %992 = vmatpush1.msra.mxu0 0.0
    %993 = vmatprep.subr.mxu0 0.0
    %994 = vmatpush1.msra.mxu0 0.0
    %995 = vmatprep.subr.mxu0 0.0
    %996 = vmatpush1.msra.mxu0 0.0
    %997 = vmatprep.subr.mxu0 0.0
    %998 = vmatpush1.msra.mxu0 0.0
    %999 = vmatprep.subr.mxu0 0.0
    %1000 = vmatpush1.msra.mxu0 0.0
    %1001 = vmatprep.subr.mxu0 0.0
    %1002 = vmatpush1.msra.mxu0 0.0
    %1003 = vmatprep.subr.mxu0 0.0
    %1004 = vmatpush1.msra.mxu0 0.0
    %1005 = vmatprep.subr.mxu0 0.0
    %1006 = vmatpush1.msra.mxu0 0.0
    %1007 = vmatprep.mubr.f32.mxu0 0.0
    %1008 = vmatmul.mubr.f32.gmra.mrb[0].mxu0 %v942
    %v1009 = vpop.f32.mrb[0].mxu0
    %v1010 = vadd.f32 %v536, %v1009
    %v1011 = vpop.f32.mrb[0].mxu0
    %v1012 = vadd.f32 %v540, %v1011
    %1013 = vdwg.mxu0
    %v1014 = vxor.u32 %v1010, 2147483648
    %v1015 = vmul.f32 %v1014, 1.442695
    %v1016 = vpow.pop %v1015
    %v1017 = vadd.f32 %v1016, 1.0
    %v1018 = vrcp.pop %v1017
    %v1019 = vmul.f32 1.0, %v1018
    %v1020 = vtanh.pop %v1012
    %v1021 = vxor.u32 %v1012, 2147483648
    %v1022 = vmul.f32 %v1021, 1.442695
    %v1023 = vpow.pop %v1022
    %v1024 = vadd.f32 %v1023, 1.0
    %v1025 = vrcp.pop %v1024
    %v1026 = vmul.f32 1.0, %v1025
    %v1027 = vmul.f32 %v1019, %v833
    %v1028 = vmul.f32 %v1019, %v1020
    %1030 = vrot.lane.b32.xlu0 %v1028, 64
    %v1031 = vpop.permute.xlu0 %1030
    %v1033 = vadd.f32 %v1027, %v1031
    %v1034 = vtanh.pop %v1033
    %v1035 = vmul.f32 %v1026, %v1034
    %1037 = vrot.lane.b32.xlu0 %v1035, 64
    %v1038 = vpop.permute.xlu0 %1037
    %1040 = vst.msk [vmem:[#allocation2 + $0x10] sm:$0xff] %vm331, %v1038
    %1042 = vrot.lane.b32.xlu0 %v940, 64
    %v1043 = vpop.permute.xlu0 %1042
    %v1044 = vsel %vm331, %v1043, 0
    %1046 = vmatprep.subr.mxu0 %v283
    %1047 = vmatpush1.msra.mxu0 %v282
    %1048 = vmatprep.subr.mxu0 %v285
    %1049 = vmatpush1.msra.mxu0 %v284
    %1050 = vmatprep.subr.mxu0 %v287
    %1051 = vmatpush1.msra.mxu0 %v286
    %1052 = vmatprep.subr.mxu0 %v289
    %1053 = vmatpush1.msra.mxu0 %v288
    %1054 = vmatprep.subr.mxu0 %v291
    %1055 = vmatpush1.msra.mxu0 %v290
    %1056 = vmatprep.subr.mxu0 %v293
    %1057 = vmatpush1.msra.mxu0 %v292
    %1058 = vmatprep.subr.mxu0 %v295
    %1059 = vmatpush1.msra.mxu0 %v294
    %1060 = vmatprep.subr.mxu0 %v297
    %1061 = vmatpush1.msra.mxu0 %v296
    %1062 = vmatprep.subr.mxu0 0.0
    %1063 = vmatpush1.msra.mxu0 0.0
    %1064 = vmatprep.subr.mxu0 0.0
    %1065 = vmatpush1.msra.mxu0 0.0
    %1066 = vmatprep.subr.mxu0 0.0
    %1067 = vmatpush1.msra.mxu0 0.0
    %1068 = vmatprep.subr.mxu0 0.0
    %1069 = vmatpush1.msra.mxu0 0.0
    %1070 = vmatprep.subr.mxu0 0.0
    %1071 = vmatpush1.msra.mxu0 0.0
    %1072 = vmatprep.subr.mxu0 0.0
    %1073 = vmatpush1.msra.mxu0 0.0
    %1074 = vmatprep.subr.mxu0 0.0
    %1075 = vmatpush1.msra.mxu0 0.0
    %1076 = vmatprep.subr.mxu0 0.0
    %1077 = vmatpush1.msra.mxu0 0.0
    %1078 = vmatprep.subr.mxu0 0.0
    %1079 = vmatpush1.msra.mxu0 0.0
    %1080 = vmatprep.subr.mxu0 0.0
    %1081 = vmatpush1.msra.mxu0 0.0
    %1082 = vmatprep.subr.mxu0 0.0
    %1083 = vmatpush1.msra.mxu0 0.0
    %1084 = vmatprep.subr.mxu0 0.0
    %1085 = vmatpush1.msra.mxu0 0.0
    %1086 = vmatprep.subr.mxu0 0.0
    %1087 = vmatpush1.msra.mxu0 0.0
    %1088 = vmatprep.subr.mxu0 0.0
    %1089 = vmatpush1.msra.mxu0 0.0
    %1090 = vmatprep.subr.mxu0 0.0
    %1091 = vmatpush1.msra.mxu0 0.0
    %1092 = vmatprep.subr.mxu0 0.0
    %1093 = vmatpush1.msra.mxu0 0.0
    %1094 = vmatprep.subr.mxu0 0.0
    %1095 = vmatpush1.msra.mxu0 0.0
    %1096 = vmatprep.subr.mxu0 0.0
    %1097 = vmatpush1.msra.mxu0 0.0
    %1098 = vmatprep.subr.mxu0 0.0
    %1099 = vmatpush1.msra.mxu0 0.0
    %1100 = vmatprep.subr.mxu0 0.0
    %1101 = vmatpush1.msra.mxu0 0.0
    %1102 = vmatprep.subr.mxu0 0.0
    %1103 = vmatpush1.msra.mxu0 0.0
    %1104 = vmatprep.subr.mxu0 0.0
    %1105 = vmatpush1.msra.mxu0 0.0
    %1106 = vmatprep.subr.mxu0 0.0
    %1107 = vmatpush1.msra.mxu0 0.0
    %1108 = vmatprep.subr.mxu0 0.0
    %1109 = vmatpush1.msra.mxu0 0.0
    %1110 = vmatprep.mubr.f32.mxu0 0.0
    %1111 = vmatmul.mubr.f32.gmra.mrb[0].mxu0 %v1044
    %v1112 = vpop.f32.mrb[0].mxu0
    %v1113 = vadd.f32 0.0, %v1112
    %v1114 = vpop.f32.mrb[0].mxu0
    %v1115 = vadd.f32 0.0, %v1114
    %1116 = vdwg.mxu0
    %v1117 = vadd.f32 %v260, %v1113
    %v1118 = vadd.f32 %v262, %v1115
    %v1119 = vxor.u32 %v1117, 2147483648
    %v1120 = vmul.f32 %v1119, 1.442695
    %v1121 = vpow.pop %v1120
    %v1122 = vadd.f32 %v1121, 1.0
    %v1123 = vrcp.pop %v1122
    %v1124 = vmul.f32 1.0, %v1123
    %v1125 = vtanh.pop %v1118
    %v1126 = vxor.u32 %v1118, 2147483648
    %v1127 = vmul.f32 %v1126, 1.442695
    %v1128 = vpow.pop %v1127
    %v1129 = vadd.f32 %v1128, 1.0
    %v1130 = vrcp.pop %v1129
    %v1131 = vmul.f32 1.0, %v1130
    %v1132 = vmul.f32 %v1124, %v938
    %v1133 = vmul.f32 %v1124, %v1125
    %1135 = vrot.lane.b32.xlu0 %v1133, 64
    %v1136 = vpop.permute.xlu0 %1135
    %v1138 = vadd.f32 %v1132, %v1136
    %v1139 = vtanh.pop %v1138
    %v1140 = vmul.f32 %v1131, %v1139
    %v1142 = vsel %vm331, %v1043, %v1035
    %1143 = vmatprep.subr.mxu0 %v299
    %1144 = vmatpush1.msra.mxu0 %v298
    %1145 = vmatprep.subr.mxu0 %v301
    %1146 = vmatpush1.msra.mxu0 %v300
    %1147 = vmatprep.subr.mxu0 %v303
    %1148 = vmatpush1.msra.mxu0 %v302
    %1149 = vmatprep.subr.mxu0 %v305
    %1150 = vmatpush1.msra.mxu0 %v304
    %1151 = vmatprep.subr.mxu0 %v307
    %1152 = vmatpush1.msra.mxu0 %v306
    %1153 = vmatprep.subr.mxu0 %v309
    %1154 = vmatpush1.msra.mxu0 %v308
    %1155 = vmatprep.subr.mxu0 %v311
    %1156 = vmatpush1.msra.mxu0 %v310
    %1157 = vmatprep.subr.mxu0 %v313
    %1158 = vmatpush1.msra.mxu0 %v312
    %1159 = vmatprep.subr.mxu0 %v315
    %1160 = vmatpush1.msra.mxu0 %v314
    %1161 = vmatprep.subr.mxu0 %v317
    %1162 = vmatpush1.msra.mxu0 %v316
    %1163 = vmatprep.subr.mxu0 %v319
    %1164 = vmatpush1.msra.mxu0 %v318
    %1165 = vmatprep.subr.mxu0 %v321
    %1166 = vmatpush1.msra.mxu0 %v320
    %1167 = vmatprep.subr.mxu0 %v323
    %1168 = vmatpush1.msra.mxu0 %v322
    %1169 = vmatprep.subr.mxu0 %v325
    %1170 = vmatpush1.msra.mxu0 %v324
    %1171 = vmatprep.subr.mxu0 %v327
    %1172 = vmatpush1.msra.mxu0 %v326
    %1173 = vmatprep.subr.mxu0 %v329
    %1174 = vmatpush1.msra.mxu0 %v328
    %1175 = vmatprep.subr.mxu0 0.0
    %1176 = vmatpush1.msra.mxu0 0.0
    %1177 = vmatprep.subr.mxu0 0.0
    %1178 = vmatpush1.msra.mxu0 0.0
    %1179 = vmatprep.subr.mxu0 0.0
    %1180 = vmatpush1.msra.mxu0 0.0
    %1181 = vmatprep.subr.mxu0 0.0
    %1182 = vmatpush1.msra.mxu0 0.0
    %1183 = vmatprep.subr.mxu0 0.0
    %1184 = vmatpush1.msra.mxu0 0.0
    %1185 = vmatprep.subr.mxu0 0.0
    %1186 = vmatpush1.msra.mxu0 0.0
    %1187 = vmatprep.subr.mxu0 0.0
    %1188 = vmatpush1.msra.mxu0 0.0
    %1189 = vmatprep.subr.mxu0 0.0
    %1190 = vmatpush1.msra.mxu0 0.0
    %1191 = vmatprep.subr.mxu0 0.0
    %1192 = vmatpush1.msra.mxu0 0.0
    %1193 = vmatprep.subr.mxu0 0.0
    %1194 = vmatpush1.msra.mxu0 0.0
    %1195 = vmatprep.subr.mxu0 0.0
    %1196 = vmatpush1.msra.mxu0 0.0
    %1197 = vmatprep.subr.mxu0 0.0
    %1198 = vmatpush1.msra.mxu0 0.0
    %1199 = vmatprep.subr.mxu0 0.0
    %1200 = vmatpush1.msra.mxu0 0.0
    %1201 = vmatprep.subr.mxu0 0.0
    %1202 = vmatpush1.msra.mxu0 0.0
    %1203 = vmatprep.subr.mxu0 0.0
    %1204 = vmatpush1.msra.mxu0 0.0
    %1205 = vmatprep.subr.mxu0 0.0
    %1206 = vmatpush1.msra.mxu0 0.0
    %1207 = vmatprep.mubr.f32.mxu0 0.0
    %1208 = vmatmul.mubr.f32.gmra.mrb[0].mxu0 %v1142
    %v1209 = vpop.f32.mrb[0].mxu0
    %v1210 = vadd.f32 %v536, %v1209
    %v1211 = vpop.f32.mrb[0].mxu0
    %v1212 = vadd.f32 %v540, %v1211
    %1213 = vdwg.mxu0
    %v1214 = vxor.u32 %v1210, 2147483648
    %v1215 = vmul.f32 %v1214, 1.442695
    %v1216 = vpow.pop %v1215
    %v1217 = vadd.f32 %v1216, 1.0
    %v1218 = vrcp.pop %v1217
    %v1219 = vmul.f32 1.0, %v1218
    %v1220 = vtanh.pop %v1212
    %v1221 = vxor.u32 %v1212, 2147483648
    %v1222 = vmul.f32 %v1221, 1.442695
    %v1223 = vpow.pop %v1222
    %v1224 = vadd.f32 %v1223, 1.0
    %v1225 = vrcp.pop %v1224
    %v1226 = vmul.f32 1.0, %v1225
    %v1227 = vmul.f32 %v1219, %v1033
    %v1228 = vmul.f32 %v1219, %v1220
    %1230 = vrot.lane.b32.xlu0 %v1228, 64
    %v1231 = vpop.permute.xlu0 %1230
    %v1233 = vadd.f32 %v1227, %v1231
    %v1234 = vtanh.pop %v1233
    %v1235 = vmul.f32 %v1226, %v1234
    %1237 = vrot.lane.b32.xlu0 %v1235, 64
    %v1238 = vpop.permute.xlu0 %1237
    %1240 = vst.msk [vmem:[#allocation2 + $0x18] sm:$0xff] %vm331, %v1238
    %1242 = vrot.lane.b32.xlu0 %v1140, 64
    %v1243 = vpop.permute.xlu0 %1242
    %v1244 = vsel %vm331, %v1243, 0
    %1246 = vmatprep.subr.mxu0 %v283
    %1247 = vmatpush1.msra.mxu0 %v282
    %1248 = vmatprep.subr.mxu0 %v285
    %1249 = vmatpush1.msra.mxu0 %v284
    %1250 = vmatprep.subr.mxu0 %v287
    %1251 = vmatpush1.msra.mxu0 %v286
    %1252 = vmatprep.subr.mxu0 %v289
    %1253 = vmatpush1.msra.mxu0 %v288
    %1254 = vmatprep.subr.mxu0 %v291
    %1255 = vmatpush1.msra.mxu0 %v290
    %1256 = vmatprep.subr.mxu0 %v293
    %1257 = vmatpush1.msra.mxu0 %v292
    %1258 = vmatprep.subr.mxu0 %v295
    %1259 = vmatpush1.msra.mxu0 %v294
    %1260 = vmatprep.subr.mxu0 %v297
    %1261 = vmatpush1.msra.mxu0 %v296
    %1262 = vmatprep.subr.mxu0 0.0
    %1263 = vmatpush1.msra.mxu0 0.0
    %1264 = vmatprep.subr.mxu0 0.0
    %1265 = vmatpush1.msra.mxu0 0.0
    %1266 = vmatprep.subr.mxu0 0.0
    %1267 = vmatpush1.msra.mxu0 0.0
    %1268 = vmatprep.subr.mxu0 0.0
    %1269 = vmatpush1.msra.mxu0 0.0
    %1270 = vmatprep.subr.mxu0 0.0
    %1271 = vmatpush1.msra.mxu0 0.0
    %1272 = vmatprep.subr.mxu0 0.0
    %1273 = vmatpush1.msra.mxu0 0.0
    %1274 = vmatprep.subr.mxu0 0.0
    %1275 = vmatpush1.msra.mxu0 0.0
    %1276 = vmatprep.subr.mxu0 0.0
    %1277 = vmatpush1.msra.mxu0 0.0
    %1278 = vmatprep.subr.mxu0 0.0
    %1279 = vmatpush1.msra.mxu0 0.0
    %1280 = vmatprep.subr.mxu0 0.0
    %1281 = vmatpush1.msra.mxu0 0.0
    %1282 = vmatprep.subr.mxu0 0.0
    %1283 = vmatpush1.msra.mxu0 0.0
    %1284 = vmatprep.subr.mxu0 0.0
    %1285 = vmatpush1.msra.mxu0 0.0
    %1286 = vmatprep.subr.mxu0 0.0
    %1287 = vmatpush1.msra.mxu0 0.0
    %1288 = vmatprep.subr.mxu0 0.0
    %1289 = vmatpush1.msra.mxu0 0.0
    %1290 = vmatprep.subr.mxu0 0.0
    %1291 = vmatpush1.msra.mxu0 0.0
    %1292 = vmatprep.subr.mxu0 0.0
    %1293 = vmatpush1.msra.mxu0 0.0
    %1294 = vmatprep.subr.mxu0 0.0
    %1295 = vmatpush1.msra.mxu0 0.0
    %1296 = vmatprep.subr.mxu0 0.0
    %1297 = vmatpush1.msra.mxu0 0.0
    %1298 = vmatprep.subr.mxu0 0.0
    %1299 = vmatpush1.msra.mxu0 0.0
    %1300 = vmatprep.subr.mxu0 0.0
    %1301 = vmatpush1.msra.mxu0 0.0
    %1302 = vmatprep.subr.mxu0 0.0
    %1303 = vmatpush1.msra.mxu0 0.0
    %1304 = vmatprep.subr.mxu0 0.0
    %1305 = vmatpush1.msra.mxu0 0.0
    %1306 = vmatprep.subr.mxu0 0.0
    %1307 = vmatpush1.msra.mxu0 0.0
    %1308 = vmatprep.subr.mxu0 0.0
    %1309 = vmatpush1.msra.mxu0 0.0
    %1310 = vmatprep.mubr.f32.mxu0 0.0
    %1311 = vmatmul.mubr.f32.gmra.mrb[0].mxu0 %v1244
    %v1312 = vpop.f32.mrb[0].mxu0
    %v1313 = vadd.f32 0.0, %v1312
    %v1314 = vpop.f32.mrb[0].mxu0
    %v1315 = vadd.f32 0.0, %v1314
    %1316 = vdwg.mxu0
    %v1317 = vadd.f32 %v266, %v1313
    %v1318 = vadd.f32 %v268, %v1315
    %v1319 = vxor.u32 %v1317, 2147483648
    %v1320 = vmul.f32 %v1319, 1.442695
    %v1321 = vpow.pop %v1320
    %v1322 = vadd.f32 %v1321, 1.0
    %v1323 = vrcp.pop %v1322
    %v1324 = vmul.f32 1.0, %v1323
    %v1325 = vtanh.pop %v1318
    %v1326 = vxor.u32 %v1318, 2147483648
    %v1327 = vmul.f32 %v1326, 1.442695
    %v1328 = vpow.pop %v1327
    %v1329 = vadd.f32 %v1328, 1.0
    %v1330 = vrcp.pop %v1329
    %v1331 = vmul.f32 1.0, %v1330
    %v1332 = vmul.f32 %v1324, %v1138
    %v1333 = vmul.f32 %v1324, %v1325
    %1335 = vrot.lane.b32.xlu0 %v1333, 64
    %v1336 = vpop.permute.xlu0 %1335
    %v1338 = vadd.f32 %v1332, %v1336
    %v1339 = vtanh.pop %v1338
    %v1340 = vmul.f32 %v1331, %v1339
    %v1342 = vsel %vm331, %v1243, %v1235
    %1343 = vmatprep.subr.mxu0 %v299
    %1344 = vmatpush1.msra.mxu0 %v298
    %1345 = vmatprep.subr.mxu0 %v301
    %1346 = vmatpush1.msra.mxu0 %v300
    %1347 = vmatprep.subr.mxu0 %v303
    %1348 = vmatpush1.msra.mxu0 %v302
    %1349 = vmatprep.subr.mxu0 %v305
    %1350 = vmatpush1.msra.mxu0 %v304
    %1351 = vmatprep.subr.mxu0 %v307
    %1352 = vmatpush1.msra.mxu0 %v306
    %1353 = vmatprep.subr.mxu0 %v309
    %1354 = vmatpush1.msra.mxu0 %v308
    %1355 = vmatprep.subr.mxu0 %v311
    %1356 = vmatpush1.msra.mxu0 %v310
    %1357 = vmatprep.subr.mxu0 %v313
    %1358 = vmatpush1.msra.mxu0 %v312
    %1359 = vmatprep.subr.mxu0 %v315
    %1360 = vmatpush1.msra.mxu0 %v314
    %1361 = vmatprep.subr.mxu0 %v317
    %1362 = vmatpush1.msra.mxu0 %v316
    %1363 = vmatprep.subr.mxu0 %v319
    %1364 = vmatpush1.msra.mxu0 %v318
    %1365 = vmatprep.subr.mxu0 %v321
    %1366 = vmatpush1.msra.mxu0 %v320
    %1367 = vmatprep.subr.mxu0 %v323
    %1368 = vmatpush1.msra.mxu0 %v322
    %1369 = vmatprep.subr.mxu0 %v325
    %1370 = vmatpush1.msra.mxu0 %v324
    %1371 = vmatprep.subr.mxu0 %v327
    %1372 = vmatpush1.msra.mxu0 %v326
    %1373 = vmatprep.subr.mxu0 %v329
    %1374 = vmatpush1.msra.mxu0 %v328
    %1375 = vmatprep.subr.mxu0 0.0
    %1376 = vmatpush1.msra.mxu0 0.0
    %1377 = vmatprep.subr.mxu0 0.0
    %1378 = vmatpush1.msra.mxu0 0.0
    %1379 = vmatprep.subr.mxu0 0.0
    %1380 = vmatpush1.msra.mxu0 0.0
    %1381 = vmatprep.subr.mxu0 0.0
    %1382 = vmatpush1.msra.mxu0 0.0
    %1383 = vmatprep.subr.mxu0 0.0
    %1384 = vmatpush1.msra.mxu0 0.0
    %1385 = vmatprep.subr.mxu0 0.0
    %1386 = vmatpush1.msra.mxu0 0.0
    %1387 = vmatprep.subr.mxu0 0.0
    %1388 = vmatpush1.msra.mxu0 0.0
    %1389 = vmatprep.subr.mxu0 0.0
    %1390 = vmatpush1.msra.mxu0 0.0
    %1391 = vmatprep.subr.mxu0 0.0
    %1392 = vmatpush1.msra.mxu0 0.0
    %1393 = vmatprep.subr.mxu0 0.0
    %1394 = vmatpush1.msra.mxu0 0.0
    %1395 = vmatprep.subr.mxu0 0.0
    %1396 = vmatpush1.msra.mxu0 0.0
    %1397 = vmatprep.subr.mxu0 0.0
    %1398 = vmatpush1.msra.mxu0 0.0
    %1399 = vmatprep.subr.mxu0 0.0
    %1400 = vmatpush1.msra.mxu0 0.0
    %1401 = vmatprep.subr.mxu0 0.0
    %1402 = vmatpush1.msra.mxu0 0.0
    %1403 = vmatprep.subr.mxu0 0.0
    %1404 = vmatpush1.msra.mxu0 0.0
    %1405 = vmatprep.subr.mxu0 0.0
    %1406 = vmatpush1.msra.mxu0 0.0
    %1407 = vmatprep.mubr.f32.mxu0 0.0
    %1408 = vmatmul.mubr.f32.gmra.mrb[0].mxu0 %v1342
    %v1409 = vpop.f32.mrb[0].mxu0
    %v1410 = vadd.f32 %v536, %v1409
    %v1411 = vpop.f32.mrb[0].mxu0
    %v1412 = vadd.f32 %v540, %v1411
    %1413 = vdwg.mxu0
    %v1414 = vxor.u32 %v1410, 2147483648
    %v1415 = vmul.f32 %v1414, 1.442695
    %v1416 = vpow.pop %v1415
    %v1417 = vadd.f32 %v1416, 1.0
    %v1418 = vrcp.pop %v1417
    %v1419 = vmul.f32 1.0, %v1418
    %v1420 = vtanh.pop %v1412
    %v1421 = vxor.u32 %v1412, 2147483648
    %v1422 = vmul.f32 %v1421, 1.442695
    %v1423 = vpow.pop %v1422
    %v1424 = vadd.f32 %v1423, 1.0
    %v1425 = vrcp.pop %v1424
    %v1426 = vmul.f32 1.0, %v1425
    %v1427 = vmul.f32 %v1419, %v1233
    %v1428 = vmul.f32 %v1419, %v1420
    %1430 = vrot.lane.b32.xlu0 %v1428, 64
    %v1431 = vpop.permute.xlu0 %1430
    %v1433 = vadd.f32 %v1427, %v1431
    %v1434 = vtanh.pop %v1433
    %v1435 = vmul.f32 %v1426, %v1434
    %1437 = vrot.lane.b32.xlu0 %v1435, 64
    %v1438 = vpop.permute.xlu0 %1437
    %1440 = vst.msk [vmem:[#allocation2 + $0x20] sm:$0xff] %vm331, %v1438
    %1442 = vrot.lane.b32.xlu0 %v1340, 64
    %v1443 = vpop.permute.xlu0 %1442
    %v1444 = vsel %vm331, %v1443, 0
    %1446 = vmatprep.subr.mxu0 %v283
    %1447 = vmatpush1.msra.mxu0 %v282
    %1448 = vmatprep.subr.mxu0 %v285
    %1449 = vmatpush1.msra.mxu0 %v284
    %1450 = vmatprep.subr.mxu0 %v287
    %1451 = vmatpush1.msra.mxu0 %v286
    %1452 = vmatprep.subr.mxu0 %v289
    %1453 = vmatpush1.msra.mxu0 %v288
    %1454 = vmatprep.subr.mxu0 %v291
    %1455 = vmatpush1.msra.mxu0 %v290
    %1456 = vmatprep.subr.mxu0 %v293
    %1457 = vmatpush1.msra.mxu0 %v292
    %1458 = vmatprep.subr.mxu0 %v295
    %1459 = vmatpush1.msra.mxu0 %v294
    %1460 = vmatprep.subr.mxu0 %v297
    %1461 = vmatpush1.msra.mxu0 %v296
    %1462 = vmatprep.subr.mxu0 0.0
    %1463 = vmatpush1.msra.mxu0 0.0
    %1464 = vmatprep.subr.mxu0 0.0
    %1465 = vmatpush1.msra.mxu0 0.0
    %1466 = vmatprep.subr.mxu0 0.0
    %1467 = vmatpush1.msra.mxu0 0.0
    %1468 = vmatprep.subr.mxu0 0.0
    %1469 = vmatpush1.msra.mxu0 0.0
    %1470 = vmatprep.subr.mxu0 0.0
    %1471 = vmatpush1.msra.mxu0 0.0
    %1472 = vmatprep.subr.mxu0 0.0
    %1473 = vmatpush1.msra.mxu0 0.0
    %1474 = vmatprep.subr.mxu0 0.0
    %1475 = vmatpush1.msra.mxu0 0.0
    %1476 = vmatprep.subr.mxu0 0.0
    %1477 = vmatpush1.msra.mxu0 0.0
    %1478 = vmatprep.subr.mxu0 0.0
    %1479 = vmatpush1.msra.mxu0 0.0
    %1480 = vmatprep.subr.mxu0 0.0
    %1481 = vmatpush1.msra.mxu0 0.0
    %1482 = vmatprep.subr.mxu0 0.0
    %1483 = vmatpush1.msra.mxu0 0.0
    %1484 = vmatprep.subr.mxu0 0.0
    %1485 = vmatpush1.msra.mxu0 0.0
    %1486 = vmatprep.subr.mxu0 0.0
    %1487 = vmatpush1.msra.mxu0 0.0
    %1488 = vmatprep.subr.mxu0 0.0
    %1489 = vmatpush1.msra.mxu0 0.0
    %1490 = vmatprep.subr.mxu0 0.0
    %1491 = vmatpush1.msra.mxu0 0.0
    %1492 = vmatprep.subr.mxu0 0.0
    %1493 = vmatpush1.msra.mxu0 0.0
    %1494 = vmatprep.subr.mxu0 0.0
    %1495 = vmatpush1.msra.mxu0 0.0
    %1496 = vmatprep.subr.mxu0 0.0
    %1497 = vmatpush1.msra.mxu0 0.0
    %1498 = vmatprep.subr.mxu0 0.0
    %1499 = vmatpush1.msra.mxu0 0.0
    %1500 = vmatprep.subr.mxu0 0.0
    %1501 = vmatpush1.msra.mxu0 0.0
    %1502 = vmatprep.subr.mxu0 0.0
    %1503 = vmatpush1.msra.mxu0 0.0
    %1504 = vmatprep.subr.mxu0 0.0
    %1505 = vmatpush1.msra.mxu0 0.0
    %1506 = vmatprep.subr.mxu0 0.0
    %1507 = vmatpush1.msra.mxu0 0.0
    %1508 = vmatprep.subr.mxu0 0.0
    %1509 = vmatpush1.msra.mxu0 0.0
    %1510 = vmatprep.mubr.f32.mxu0 0.0
    %1511 = vmatmul.mubr.f32.gmra.mrb[0].mxu0 %v1444
    %v1512 = vpop.f32.mrb[0].mxu0
    %v1513 = vadd.f32 0.0, %v1512
    %v1514 = vpop.f32.mrb[0].mxu0
    %v1515 = vadd.f32 0.0, %v1514
    %1516 = vdwg.mxu0
    %v1517 = vadd.f32 %v272, %v1513
    %v1518 = vadd.f32 %v274, %v1515
    %v1519 = vxor.u32 %v1517, 2147483648
    %v1520 = vmul.f32 %v1519, 1.442695
    %v1521 = vpow.pop %v1520
    %v1522 = vadd.f32 %v1521, 1.0
    %v1523 = vrcp.pop %v1522
    %v1524 = vmul.f32 1.0, %v1523
    %v1525 = vtanh.pop %v1518
    %v1526 = vxor.u32 %v1518, 2147483648
    %v1527 = vmul.f32 %v1526, 1.442695
    %v1528 = vpow.pop %v1527
    %v1529 = vadd.f32 %v1528, 1.0
    %v1530 = vrcp.pop %v1529
    %v1531 = vmul.f32 1.0, %v1530
    %v1532 = vmul.f32 %v1524, %v1338
    %v1533 = vmul.f32 %v1524, %v1525
    %1535 = vrot.lane.b32.xlu0 %v1533, 64
    %v1536 = vpop.permute.xlu0 %1535
    %v1538 = vadd.f32 %v1532, %v1536
    %v1539 = vtanh.pop %v1538
    %v1540 = vmul.f32 %v1531, %v1539
    %v1542 = vsel %vm331, %v1443, %v1435
    %1543 = vmatprep.subr.mxu0 %v299
    %1544 = vmatpush1.msra.mxu0 %v298
    %1545 = vmatprep.subr.mxu0 %v301
    %1546 = vmatpush1.msra.mxu0 %v300
    %1547 = vmatprep.subr.mxu0 %v303
    %1548 = vmatpush1.msra.mxu0 %v302
    %1549 = vmatprep.subr.mxu0 %v305
    %1550 = vmatpush1.msra.mxu0 %v304
    %1551 = vmatprep.subr.mxu0 %v307
    %1552 = vmatpush1.msra.mxu0 %v306
    %1553 = vmatprep.subr.mxu0 %v309
    %1554 = vmatpush1.msra.mxu0 %v308
    %1555 = vmatprep.subr.mxu0 %v311
    %1556 = vmatpush1.msra.mxu0 %v310
    %1557 = vmatprep.subr.mxu0 %v313
    %1558 = vmatpush1.msra.mxu0 %v312
    %1559 = vmatprep.subr.mxu0 %v315
    %1560 = vmatpush1.msra.mxu0 %v314
    %1561 = vmatprep.subr.mxu0 %v317
    %1562 = vmatpush1.msra.mxu0 %v316
    %1563 = vmatprep.subr.mxu0 %v319
    %1564 = vmatpush1.msra.mxu0 %v318
    %1565 = vmatprep.subr.mxu0 %v321
    %1566 = vmatpush1.msra.mxu0 %v320
    %1567 = vmatprep.subr.mxu0 %v323
    %1568 = vmatpush1.msra.mxu0 %v322
    %1569 = vmatprep.subr.mxu0 %v325
    %1570 = vmatpush1.msra.mxu0 %v324
    %1571 = vmatprep.subr.mxu0 %v327
    %1572 = vmatpush1.msra.mxu0 %v326
    %1573 = vmatprep.subr.mxu0 %v329
    %1574 = vmatpush1.msra.mxu0 %v328
    %1575 = vmatprep.subr.mxu0 0.0
    %1576 = vmatpush1.msra.mxu0 0.0
    %1577 = vmatprep.subr.mxu0 0.0
    %1578 = vmatpush1.msra.mxu0 0.0
    %1579 = vmatprep.subr.mxu0 0.0
    %1580 = vmatpush1.msra.mxu0 0.0
    %1581 = vmatprep.subr.mxu0 0.0
    %1582 = vmatpush1.msra.mxu0 0.0
    %1583 = vmatprep.subr.mxu0 0.0
    %1584 = vmatpush1.msra.mxu0 0.0
    %1585 = vmatprep.subr.mxu0 0.0
    %1586 = vmatpush1.msra.mxu0 0.0
    %1587 = vmatprep.subr.mxu0 0.0
    %1588 = vmatpush1.msra.mxu0 0.0
    %1589 = vmatprep.subr.mxu0 0.0
    %1590 = vmatpush1.msra.mxu0 0.0
    %1591 = vmatprep.subr.mxu0 0.0
    %1592 = vmatpush1.msra.mxu0 0.0
    %1593 = vmatprep.subr.mxu0 0.0
    %1594 = vmatpush1.msra.mxu0 0.0
    %1595 = vmatprep.subr.mxu0 0.0
    %1596 = vmatpush1.msra.mxu0 0.0
    %1597 = vmatprep.subr.mxu0 0.0
    %1598 = vmatpush1.msra.mxu0 0.0
    %1599 = vmatprep.subr.mxu0 0.0
    %1600 = vmatpush1.msra.mxu0 0.0
    %1601 = vmatprep.subr.mxu0 0.0
    %1602 = vmatpush1.msra.mxu0 0.0
    %1603 = vmatprep.subr.mxu0 0.0
    %1604 = vmatpush1.msra.mxu0 0.0
    %1605 = vmatprep.subr.mxu0 0.0
    %1606 = vmatpush1.msra.mxu0 0.0
    %1607 = vmatprep.mubr.f32.mxu0 0.0
    %1608 = vmatmul.mubr.f32.gmra.mrb[0].mxu0 %v1542
    %v1609 = vpop.f32.mrb[0].mxu0
    %v1610 = vadd.f32 %v536, %v1609
    %v1611 = vpop.f32.mrb[0].mxu0
    %v1612 = vadd.f32 %v540, %v1611
    %1613 = vdwg.mxu0
    %v1614 = vxor.u32 %v1610, 2147483648
    %v1615 = vmul.f32 %v1614, 1.442695
    %v1616 = vpow.pop %v1615
    %v1617 = vadd.f32 %v1616, 1.0
    %v1618 = vrcp.pop %v1617
    %v1619 = vmul.f32 1.0, %v1618
    %v1620 = vtanh.pop %v1612
    %v1621 = vxor.u32 %v1612, 2147483648
    %v1622 = vmul.f32 %v1621, 1.442695
    %v1623 = vpow.pop %v1622
    %v1624 = vadd.f32 %v1623, 1.0
    %v1625 = vrcp.pop %v1624
    %v1626 = vmul.f32 1.0, %v1625
    %v1627 = vmul.f32 %v1619, %v1433
    %v1628 = vmul.f32 %v1619, %v1620
    %1630 = vrot.lane.b32.xlu0 %v1628, 64
    %v1631 = vpop.permute.xlu0 %1630
    %v1633 = vadd.f32 %v1627, %v1631
    %v1634 = vtanh.pop %v1633
    %v1635 = vmul.f32 %v1626, %v1634
    %1637 = vrot.lane.b32.xlu0 %v1635, 64
    %v1638 = vpop.permute.xlu0 %1637
    %1640 = vst.msk [vmem:[#allocation2 + $0x28] sm:$0xff] %vm331, %v1638
    %1642 = vrot.lane.b32.xlu0 %v1540, 64
    %v1643 = vpop.permute.xlu0 %1642
    %v1644 = vsel %vm331, %v1643, 0
    %1646 = vmatprep.subr.mxu0 %v283
    %1647 = vmatpush1.msra.mxu0 %v282
    %1648 = vmatprep.subr.mxu0 %v285
    %1649 = vmatpush1.msra.mxu0 %v284
    %1650 = vmatprep.subr.mxu0 %v287
    %1651 = vmatpush1.msra.mxu0 %v286
    %1652 = vmatprep.subr.mxu0 %v289
    %1653 = vmatpush1.msra.mxu0 %v288
    %1654 = vmatprep.subr.mxu0 %v291
    %1655 = vmatpush1.msra.mxu0 %v290
    %1656 = vmatprep.subr.mxu0 %v293
    %1657 = vmatpush1.msra.mxu0 %v292
    %1658 = vmatprep.subr.mxu0 %v295
    %1659 = vmatpush1.msra.mxu0 %v294
    %1660 = vmatprep.subr.mxu0 %v297
    %1661 = vmatpush1.msra.mxu0 %v296
    %1662 = vmatprep.subr.mxu0 0.0
    %1663 = vmatpush1.msra.mxu0 0.0
    %1664 = vmatprep.subr.mxu0 0.0
    %1665 = vmatpush1.msra.mxu0 0.0
    %1666 = vmatprep.subr.mxu0 0.0
    %1667 = vmatpush1.msra.mxu0 0.0
    %1668 = vmatprep.subr.mxu0 0.0
    %1669 = vmatpush1.msra.mxu0 0.0
    %1670 = vmatprep.subr.mxu0 0.0
    %1671 = vmatpush1.msra.mxu0 0.0
    %1672 = vmatprep.subr.mxu0 0.0
    %1673 = vmatpush1.msra.mxu0 0.0
    %1674 = vmatprep.subr.mxu0 0.0
    %1675 = vmatpush1.msra.mxu0 0.0
    %1676 = vmatprep.subr.mxu0 0.0
    %1677 = vmatpush1.msra.mxu0 0.0
    %1678 = vmatprep.subr.mxu0 0.0
    %1679 = vmatpush1.msra.mxu0 0.0
    %1680 = vmatprep.subr.mxu0 0.0
    %1681 = vmatpush1.msra.mxu0 0.0
    %1682 = vmatprep.subr.mxu0 0.0
    %1683 = vmatpush1.msra.mxu0 0.0
    %1684 = vmatprep.subr.mxu0 0.0
    %1685 = vmatpush1.msra.mxu0 0.0
    %1686 = vmatprep.subr.mxu0 0.0
    %1687 = vmatpush1.msra.mxu0 0.0
    %1688 = vmatprep.subr.mxu0 0.0
    %1689 = vmatpush1.msra.mxu0 0.0
    %1690 = vmatprep.subr.mxu0 0.0
    %1691 = vmatpush1.msra.mxu0 0.0
    %1692 = vmatprep.subr.mxu0 0.0
    %1693 = vmatpush1.msra.mxu0 0.0
    %1694 = vmatprep.subr.mxu0 0.0
    %1695 = vmatpush1.msra.mxu0 0.0
    %1696 = vmatprep.subr.mxu0 0.0
    %1697 = vmatpush1.msra.mxu0 0.0
    %1698 = vmatprep.subr.mxu0 0.0
    %1699 = vmatpush1.msra.mxu0 0.0
    %1700 = vmatprep.subr.mxu0 0.0
    %1701 = vmatpush1.msra.mxu0 0.0
    %1702 = vmatprep.subr.mxu0 0.0
    %1703 = vmatpush1.msra.mxu0 0.0
    %1704 = vmatprep.subr.mxu0 0.0
    %1705 = vmatpush1.msra.mxu0 0.0
    %1706 = vmatprep.subr.mxu0 0.0
    %1707 = vmatpush1.msra.mxu0 0.0
    %1708 = vmatprep.subr.mxu0 0.0
    %1709 = vmatpush1.msra.mxu0 0.0
    %1710 = vmatprep.mubr.f32.mxu0 0.0
    %1711 = vmatmul.mubr.f32.gmra.mrb[0].mxu0 %v1644
    %v1712 = vpop.f32.mrb[0].mxu0
    %v1713 = vadd.f32 0.0, %v1712
    %v1714 = vpop.f32.mrb[0].mxu0
    %v1715 = vadd.f32 0.0, %v1714
    %1716 = vdwg.mxu0
    %v1717 = vadd.f32 %v278, %v1713
    %v1718 = vadd.f32 %v280, %v1715
    %v1719 = vxor.u32 %v1717, 2147483648
    %v1720 = vmul.f32 %v1719, 1.442695
    %v1721 = vpow.pop %v1720
    %v1722 = vadd.f32 %v1721, 1.0
    %v1723 = vrcp.pop %v1722
    %v1724 = vmul.f32 1.0, %v1723
    %v1725 = vtanh.pop %v1718
    %v1726 = vxor.u32 %v1718, 2147483648
    %v1727 = vmul.f32 %v1726, 1.442695
    %v1728 = vpow.pop %v1727
    %v1729 = vadd.f32 %v1728, 1.0
    %v1730 = vrcp.pop %v1729
    %v1731 = vmul.f32 1.0, %v1730
    %v1732 = vmul.f32 %v1724, %v1538
    %v1733 = vmul.f32 %v1724, %v1725
    %1735 = vrot.lane.b32.xlu0 %v1733, 64
    %v1736 = vpop.permute.xlu0 %1735
    %v1738 = vadd.f32 %v1732, %v1736
    %v1739 = vtanh.pop %v1738
    %v1740 = vmul.f32 %v1731, %v1739
    %v1742 = vsel %vm331, %v1643, %v1635
    %1743 = vmatprep.subr.mxu0 %v299
    %1744 = vmatpush1.msra.mxu0 %v298
    %1745 = vmatprep.subr.mxu0 %v301
    %1746 = vmatpush1.msra.mxu0 %v300
    %1747 = vmatprep.subr.mxu0 %v303
    %1748 = vmatpush1.msra.mxu0 %v302
    %1749 = vmatprep.subr.mxu0 %v305
    %1750 = vmatpush1.msra.mxu0 %v304
    %1751 = vmatprep.subr.mxu0 %v307
    %1752 = vmatpush1.msra.mxu0 %v306
    %1753 = vmatprep.subr.mxu0 %v309
    %1754 = vmatpush1.msra.mxu0 %v308
    %1755 = vmatprep.subr.mxu0 %v311
    %1756 = vmatpush1.msra.mxu0 %v310
    %1757 = vmatprep.subr.mxu0 %v313
    %1758 = vmatpush1.msra.mxu0 %v312
    %1759 = vmatprep.subr.mxu0 %v315
    %1760 = vmatpush1.msra.mxu0 %v314
    %1761 = vmatprep.subr.mxu0 %v317
    %1762 = vmatpush1.msra.mxu0 %v316
    %1763 = vmatprep.subr.mxu0 %v319
    %1764 = vmatpush1.msra.mxu0 %v318
    %1765 = vmatprep.subr.mxu0 %v321
    %1766 = vmatpush1.msra.mxu0 %v320
    %1767 = vmatprep.subr.mxu0 %v323
    %1768 = vmatpush1.msra.mxu0 %v322
    %1769 = vmatprep.subr.mxu0 %v325
    %1770 = vmatpush1.msra.mxu0 %v324
    %1771 = vmatprep.subr.mxu0 %v327
    %1772 = vmatpush1.msra.mxu0 %v326
    %1773 = vmatprep.subr.mxu0 %v329
    %1774 = vmatpush1.msra.mxu0 %v328
    %1775 = vmatprep.subr.mxu0 0.0
    %1776 = vmatpush1.msra.mxu0 0.0
    %1777 = vmatprep.subr.mxu0 0.0
    %1778 = vmatpush1.msra.mxu0 0.0
    %1779 = vmatprep.subr.mxu0 0.0
    %1780 = vmatpush1.msra.mxu0 0.0
    %1781 = vmatprep.subr.mxu0 0.0
    %1782 = vmatpush1.msra.mxu0 0.0
    %1783 = vmatprep.subr.mxu0 0.0
    %1784 = vmatpush1.msra.mxu0 0.0
    %1785 = vmatprep.subr.mxu0 0.0
    %1786 = vmatpush1.msra.mxu0 0.0
    %1787 = vmatprep.subr.mxu0 0.0
    %1788 = vmatpush1.msra.mxu0 0.0
    %1789 = vmatprep.subr.mxu0 0.0
    %1790 = vmatpush1.msra.mxu0 0.0
    %1791 = vmatprep.subr.mxu0 0.0
    %1792 = vmatpush1.msra.mxu0 0.0
    %1793 = vmatprep.subr.mxu0 0.0
    %1794 = vmatpush1.msra.mxu0 0.0
    %1795 = vmatprep.subr.mxu0 0.0
    %1796 = vmatpush1.msra.mxu0 0.0
    %1797 = vmatprep.subr.mxu0 0.0
    %1798 = vmatpush1.msra.mxu0 0.0
    %1799 = vmatprep.subr.mxu0 0.0
    %1800 = vmatpush1.msra.mxu0 0.0
    %1801 = vmatprep.subr.mxu0 0.0
    %1802 = vmatpush1.msra.mxu0 0.0
    %1803 = vmatprep.subr.mxu0 0.0
    %1804 = vmatpush1.msra.mxu0 0.0
    %1805 = vmatprep.subr.mxu0 0.0
    %1806 = vmatpush1.msra.mxu0 0.0
    %1807 = vmatprep.mubr.f32.mxu0 0.0
    %1808 = vmatmul.mubr.f32.gmra.mrb[0].mxu0 %v1742
    %v1809 = vpop.f32.mrb[0].mxu0
    %v1810 = vadd.f32 %v536, %v1809
    %v1811 = vpop.f32.mrb[0].mxu0
    %v1812 = vadd.f32 %v540, %v1811
    %1813 = vdwg.mxu0
    %v1814 = vxor.u32 %v1810, 2147483648
    %v1815 = vmul.f32 %v1814, 1.442695
    %v1816 = vpow.pop %v1815
    %v1817 = vadd.f32 %v1816, 1.0
    %v1818 = vrcp.pop %v1817
    %v1819 = vmul.f32 1.0, %v1818
    %v1820 = vtanh.pop %v1812
    %v1821 = vxor.u32 %v1812, 2147483648
    %v1822 = vmul.f32 %v1821, 1.442695
    %v1823 = vpow.pop %v1822
    %v1824 = vadd.f32 %v1823, 1.0
    %v1825 = vrcp.pop %v1824
    %v1826 = vmul.f32 1.0, %v1825
    %v1827 = vmul.f32 %v1819, %v1633
    %v1828 = vmul.f32 %v1819, %v1820
    %1830 = vrot.lane.b32.xlu0 %v1828, 64
    %v1831 = vpop.permute.xlu0 %1830
    %v1833 = vadd.f32 %v1827, %v1831
    %v1834 = vtanh.pop %v1833
    %v1835 = vmul.f32 %v1826, %v1834
    %1837 = vrot.lane.b32.xlu0 %v1835, 64
    %v1838 = vpop.permute.xlu0 %1837
    %1840 = vst.msk [vmem:[#allocation2 + $0x30] sm:$0xff] %vm331, %v1838
    %1842 = vrot.lane.b32.xlu0 %v1740, 64
    %v1843 = vpop.permute.xlu0 %1842
    %v1845 = vsel %vm331, %v1843, %v1835
    %1846 = vmatprep.subr.mxu0 %v299
    %1847 = vmatpush1.msra.mxu0 %v298
    %1848 = vmatprep.subr.mxu0 %v301
    %1849 = vmatpush1.msra.mxu0 %v300
    %1850 = vmatprep.subr.mxu0 %v303
    %1851 = vmatpush1.msra.mxu0 %v302
    %1852 = vmatprep.subr.mxu0 %v305
    %1853 = vmatpush1.msra.mxu0 %v304
    %1854 = vmatprep.subr.mxu0 %v307
    %1855 = vmatpush1.msra.mxu0 %v306
    %1856 = vmatprep.subr.mxu0 %v309
    %1857 = vmatpush1.msra.mxu0 %v308
    %1858 = vmatprep.subr.mxu0 %v311
    %1859 = vmatpush1.msra.mxu0 %v310
    %1860 = vmatprep.subr.mxu0 %v313
    %1861 = vmatpush1.msra.mxu0 %v312
    %1862 = vmatprep.subr.mxu0 %v315
    %1863 = vmatpush1.msra.mxu0 %v314
    %1864 = vmatprep.subr.mxu0 %v317
    %1865 = vmatpush1.msra.mxu0 %v316
    %1866 = vmatprep.subr.mxu0 %v319
    %1867 = vmatpush1.msra.mxu0 %v318
    %1868 = vmatprep.subr.mxu0 %v321
    %1869 = vmatpush1.msra.mxu0 %v320
    %1870 = vmatprep.subr.mxu0 %v323
    %1871 = vmatpush1.msra.mxu0 %v322
    %1872 = vmatprep.subr.mxu0 %v325
    %1873 = vmatpush1.msra.mxu0 %v324
    %1874 = vmatprep.subr.mxu0 %v327
    %1875 = vmatpush1.msra.mxu0 %v326
    %1876 = vmatprep.subr.mxu0 %v329
    %1877 = vmatpush1.msra.mxu0 %v328
    %1878 = vmatprep.subr.mxu0 0.0
    %1879 = vmatpush1.msra.mxu0 0.0
    %1880 = vmatprep.subr.mxu0 0.0
    %1881 = vmatpush1.msra.mxu0 0.0
    %1882 = vmatprep.subr.mxu0 0.0
    %1883 = vmatpush1.msra.mxu0 0.0
    %1884 = vmatprep.subr.mxu0 0.0
    %1885 = vmatpush1.msra.mxu0 0.0
    %1886 = vmatprep.subr.mxu0 0.0
    %1887 = vmatpush1.msra.mxu0 0.0
    %1888 = vmatprep.subr.mxu0 0.0
    %1889 = vmatpush1.msra.mxu0 0.0
    %1890 = vmatprep.subr.mxu0 0.0
    %1891 = vmatpush1.msra.mxu0 0.0
    %1892 = vmatprep.subr.mxu0 0.0
    %1893 = vmatpush1.msra.mxu0 0.0
    %1894 = vmatprep.subr.mxu0 0.0
    %1895 = vmatpush1.msra.mxu0 0.0
    %1896 = vmatprep.subr.mxu0 0.0
    %1897 = vmatpush1.msra.mxu0 0.0
    %1898 = vmatprep.subr.mxu0 0.0
    %1899 = vmatpush1.msra.mxu0 0.0
    %1900 = vmatprep.subr.mxu0 0.0
    %1901 = vmatpush1.msra.mxu0 0.0
    %1902 = vmatprep.subr.mxu0 0.0
    %1903 = vmatpush1.msra.mxu0 0.0
    %1904 = vmatprep.subr.mxu0 0.0
    %1905 = vmatpush1.msra.mxu0 0.0
    %1906 = vmatprep.subr.mxu0 0.0
    %1907 = vmatpush1.msra.mxu0 0.0
    %1908 = vmatprep.subr.mxu0 0.0
    %1909 = vmatpush1.msra.mxu0 0.0
    %1910 = vmatprep.mubr.f32.mxu0 0.0
    %1911 = vmatmul.mubr.f32.gmra.mrb[0].mxu0 %v1845
    %v1912 = vpop.f32.mrb[0].mxu0
    %v1913 = vadd.f32 %v536, %v1912
    %v1914 = vpop.f32.mrb[0].mxu0
    %v1915 = vadd.f32 %v540, %v1914
    %1916 = vdwg.mxu0
    %v1917 = vxor.u32 %v1913, 2147483648
    %v1918 = vmul.f32 %v1917, 1.442695
    %v1919 = vpow.pop %v1918
    %v1920 = vadd.f32 %v1919, 1.0
    %v1921 = vrcp.pop %v1920
    %v1922 = vmul.f32 1.0, %v1921
    %v1923 = vtanh.pop %v1915
    %v1924 = vxor.u32 %v1915, 2147483648
    %v1925 = vmul.f32 %v1924, 1.442695
    %v1926 = vpow.pop %v1925
    %v1927 = vadd.f32 %v1926, 1.0
    %v1928 = vrcp.pop %v1927
    %v1929 = vmul.f32 1.0, %v1928
    %v1930 = vmul.f32 %v1922, %v1833
    %v1931 = vmul.f32 %v1922, %v1923
    %1933 = vrot.lane.b32.xlu0 %v1931, 64
    %v1934 = vpop.permute.xlu0 %1933
    %v1936 = vadd.f32 %v1930, %v1934
    %v1937 = vtanh.pop %v1936
    %v1938 = vmul.f32 %v1929, %v1937
    %1940 = vrot.lane.b32.xlu0 %v1938, 64
    %v1941 = vpop.permute.xlu0 %1940
    %1943 = vst.msk [vmem:[#allocation2 + $0x38] sm:$0xff] %vm331, %v1941
    %v1944 = vld [vmem:[#allocation2] sm:$0xff]
    %v1945 = vld [vmem:[#allocation2 + $0x8] sm:$0xff]
    %v1946 = vld [vmem:[#allocation2 + $0x10] sm:$0xff]
    %v1947 = vld [vmem:[#allocation2 + $0x18] sm:$0xff]
    %v1948 = vld [vmem:[#allocation2 + $0x20] sm:$0xff]
    %v1949 = vld [vmem:[#allocation2 + $0x28] sm:$0xff]
    %v1950 = vld [vmem:[#allocation2 + $0x30] sm:$0xff]
    %v1951 = vld [vmem:[#allocation2 + $0x38] sm:$0xff]
    %v1952 = vld [vmem:[#allocation5] sm:$0xff]
    %v1953 = vld [vmem:[#allocation5 + $0x8] sm:$0xff]
    %v1954 = vld [vmem:[#allocation5 + $0x10] sm:$0xff]
    %v1955 = vld [vmem:[#allocation5 + $0x18] sm:$0xff]
    %v1956 = vld [vmem:[#allocation5 + $0x20] sm:$0xff]
    %v1957 = vld [vmem:[#allocation5 + $0x28] sm:$0xff]
    %v1958 = vld [vmem:[#allocation5 + $0x30] sm:$0xff]
    %v1959 = vld [vmem:[#allocation5 + $0x38] sm:$0xff]
    %v1960 = vld [vmem:[#allocation5 + $0x40] sm:$0xff]
    %v1961 = vld [vmem:[#allocation5 + $0x48] sm:$0xff]
    %v1962 = vld [vmem:[#allocation5 + $0x50] sm:$0xff]
    %v1963 = vld [vmem:[#allocation5 + $0x58] sm:$0xff]
    %v1964 = vld [vmem:[#allocation5 + $0x60] sm:$0xff]
    %v1965 = vld [vmem:[#allocation5 + $0x68] sm:$0xff]
    %v1966 = vld [vmem:[#allocation5 + $0x70] sm:$0xff]
    %v1967 = vld [vmem:[#allocation5 + $0x78] sm:$0xff]
    %v1968 = vld [vmem:[#allocation7] sm:$0x3]
    %v1970 = vlaneseq
    %v1971 = vshrl.u32 %v1970, 7
    %v1972 = vsub.s32 0, %v1971
    %v1973 = vrot.slane %v1968, %v1972
    %v1974 = vlaneseq
    %v1975 = vshrl.u32 %v1974, 7
    %v1976 = vsub.s32 1, %v1975
    %v1977 = vrot.slane %v1968, %v1976
    %v1981 = vsel %vm331, %v1944, 0
    %v1984 = vsel %vm331, %v1945, 0
    %v1987 = vsel %vm331, %v1946, 0
    %v1990 = vsel %vm331, %v1947, 0
    %v1993 = vsel %vm331, %v1948, 0
    %v1996 = vsel %vm331, %v1949, 0
    %v1999 = vsel %vm331, %v1950, 0
    %v2002 = vsel %vm331, %v1951, 0
    %2004 = vmatprep.subr.mxu0 %v1953
    %2005 = vmatpush1.msra.mxu0 %v1952
    %2006 = vmatprep.subr.mxu0 %v1955
    %2007 = vmatpush1.msra.mxu0 %v1954
    %2008 = vmatprep.subr.mxu0 %v1957
    %2009 = vmatpush1.msra.mxu0 %v1956
    %2010 = vmatprep.subr.mxu0 %v1959
    %2011 = vmatpush1.msra.mxu0 %v1958
    %2012 = vmatprep.subr.mxu0 %v1961
    %2013 = vmatpush1.msra.mxu0 %v1960
    %2014 = vmatprep.subr.mxu0 %v1963
    %2015 = vmatpush1.msra.mxu0 %v1962
    %2016 = vmatprep.subr.mxu0 %v1965
    %2017 = vmatpush1.msra.mxu0 %v1964
    %2018 = vmatprep.subr.mxu0 %v1967
    %2019 = vmatpush1.msra.mxu0 %v1966
    %2020 = vmatprep.subr.mxu0 0.0
    %2021 = vmatpush1.msra.mxu0 0.0
    %2022 = vmatprep.subr.mxu0 0.0
    %2023 = vmatpush1.msra.mxu0 0.0
    %2024 = vmatprep.subr.mxu0 0.0
    %2025 = vmatpush1.msra.mxu0 0.0
    %2026 = vmatprep.subr.mxu0 0.0
    %2027 = vmatpush1.msra.mxu0 0.0
    %2028 = vmatprep.subr.mxu0 0.0
    %2029 = vmatpush1.msra.mxu0 0.0
    %2030 = vmatprep.subr.mxu0 0.0
    %2031 = vmatpush1.msra.mxu0 0.0
    %2032 = vmatprep.subr.mxu0 0.0
    %2033 = vmatpush1.msra.mxu0 0.0
    %2034 = vmatprep.subr.mxu0 0.0
    %2035 = vmatpush1.msra.mxu0 0.0
    %2036 = vmatprep.subr.mxu0 0.0
    %2037 = vmatpush1.msra.mxu0 0.0
    %2038 = vmatprep.subr.mxu0 0.0
    %2039 = vmatpush1.msra.mxu0 0.0
    %2040 = vmatprep.subr.mxu0 0.0
    %2041 = vmatpush1.msra.mxu0 0.0
    %2042 = vmatprep.subr.mxu0 0.0
    %2043 = vmatpush1.msra.mxu0 0.0
    %2044 = vmatprep.subr.mxu0 0.0
    %2045 = vmatpush1.msra.mxu0 0.0
    %2046 = vmatprep.subr.mxu0 0.0
    %2047 = vmatpush1.msra.mxu0 0.0
    %2048 = vmatprep.subr.mxu0 0.0
    %2049 = vmatpush1.msra.mxu0 0.0
    %2050 = vmatprep.subr.mxu0 0.0
    %2051 = vmatpush1.msra.mxu0 0.0
    %2052 = vmatprep.subr.mxu0 0.0
    %2053 = vmatpush1.msra.mxu0 0.0
    %2054 = vmatprep.subr.mxu0 0.0
    %2055 = vmatpush1.msra.mxu0 0.0
    %2056 = vmatprep.subr.mxu0 0.0
    %2057 = vmatpush1.msra.mxu0 0.0
    %2058 = vmatprep.subr.mxu0 0.0
    %2059 = vmatpush1.msra.mxu0 0.0
    %2060 = vmatprep.subr.mxu0 0.0
    %2061 = vmatpush1.msra.mxu0 0.0
    %2062 = vmatprep.subr.mxu0 0.0
    %2063 = vmatpush1.msra.mxu0 0.0
    %2064 = vmatprep.subr.mxu0 0.0
    %2065 = vmatpush1.msra.mxu0 0.0
    %2066 = vmatprep.subr.mxu0 0.0
    %2067 = vmatpush1.msra.mxu0 0.0
    %2068 = vmatprep.mubr.f32.mxu0 0.0
    %2069 = vmatmul.mubr.f32.gmra.mrb[0].mxu0 %v1981
    %v2070 = vpop.f32.mrb[0].mxu0
    %v2071 = vadd.f32 %v1973, %v2070
    %v2072 = vpop.f32.mrb[0].mxu0
    %v2073 = vadd.f32 %v1977, %v2072
    %2074 = vmatprep.mubr.f32.mxu0 0.0
    %2075 = vmatmul.mubr.f32.gmra.mrb[0].mxu0 %v1984
    %v2076 = vpop.f32.mrb[0].mxu0
    %v2077 = vadd.f32 %v1973, %v2076
    %v2078 = vpop.f32.mrb[0].mxu0
    %v2079 = vadd.f32 %v1977, %v2078
    %2080 = vmatprep.mubr.f32.mxu0 0.0
    %2081 = vmatmul.mubr.f32.gmra.mrb[0].mxu0 %v1987
    %v2082 = vpop.f32.mrb[0].mxu0
    %v2083 = vadd.f32 %v1973, %v2082
    %v2084 = vpop.f32.mrb[0].mxu0
    %v2085 = vadd.f32 %v1977, %v2084
    %2086 = vmatprep.mubr.f32.mxu0 0.0
    %2087 = vmatmul.mubr.f32.gmra.mrb[0].mxu0 %v1990
    %v2088 = vpop.f32.mrb[0].mxu0
    %v2089 = vadd.f32 %v1973, %v2088
    %v2090 = vpop.f32.mrb[0].mxu0
    %v2091 = vadd.f32 %v1977, %v2090
    %2092 = vmatprep.mubr.f32.mxu0 0.0
    %2093 = vmatmul.mubr.f32.gmra.mrb[0].mxu0 %v1993
    %v2094 = vpop.f32.mrb[0].mxu0
    %v2095 = vadd.f32 %v1973, %v2094
    %v2096 = vpop.f32.mrb[0].mxu0
    %v2097 = vadd.f32 %v1977, %v2096
    %2098 = vmatprep.mubr.f32.mxu0 0.0
    %2099 = vmatmul.mubr.f32.gmra.mrb[0].mxu0 %v1996
    %v2100 = vpop.f32.mrb[0].mxu0
    %v2101 = vadd.f32 %v1973, %v2100
    %v2102 = vpop.f32.mrb[0].mxu0
    %v2103 = vadd.f32 %v1977, %v2102
    %2104 = vmatprep.mubr.f32.mxu0 0.0
    %2105 = vmatmul.mubr.f32.gmra.mrb[0].mxu0 %v1999
    %v2106 = vpop.f32.mrb[0].mxu0
    %v2107 = vadd.f32 %v1973, %v2106
    %v2108 = vpop.f32.mrb[0].mxu0
    %v2109 = vadd.f32 %v1977, %v2108
    %2110 = vmatprep.mubr.f32.mxu0 0.0
    %2111 = vmatmul.mubr.f32.gmra.mrb[0].mxu0 %v2002
    %v2112 = vpop.f32.mrb[0].mxu0
    %v2113 = vadd.f32 %v1973, %v2112
    %v2114 = vpop.f32.mrb[0].mxu0
    %v2115 = vadd.f32 %v1977, %v2114
    %2116 = vdwg.mxu0
    %2125 = vrot.lane.b32.xlu0 %v2071, 64
    %v2126 = vpop.permute.xlu0 %2125
    %2127 = vrot.lane.b32.xlu0 %v2077, 64
    %v2128 = vpop.permute.xlu0 %2127
    %2129 = vrot.lane.b32.xlu0 %v2083, 64
    %v2130 = vpop.permute.xlu0 %2129
    %2131 = vrot.lane.b32.xlu0 %v2089, 64
    %v2132 = vpop.permute.xlu0 %2131
    %2133 = vrot.lane.b32.xlu0 %v2095, 64
    %v2134 = vpop.permute.xlu0 %2133
    %2135 = vrot.lane.b32.xlu0 %v2101, 64
    %v2136 = vpop.permute.xlu0 %2135
    %2137 = vrot.lane.b32.xlu0 %v2107, 64
    %v2138 = vpop.permute.xlu0 %2137
    %2139 = vrot.lane.b32.xlu0 %v2113, 64
    %v2140 = vpop.permute.xlu0 %2139
    %2149 = vxpose.xlu0.b32.start [1/16] %v2126, 128
    %2150 = vxpose.xlu0.b32.cont [2/16] %v2128, 128
    %2151 = vxpose.xlu0.b32.cont [3/16] %v2130, 128
    %2152 = vxpose.xlu0.b32.cont [4/16] %v2132, 128
    %2153 = vxpose.xlu0.b32.cont [5/16] %v2134, 128
    %2154 = vxpose.xlu0.b32.cont [6/16] %v2136, 128
    %2155 = vxpose.xlu0.b32.cont [7/16] %v2138, 128
    %2156 = vxpose.xlu0.b32.cont [8/16] %v2140, 128
    %2157 = vxpose.xlu0.b32.cont [9/16] 0.0, 128
    %2158 = vxpose.xlu0.b32.cont [10/16] 0.0, 128
    %2159 = vxpose.xlu0.b32.cont [11/16] 0.0, 128
    %2160 = vxpose.xlu0.b32.cont [12/16] 0.0, 128
    %2161 = vxpose.xlu0.b32.cont [13/16] 0.0, 128
    %2162 = vxpose.xlu0.b32.cont [14/16] 0.0, 128
    %2163 = vxpose.xlu0.b32.cont [15/16] 0.0, 128
    %2164 = vxpose.xlu0.b32.end [16/16] 0.0, 128
    %v2165 = vpop.trf.xlu0
    %v2166 = vpop.trf.xlu0
    %v2167 = vpop.trf.xlu0
    %v2168 = vpop.trf.xlu0
    %v2169 = vpop.trf.xlu0
    %v2170 = vpop.trf.xlu0
    %v2171 = vpop.trf.xlu0
    %v2172 = vpop.trf.xlu0
    %v2173 = vpop.trf.xlu0
    %v2174 = vpop.trf.xlu0
    %v2175 = vpop.trf.xlu0
    %v2176 = vpop.trf.xlu0
    %v2177 = vpop.trf.xlu0
    %v2178 = vpop.trf.xlu0
    %v2179 = vpop.trf.xlu0
    %v2180 = vpop.trf.xlu0
    %2189 = vrot.lane.b32.xlu0 %v2165, 64
    %v2190 = vpop.permute.xlu0 %2189
    %2191 = vrot.lane.b32.xlu0 %v2166, 64
    %v2192 = vpop.permute.xlu0 %2191
    %2193 = vrot.lane.b32.xlu0 %v2167, 64
    %v2194 = vpop.permute.xlu0 %2193
    %2195 = vrot.lane.b32.xlu0 %v2168, 64
    %v2196 = vpop.permute.xlu0 %2195
    %2197 = vrot.lane.b32.xlu0 %v2169, 64
    %v2198 = vpop.permute.xlu0 %2197
    %2199 = vrot.lane.b32.xlu0 %v2170, 64
    %v2200 = vpop.permute.xlu0 %2199
    %2201 = vrot.lane.b32.xlu0 %v2171, 64
    %v2202 = vpop.permute.xlu0 %2201
    %2203 = vrot.lane.b32.xlu0 %v2172, 64
    %v2204 = vpop.permute.xlu0 %2203
    %v2213 = vsel %vm331, %v2165, %v2190
    %v2214 = vsel %vm331, %v2166, %v2192
    %v2215 = vsel %vm331, %v2167, %v2194
    %v2216 = vsel %vm331, %v2168, %v2196
    %v2217 = vsel %vm331, %v2169, %v2198
    %v2218 = vsel %vm331, %v2170, %v2200
    %v2219 = vsel %vm331, %v2171, %v2202
    %v2220 = vsel %vm331, %v2172, %v2204
    %v2221 = vld [vmem:[%s3] sm:$0xff]
    %v2222 = vld [vmem:[%s3 + $0x8] sm:$0xff]
    %v2223 = vld [vmem:[%s3 + $0x10] sm:$0xff]
    %v2224 = vld [vmem:[%s3 + $0x18] sm:$0xff]
    %v2225 = vld [vmem:[%s3 + $0x20] sm:$0xff]
    %v2226 = vld [vmem:[%s3 + $0x28] sm:$0xff]
    %v2227 = vld [vmem:[%s3 + $0x30] sm:$0xff]
    %v2228 = vld [vmem:[%s3 + $0x38] sm:$0xff]
    %v2229 = vld [vmem:[%s3 + $0x40] sm:$0xff]
    %v2230 = vld [vmem:[%s3 + $0x48] sm:$0xff]
    %v2231 = vld [vmem:[%s3 + $0x50] sm:$0xff]
    %v2232 = vld [vmem:[%s3 + $0x58] sm:$0xff]
    %v2233 = vld [vmem:[%s3 + $0x60] sm:$0xff]
    %v2234 = vld [vmem:[%s3 + $0x68] sm:$0xff]
    %v2235 = vld [vmem:[%s3 + $0x70] sm:$0xff]
    %v2236 = vld [vmem:[%s3 + $0x78] sm:$0xff]
    %v2237 = vld [vmem:[%s3 + $0x80] sm:$0xff]
    %v2238 = vld [vmem:[%s3 + $0x88] sm:$0xff]
    %v2239 = vld [vmem:[%s3 + $0x90] sm:$0xff]
    %v2240 = vld [vmem:[%s3 + $0x98] sm:$0xff]
    %v2241 = vld [vmem:[%s3 + $0xa0] sm:$0xff]
    %v2242 = vld [vmem:[%s3 + $0xa8] sm:$0xff]
    %v2243 = vld [vmem:[%s3 + $0xb0] sm:$0xff]
    %v2244 = vld [vmem:[%s3 + $0xb8] sm:$0xff]
    %v2245 = vld [vmem:[%s3 + $0xc0] sm:$0xff]
    %v2246 = vld [vmem:[%s3 + $0xc8] sm:$0xff]
    %v2247 = vld [vmem:[%s3 + $0xd0] sm:$0xff]
    %v2248 = vld [vmem:[%s3 + $0xd8] sm:$0xff]
    %v2249 = vld [vmem:[%s3 + $0xe0] sm:$0xff]
    %v2250 = vld [vmem:[%s3 + $0xe8] sm:$0xff]
    %v2251 = vld [vmem:[%s3 + $0xf0] sm:$0xff]
    %v2252 = vld [vmem:[%s3 + $0xf8] sm:$0xff]
    %v2253 = vmul.f32 %v2213, %v2221
    %v2254 = vmul.f32 %v2213, %v2222
    %v2255 = vmul.f32 %v2213, %v2223
    %v2256 = vmul.f32 %v2213, %v2224
    %v2257 = vmul.f32 %v2214, %v2225
    %v2258 = vmul.f32 %v2214, %v2226
    %v2259 = vmul.f32 %v2214, %v2227
    %v2260 = vmul.f32 %v2214, %v2228
    %v2261 = vmul.f32 %v2215, %v2229
    %v2262 = vmul.f32 %v2215, %v2230
    %v2263 = vmul.f32 %v2215, %v2231
    %v2264 = vmul.f32 %v2215, %v2232
    %v2265 = vmul.f32 %v2216, %v2233
    %v2266 = vmul.f32 %v2216, %v2234
    %v2267 = vmul.f32 %v2216, %v2235
    %v2268 = vmul.f32 %v2216, %v2236
    %v2269 = vmul.f32 %v2217, %v2237
    %v2270 = vmul.f32 %v2217, %v2238
    %v2271 = vmul.f32 %v2217, %v2239
    %v2272 = vmul.f32 %v2217, %v2240
    %v2273 = vmul.f32 %v2218, %v2241
    %v2274 = vmul.f32 %v2218, %v2242
    %v2275 = vmul.f32 %v2218, %v2243
    %v2276 = vmul.f32 %v2218, %v2244
    %v2277 = vmul.f32 %v2219, %v2245
    %v2278 = vmul.f32 %v2219, %v2246
    %v2279 = vmul.f32 %v2219, %v2247
    %v2280 = vmul.f32 %v2219, %v2248
    %v2281 = vmul.f32 %v2220, %v2249
    %v2282 = vmul.f32 %v2220, %v2250
    %v2283 = vmul.f32 %v2220, %v2251
    %v2284 = vmul.f32 %v2220, %v2252
    %v2285 = vld [vmem:[%s4] sm:$0xff]
    %v2286 = vld [vmem:[%s4 + $0x8] sm:$0xff]
    %v2287 = vld [vmem:[%s4 + $0x10] sm:$0xff]
    %v2288 = vld [vmem:[%s4 + $0x18] sm:$0xff]
    %v2289 = vld [vmem:[%s4 + $0x20] sm:$0xff]
    %v2290 = vld [vmem:[%s4 + $0x28] sm:$0xff]
    %v2291 = vld [vmem:[%s4 + $0x30] sm:$0xff]
    %v2292 = vld [vmem:[%s4 + $0x38] sm:$0xff]
    %v2293 = vld [vmem:[%s4 + $0x40] sm:$0xff]
    %v2294 = vld [vmem:[%s4 + $0x48] sm:$0xff]
    %v2295 = vld [vmem:[%s4 + $0x50] sm:$0xff]
    %v2296 = vld [vmem:[%s4 + $0x58] sm:$0xff]
    %v2297 = vld [vmem:[%s4 + $0x60] sm:$0xff]
    %v2298 = vld [vmem:[%s4 + $0x68] sm:$0xff]
    %v2299 = vld [vmem:[%s4 + $0x70] sm:$0xff]
    %v2300 = vld [vmem:[%s4 + $0x78] sm:$0xff]
    %v2301 = vld [vmem:[%s4 + $0x80] sm:$0xff]
    %v2302 = vld [vmem:[%s4 + $0x88] sm:$0xff]
    %v2303 = vld [vmem:[%s4 + $0x90] sm:$0xff]
    %v2304 = vld [vmem:[%s4 + $0x98] sm:$0xff]
    %v2305 = vld [vmem:[%s4 + $0xa0] sm:$0xff]
    %v2306 = vld [vmem:[%s4 + $0xa8] sm:$0xff]
    %v2307 = vld [vmem:[%s4 + $0xb0] sm:$0xff]
    %v2308 = vld [vmem:[%s4 + $0xb8] sm:$0xff]
    %v2309 = vld [vmem:[%s4 + $0xc0] sm:$0xff]
    %v2310 = vld [vmem:[%s4 + $0xc8] sm:$0xff]
    %v2311 = vld [vmem:[%s4 + $0xd0] sm:$0xff]
    %v2312 = vld [vmem:[%s4 + $0xd8] sm:$0xff]
    %v2313 = vld [vmem:[%s4 + $0xe0] sm:$0xff]
    %v2314 = vld [vmem:[%s4 + $0xe8] sm:$0xff]
    %v2315 = vld [vmem:[%s4 + $0xf0] sm:$0xff]
    %v2316 = vld [vmem:[%s4 + $0xf8] sm:$0xff]
    %v2317 = vld [vmem:[%s4 + $0x100] sm:$0xff]
    %v2318 = vld [vmem:[%s4 + $0x108] sm:$0xff]
    %v2319 = vld [vmem:[%s4 + $0x110] sm:$0xff]
    %v2320 = vld [vmem:[%s4 + $0x118] sm:$0xff]
    %v2321 = vld [vmem:[%s4 + $0x120] sm:$0xff]
    %v2322 = vld [vmem:[%s4 + $0x128] sm:$0xff]
    %v2323 = vld [vmem:[%s4 + $0x130] sm:$0xff]
    %v2324 = vld [vmem:[%s4 + $0x138] sm:$0xff]
    %v2325 = vld [vmem:[%s4 + $0x140] sm:$0xff]
    %v2326 = vld [vmem:[%s4 + $0x148] sm:$0xff]
    %v2327 = vld [vmem:[%s4 + $0x150] sm:$0xff]
    %v2328 = vld [vmem:[%s4 + $0x158] sm:$0xff]
    %v2329 = vld [vmem:[%s4 + $0x160] sm:$0xff]
    %v2330 = vld [vmem:[%s4 + $0x168] sm:$0xff]
    %v2331 = vld [vmem:[%s4 + $0x170] sm:$0xff]
    %v2332 = vld [vmem:[%s4 + $0x178] sm:$0xff]
    %v2333 = vld [vmem:[%s4 + $0x180] sm:$0xff]
    %v2334 = vld [vmem:[%s4 + $0x188] sm:$0xff]
    %v2335 = vld [vmem:[%s4 + $0x190] sm:$0xff]
    %v2336 = vld [vmem:[%s4 + $0x198] sm:$0xff]
    %v2337 = vld [vmem:[%s4 + $0x1a0] sm:$0xff]
    %v2338 = vld [vmem:[%s4 + $0x1a8] sm:$0xff]
    %v2339 = vld [vmem:[%s4 + $0x1b0] sm:$0xff]
    %v2340 = vld [vmem:[%s4 + $0x1b8] sm:$0xff]
    %v2341 = vld [vmem:[%s4 + $0x1c0] sm:$0xff]
    %v2342 = vld [vmem:[%s4 + $0x1c8] sm:$0xff]
    %v2343 = vld [vmem:[%s4 + $0x1d0] sm:$0xff]
    %v2344 = vld [vmem:[%s4 + $0x1d8] sm:$0xff]
    %v2345 = vld [vmem:[%s4 + $0x1e0] sm:$0xff]
    %v2346 = vld [vmem:[%s4 + $0x1e8] sm:$0xff]
    %v2347 = vld [vmem:[%s4 + $0x1f0] sm:$0xff]
    %v2348 = vld [vmem:[%s4 + $0x1f8] sm:$0xff]
    %v2349 = vmul.f32 %v2073, %v2285
    %v2350 = vmul.f32 %v2079, %v2286
    %v2351 = vmul.f32 %v2085, %v2287
    %v2352 = vmul.f32 %v2091, %v2288
    %v2353 = vmul.f32 %v2097, %v2289
    %v2354 = vmul.f32 %v2103, %v2290
    %v2355 = vmul.f32 %v2109, %v2291
    %v2356 = vmul.f32 %v2115, %v2292
    %v2357 = vmul.f32 %v2073, %v2293
    %v2358 = vmul.f32 %v2079, %v2294
    %v2359 = vmul.f32 %v2085, %v2295
    %v2360 = vmul.f32 %v2091, %v2296
    %v2361 = vmul.f32 %v2097, %v2297
    %v2362 = vmul.f32 %v2103, %v2298
    %v2363 = vmul.f32 %v2109, %v2299
    %v2364 = vmul.f32 %v2115, %v2300
    %v2365 = vmul.f32 %v2073, %v2301
    %v2366 = vmul.f32 %v2079, %v2302
    %v2367 = vmul.f32 %v2085, %v2303
    %v2368 = vmul.f32 %v2091, %v2304
    %v2369 = vmul.f32 %v2097, %v2305
    %v2370 = vmul.f32 %v2103, %v2306
    %v2371 = vmul.f32 %v2109, %v2307
    %v2372 = vmul.f32 %v2115, %v2308
    %v2373 = vmul.f32 %v2073, %v2309
    %v2374 = vmul.f32 %v2079, %v2310
    %v2375 = vmul.f32 %v2085, %v2311
    %v2376 = vmul.f32 %v2091, %v2312
    %v2377 = vmul.f32 %v2097, %v2313
    %v2378 = vmul.f32 %v2103, %v2314
    %v2379 = vmul.f32 %v2109, %v2315
    %v2380 = vmul.f32 %v2115, %v2316
    %v2381 = vmul.f32 %v2073, %v2317
    %v2382 = vmul.f32 %v2079, %v2318
    %v2383 = vmul.f32 %v2085, %v2319
    %v2384 = vmul.f32 %v2091, %v2320
    %v2385 = vmul.f32 %v2097, %v2321
    %v2386 = vmul.f32 %v2103, %v2322
    %v2387 = vmul.f32 %v2109, %v2323
    %v2388 = vmul.f32 %v2115, %v2324
    %v2389 = vmul.f32 %v2073, %v2325
    %v2390 = vmul.f32 %v2079, %v2326
    %v2391 = vmul.f32 %v2085, %v2327
    %v2392 = vmul.f32 %v2091, %v2328
    %v2393 = vmul.f32 %v2097, %v2329
    %v2394 = vmul.f32 %v2103, %v2330
    %v2395 = vmul.f32 %v2109, %v2331
    %v2396 = vmul.f32 %v2115, %v2332
    %v2397 = vmul.f32 %v2073, %v2333
    %v2398 = vmul.f32 %v2079, %v2334
    %v2399 = vmul.f32 %v2085, %v2335
    %v2400 = vmul.f32 %v2091, %v2336
    %v2401 = vmul.f32 %v2097, %v2337
    %v2402 = vmul.f32 %v2103, %v2338
    %v2403 = vmul.f32 %v2109, %v2339
    %v2404 = vmul.f32 %v2115, %v2340
    %v2405 = vmul.f32 %v2073, %v2341
    %v2406 = vmul.f32 %v2079, %v2342
    %v2407 = vmul.f32 %v2085, %v2343
    %v2408 = vmul.f32 %v2091, %v2344
    %v2409 = vmul.f32 %v2097, %v2345
    %v2410 = vmul.f32 %v2103, %v2346
    %v2411 = vmul.f32 %v2109, %v2347
    %v2412 = vmul.f32 %v2115, %v2348
    %v2413 = vsel %vm331, %v2071, 0
    %v2415 = vsel %vm331, %v2077, 0
    %v2417 = vsel %vm331, %v2083, 0
    %v2419 = vsel %vm331, %v2089, 0
    %v2421 = vsel %vm331, %v2095, 0
    %v2423 = vsel %vm331, %v2101, 0
    %v2425 = vsel %vm331, %v2107, 0
    %v2427 = vsel %vm331, %v2113, 0
    %2429 = vmatprep.subr.mxu0 %v2254
    %2430 = vmatpush1.msra.mxu0 %v2253
    %2431 = vmatprep.subr.mxu0 %v2258
    %2432 = vmatpush1.msra.mxu0 %v2257
    %2433 = vmatprep.subr.mxu0 %v2262
    %2434 = vmatpush1.msra.mxu0 %v2261
    %2435 = vmatprep.subr.mxu0 %v2266
    %2436 = vmatpush1.msra.mxu0 %v2265
    %2437 = vmatprep.subr.mxu0 %v2270
    %2438 = vmatpush1.msra.mxu0 %v2269
    %2439 = vmatprep.subr.mxu0 %v2274
    %2440 = vmatpush1.msra.mxu0 %v2273
    %2441 = vmatprep.subr.mxu0 %v2278
    %2442 = vmatpush1.msra.mxu0 %v2277
    %2443 = vmatprep.subr.mxu0 %v2282
    %2444 = vmatpush1.msra.mxu0 %v2281
    %2445 = vmatprep.subr.mxu0 0.0
    %2446 = vmatpush1.msra.mxu0 0.0
    %2447 = vmatprep.subr.mxu0 0.0
    %2448 = vmatpush1.msra.mxu0 0.0
    %2449 = vmatprep.subr.mxu0 0.0
    %2450 = vmatpush1.msra.mxu0 0.0
    %2451 = vmatprep.subr.mxu0 0.0
    %2452 = vmatpush1.msra.mxu0 0.0
    %2453 = vmatprep.subr.mxu0 0.0
    %2454 = vmatpush1.msra.mxu0 0.0
    %2455 = vmatprep.subr.mxu0 0.0
    %2456 = vmatpush1.msra.mxu0 0.0
    %2457 = vmatprep.subr.mxu0 0.0
    %2458 = vmatpush1.msra.mxu0 0.0
    %2459 = vmatprep.subr.mxu0 0.0
    %2460 = vmatpush1.msra.mxu0 0.0
    %2461 = vmatprep.subr.mxu0 0.0
    %2462 = vmatpush1.msra.mxu0 0.0
    %2463 = vmatprep.subr.mxu0 0.0
    %2464 = vmatpush1.msra.mxu0 0.0
    %2465 = vmatprep.subr.mxu0 0.0
    %2466 = vmatpush1.msra.mxu0 0.0
    %2467 = vmatprep.subr.mxu0 0.0
    %2468 = vmatpush1.msra.mxu0 0.0
    %2469 = vmatprep.subr.mxu0 0.0
    %2470 = vmatpush1.msra.mxu0 0.0
    %2471 = vmatprep.subr.mxu0 0.0
    %2472 = vmatpush1.msra.mxu0 0.0
    %2473 = vmatprep.subr.mxu0 0.0
    %2474 = vmatpush1.msra.mxu0 0.0
    %2475 = vmatprep.subr.mxu0 0.0
    %2476 = vmatpush1.msra.mxu0 0.0
    %2477 = vmatprep.subr.mxu0 0.0
    %2478 = vmatpush1.msra.mxu0 0.0
    %2479 = vmatprep.subr.mxu0 0.0
    %2480 = vmatpush1.msra.mxu0 0.0
    %2481 = vmatprep.subr.mxu0 0.0
    %2482 = vmatpush1.msra.mxu0 0.0
    %2483 = vmatprep.subr.mxu0 0.0
    %2484 = vmatpush1.msra.mxu0 0.0
    %2485 = vmatprep.subr.mxu0 0.0
    %2486 = vmatpush1.msra.mxu0 0.0
    %2487 = vmatprep.subr.mxu0 0.0
    %2488 = vmatpush1.msra.mxu0 0.0
    %2489 = vmatprep.subr.mxu0 0.0
    %2490 = vmatpush1.msra.mxu0 0.0
    %2491 = vmatprep.subr.mxu0 0.0
    %2492 = vmatpush1.msra.mxu0 0.0
    %2493 = vmatprep.mubr.f32.mxu0 0.0
    %2494 = vmatmul.mubr.f32.gmra.mrb[0].mxu0 %v2413
    %v2495 = vpop.f32.mrb[0].mxu0
    %v2496 = vadd.f32 0.0, %v2495
    %v2497 = vpop.f32.mrb[0].mxu0
    %v2498 = vadd.f32 0.0, %v2497
    %2499 = vmatprep.mubr.f32.mxu0 0.0
    %2500 = vmatmul.mubr.f32.gmra.mrb[0].mxu0 %v2415
    %v2501 = vpop.f32.mrb[0].mxu0
    %v2502 = vadd.f32 0.0, %v2501
    %v2503 = vpop.f32.mrb[0].mxu0
    %v2504 = vadd.f32 0.0, %v2503
    %2505 = vmatprep.mubr.f32.mxu0 0.0
    %2506 = vmatmul.mubr.f32.gmra.mrb[0].mxu0 %v2417
    %v2507 = vpop.f32.mrb[0].mxu0
    %v2508 = vadd.f32 0.0, %v2507
    %v2509 = vpop.f32.mrb[0].mxu0
    %v2510 = vadd.f32 0.0, %v2509
    %2511 = vmatprep.mubr.f32.mxu0 0.0
    %2512 = vmatmul.mubr.f32.gmra.mrb[0].mxu0 %v2419
    %v2513 = vpop.f32.mrb[0].mxu0
    %v2514 = vadd.f32 0.0, %v2513
    %v2515 = vpop.f32.mrb[0].mxu0
    %v2516 = vadd.f32 0.0, %v2515
    %2517 = vmatprep.mubr.f32.mxu0 0.0
    %2518 = vmatmul.mubr.f32.gmra.mrb[0].mxu0 %v2421
    %v2519 = vpop.f32.mrb[0].mxu0
    %v2520 = vadd.f32 0.0, %v2519
    %v2521 = vpop.f32.mrb[0].mxu0
    %v2522 = vadd.f32 0.0, %v2521
    %2523 = vmatprep.mubr.f32.mxu0 0.0
    %2524 = vmatmul.mubr.f32.gmra.mrb[0].mxu0 %v2423
    %v2525 = vpop.f32.mrb[0].mxu0
    %v2526 = vadd.f32 0.0, %v2525
    %v2527 = vpop.f32.mrb[0].mxu0
    %v2528 = vadd.f32 0.0, %v2527
    %2529 = vmatprep.mubr.f32.mxu0 0.0
    %2530 = vmatmul.mubr.f32.gmra.mrb[0].mxu0 %v2425
    %v2531 = vpop.f32.mrb[0].mxu0
    %v2532 = vadd.f32 0.0, %v2531
    %v2533 = vpop.f32.mrb[0].mxu0
    %v2534 = vadd.f32 0.0, %v2533
    %2535 = vmatprep.mubr.f32.mxu0 0.0
    %2536 = vmatmul.mubr.f32.gmra.mrb[0].mxu0 %v2427
    %v2537 = vpop.f32.mrb[0].mxu0
    %v2538 = vadd.f32 0.0, %v2537
    %v2539 = vpop.f32.mrb[0].mxu0
    %v2540 = vadd.f32 0.0, %v2539
    %2541 = vdwg.mxu0
    %2542 = vmatprep.subr.mxu0 %v2256
    %2543 = vmatpush1.msra.mxu0 %v2255
    %2544 = vmatprep.subr.mxu0 %v2260
    %2545 = vmatpush1.msra.mxu0 %v2259
    %2546 = vmatprep.subr.mxu0 %v2264
    %2547 = vmatpush1.msra.mxu0 %v2263
    %2548 = vmatprep.subr.mxu0 %v2268
    %2549 = vmatpush1.msra.mxu0 %v2267
    %2550 = vmatprep.subr.mxu0 %v2272
    %2551 = vmatpush1.msra.mxu0 %v2271
    %2552 = vmatprep.subr.mxu0 %v2276
    %2553 = vmatpush1.msra.mxu0 %v2275
    %2554 = vmatprep.subr.mxu0 %v2280
    %2555 = vmatpush1.msra.mxu0 %v2279
    %2556 = vmatprep.subr.mxu0 %v2284
    %2557 = vmatpush1.msra.mxu0 %v2283
    %2558 = vmatprep.subr.mxu0 0.0
    %2559 = vmatpush1.msra.mxu0 0.0
    %2560 = vmatprep.subr.mxu0 0.0
    %2561 = vmatpush1.msra.mxu0 0.0
    %2562 = vmatprep.subr.mxu0 0.0
    %2563 = vmatpush1.msra.mxu0 0.0
    %2564 = vmatprep.subr.mxu0 0.0
    %2565 = vmatpush1.msra.mxu0 0.0
    %2566 = vmatprep.subr.mxu0 0.0
    %2567 = vmatpush1.msra.mxu0 0.0
    %2568 = vmatprep.subr.mxu0 0.0
    %2569 = vmatpush1.msra.mxu0 0.0
    %2570 = vmatprep.subr.mxu0 0.0
    %2571 = vmatpush1.msra.mxu0 0.0
    %2572 = vmatprep.subr.mxu0 0.0
    %2573 = vmatpush1.msra.mxu0 0.0
    %2574 = vmatprep.subr.mxu0 0.0
    %2575 = vmatpush1.msra.mxu0 0.0
    %2576 = vmatprep.subr.mxu0 0.0
    %2577 = vmatpush1.msra.mxu0 0.0
    %2578 = vmatprep.subr.mxu0 0.0
    %2579 = vmatpush1.msra.mxu0 0.0
    %2580 = vmatprep.subr.mxu0 0.0
    %2581 = vmatpush1.msra.mxu0 0.0
    %2582 = vmatprep.subr.mxu0 0.0
    %2583 = vmatpush1.msra.mxu0 0.0
    %2584 = vmatprep.subr.mxu0 0.0
    %2585 = vmatpush1.msra.mxu0 0.0
    %2586 = vmatprep.subr.mxu0 0.0
    %2587 = vmatpush1.msra.mxu0 0.0
    %2588 = vmatprep.subr.mxu0 0.0
    %2589 = vmatpush1.msra.mxu0 0.0
    %2590 = vmatprep.subr.mxu0 0.0
    %2591 = vmatpush1.msra.mxu0 0.0
    %2592 = vmatprep.subr.mxu0 0.0
    %2593 = vmatpush1.msra.mxu0 0.0
    %2594 = vmatprep.subr.mxu0 0.0
    %2595 = vmatpush1.msra.mxu0 0.0
    %2596 = vmatprep.subr.mxu0 0.0
    %2597 = vmatpush1.msra.mxu0 0.0
    %2598 = vmatprep.subr.mxu0 0.0
    %2599 = vmatpush1.msra.mxu0 0.0
    %2600 = vmatprep.subr.mxu0 0.0
    %2601 = vmatpush1.msra.mxu0 0.0
    %2602 = vmatprep.subr.mxu0 0.0
    %2603 = vmatpush1.msra.mxu0 0.0
    %2604 = vmatprep.subr.mxu0 0.0
    %2605 = vmatpush1.msra.mxu0 0.0
    %2606 = vmatprep.mubr.f32.mxu0 0.0
    %2607 = vmatmul.mubr.f32.gmra.mrb[0].mxu0 %v2413
    %v2608 = vpop.f32.mrb[0].mxu0
    %v2609 = vadd.f32 0.0, %v2608
    %v2610 = vpop.f32.mrb[0].mxu0
    %v2611 = vadd.f32 0.0, %v2610
    %2612 = vmatprep.mubr.f32.mxu0 0.0
    %2613 = vmatmul.mubr.f32.gmra.mrb[0].mxu0 %v2415
    %v2614 = vpop.f32.mrb[0].mxu0
    %v2615 = vadd.f32 0.0, %v2614
    %v2616 = vpop.f32.mrb[0].mxu0
    %v2617 = vadd.f32 0.0, %v2616
    %2618 = vmatprep.mubr.f32.mxu0 0.0
    %2619 = vmatmul.mubr.f32.gmra.mrb[0].mxu0 %v2417
    %v2620 = vpop.f32.mrb[0].mxu0
    %v2621 = vadd.f32 0.0, %v2620
    %v2622 = vpop.f32.mrb[0].mxu0
    %v2623 = vadd.f32 0.0, %v2622
    %2624 = vmatprep.mubr.f32.mxu0 0.0
    %2625 = vmatmul.mubr.f32.gmra.mrb[0].mxu0 %v2419
    %v2626 = vpop.f32.mrb[0].mxu0
    %v2627 = vadd.f32 0.0, %v2626
    %v2628 = vpop.f32.mrb[0].mxu0
    %v2629 = vadd.f32 0.0, %v2628
    %2630 = vmatprep.mubr.f32.mxu0 0.0
    %2631 = vmatmul.mubr.f32.gmra.mrb[0].mxu0 %v2421
    %v2632 = vpop.f32.mrb[0].mxu0
    %v2633 = vadd.f32 0.0, %v2632
    %v2634 = vpop.f32.mrb[0].mxu0
    %v2635 = vadd.f32 0.0, %v2634
    %2636 = vmatprep.mubr.f32.mxu0 0.0
    %2637 = vmatmul.mubr.f32.gmra.mrb[0].mxu0 %v2423
    %v2638 = vpop.f32.mrb[0].mxu0
    %v2639 = vadd.f32 0.0, %v2638
    %v2640 = vpop.f32.mrb[0].mxu0
    %v2641 = vadd.f32 0.0, %v2640
    %2642 = vmatprep.mubr.f32.mxu0 0.0
    %2643 = vmatmul.mubr.f32.gmra.mrb[0].mxu0 %v2425
    %v2644 = vpop.f32.mrb[0].mxu0
    %v2645 = vadd.f32 0.0, %v2644
    %v2646 = vpop.f32.mrb[0].mxu0
    %v2647 = vadd.f32 0.0, %v2646
    %2648 = vmatprep.mubr.f32.mxu0 0.0
    %2649 = vmatmul.mubr.f32.gmra.mrb[0].mxu0 %v2427
    %v2650 = vpop.f32.mrb[0].mxu0
    %v2651 = vadd.f32 0.0, %v2650
    %v2652 = vpop.f32.mrb[0].mxu0
    %v2653 = vadd.f32 0.0, %v2652
    %2654 = vdwg.mxu0
    %v2655 = vmul.f32 %v2496, 0.35355338
    %v2656 = vmul.f32 %v2498, 0.35355338
    %v2657 = vmul.f32 %v2609, 0.35355338
    %v2658 = vmul.f32 %v2611, 0.35355338
    %v2659 = vmul.f32 %v2502, 0.35355338
    %v2660 = vmul.f32 %v2504, 0.35355338
    %v2661 = vmul.f32 %v2615, 0.35355338
    %v2662 = vmul.f32 %v2617, 0.35355338
    %v2663 = vmul.f32 %v2508, 0.35355338
    %v2664 = vmul.f32 %v2510, 0.35355338
    %v2665 = vmul.f32 %v2621, 0.35355338
    %v2666 = vmul.f32 %v2623, 0.35355338
    %v2667 = vmul.f32 %v2514, 0.35355338
    %v2668 = vmul.f32 %v2516, 0.35355338
    %v2669 = vmul.f32 %v2627, 0.35355338
    %v2670 = vmul.f32 %v2629, 0.35355338
    %v2671 = vmul.f32 %v2520, 0.35355338
    %v2672 = vmul.f32 %v2522, 0.35355338
    %v2673 = vmul.f32 %v2633, 0.35355338
    %v2674 = vmul.f32 %v2635, 0.35355338
    %v2675 = vmul.f32 %v2526, 0.35355338
    %v2676 = vmul.f32 %v2528, 0.35355338
    %v2677 = vmul.f32 %v2639, 0.35355338
    %v2678 = vmul.f32 %v2641, 0.35355338
    %v2679 = vmul.f32 %v2532, 0.35355338
    %v2680 = vmul.f32 %v2534, 0.35355338
    %v2681 = vmul.f32 %v2645, 0.35355338
    %v2682 = vmul.f32 %v2647, 0.35355338
    %v2683 = vmul.f32 %v2538, 0.35355338
    %v2684 = vmul.f32 %v2540, 0.35355338
    %v2685 = vmul.f32 %v2651, 0.35355338
    %v2686 = vmul.f32 %v2653, 0.35355338
    %v2687 = vld [vmem:[#allocation3] sm:$0xff]
    %v2688 = vld [vmem:[#allocation3 + $0x8] sm:$0xff]
    %v2689 = vld [vmem:[#allocation3 + $0x10] sm:$0xff]
    %v2690 = vld [vmem:[#allocation3 + $0x18] sm:$0xff]
    %v2691 = vld [vmem:[#allocation3 + $0x20] sm:$0xff]
    %v2692 = vld [vmem:[#allocation3 + $0x28] sm:$0xff]
    %v2693 = vld [vmem:[#allocation3 + $0x30] sm:$0xff]
    %v2694 = vld [vmem:[#allocation3 + $0x38] sm:$0xff]
    %v2695 = vld [vmem:[#allocation3 + $0x40] sm:$0xff]
    %v2696 = vld [vmem:[#allocation3 + $0x48] sm:$0xff]
    %v2697 = vld [vmem:[#allocation3 + $0x50] sm:$0xff]
    %v2698 = vld [vmem:[#allocation3 + $0x58] sm:$0xff]
    %v2699 = vld [vmem:[#allocation3 + $0x60] sm:$0xff]
    %v2700 = vld [vmem:[#allocation3 + $0x68] sm:$0xff]
    %v2701 = vld [vmem:[#allocation3 + $0x70] sm:$0xff]
    %v2702 = vld [vmem:[#allocation3 + $0x78] sm:$0xff]
    %v2703 = vld [vmem:[#allocation3 + $0x80] sm:$0xff]
    %v2704 = vld [vmem:[#allocation3 + $0x88] sm:$0xff]
    %v2705 = vld [vmem:[#allocation3 + $0x90] sm:$0xff]
    %v2706 = vld [vmem:[#allocation3 + $0x98] sm:$0xff]
    %v2707 = vld [vmem:[#allocation3 + $0xa0] sm:$0xff]
    %v2708 = vld [vmem:[#allocation3 + $0xa8] sm:$0xff]
    %v2709 = vld [vmem:[#allocation3 + $0xb0] sm:$0xff]
    %v2710 = vld [vmem:[#allocation3 + $0xb8] sm:$0xff]
    %v2711 = vld [vmem:[#allocation3 + $0xc0] sm:$0xff]
    %v2712 = vld [vmem:[#allocation3 + $0xc8] sm:$0xff]
    %v2713 = vld [vmem:[#allocation3 + $0xd0] sm:$0xff]
    %v2714 = vld [vmem:[#allocation3 + $0xd8] sm:$0xff]
    %v2715 = vld [vmem:[#allocation3 + $0xe0] sm:$0xff]
    %v2716 = vld [vmem:[#allocation3 + $0xe8] sm:$0xff]
    %v2717 = vld [vmem:[#allocation3 + $0xf0] sm:$0xff]
    %v2718 = vld [vmem:[#allocation3 + $0xf8] sm:$0xff]
    %v2719 = vadd.f32 %v2655, %v2687
    %v2720 = vadd.f32 %v2656, %v2688
    %v2721 = vadd.f32 %v2657, %v2689
    %v2722 = vadd.f32 %v2658, %v2690
    %v2723 = vadd.f32 %v2659, %v2691
    %v2724 = vadd.f32 %v2660, %v2692
    %v2725 = vadd.f32 %v2661, %v2693
    %v2726 = vadd.f32 %v2662, %v2694
    %v2727 = vadd.f32 %v2663, %v2695
    %v2728 = vadd.f32 %v2664, %v2696
    %v2729 = vadd.f32 %v2665, %v2697
    %v2730 = vadd.f32 %v2666, %v2698
    %v2731 = vadd.f32 %v2667, %v2699
    %v2732 = vadd.f32 %v2668, %v2700
    %v2733 = vadd.f32 %v2669, %v2701
    %v2734 = vadd.f32 %v2670, %v2702
    %v2735 = vadd.f32 %v2671, %v2703
    %v2736 = vadd.f32 %v2672, %v2704
    %v2737 = vadd.f32 %v2673, %v2705
    %v2738 = vadd.f32 %v2674, %v2706
    %v2739 = vadd.f32 %v2675, %v2707
    %v2740 = vadd.f32 %v2676, %v2708
    %v2741 = vadd.f32 %v2677, %v2709
    %v2742 = vadd.f32 %v2678, %v2710
    %v2743 = vadd.f32 %v2679, %v2711
    %v2744 = vadd.f32 %v2680, %v2712
    %v2745 = vadd.f32 %v2681, %v2713
    %v2746 = vadd.f32 %v2682, %v2714
    %v2747 = vadd.f32 %v2683, %v2715
    %v2748 = vadd.f32 %v2684, %v2716
    %v2749 = vadd.f32 %v2685, %v2717
    %v2750 = vadd.f32 %v2686, %v2718
    %v2751 = vld [vmem:[%s1] sm:$0xf]
    %v2753 = vlaneseq
    %v2754 = vshrl.u32 %v2753, 7
    %v2755 = vsub.s32 0, %v2754
    %v2756 = vrot.slane %v2751, %v2755
    %v2757 = vlaneseq
    %v2758 = vshrl.u32 %v2757, 7
    %v2759 = vsub.s32 1, %v2758
    %v2760 = vrot.slane %v2751, %v2759
    %v2761 = vlaneseq
    %v2762 = vshrl.u32 %v2761, 7
    %v2763 = vsub.s32 2, %v2762
    %v2764 = vrot.slane %v2751, %v2763
    %v2765 = vlaneseq
    %v2766 = vshrl.u32 %v2765, 7
    %v2767 = vsub.s32 3, %v2766
    %v2768 = vrot.slane %v2751, %v2767
    %v2773 = vadd.f32 %v2719, %v2756
    %v2774 = vadd.f32 %v2720, %v2760
    %v2775 = vadd.f32 %v2721, %v2764
    %v2776 = vadd.f32 %v2722, %v2768
    %v2777 = vadd.f32 %v2723, %v2756
    %v2778 = vadd.f32 %v2724, %v2760
    %v2779 = vadd.f32 %v2725, %v2764
    %v2780 = vadd.f32 %v2726, %v2768
    %v2781 = vadd.f32 %v2727, %v2756
    %v2782 = vadd.f32 %v2728, %v2760
    %v2783 = vadd.f32 %v2729, %v2764
    %v2784 = vadd.f32 %v2730, %v2768
    %v2785 = vadd.f32 %v2731, %v2756
    %v2786 = vadd.f32 %v2732, %v2760
    %v2787 = vadd.f32 %v2733, %v2764
    %v2788 = vadd.f32 %v2734, %v2768
    %v2789 = vadd.f32 %v2735, %v2756
    %v2790 = vadd.f32 %v2736, %v2760
    %v2791 = vadd.f32 %v2737, %v2764
    %v2792 = vadd.f32 %v2738, %v2768
    %v2793 = vadd.f32 %v2739, %v2756
    %v2794 = vadd.f32 %v2740, %v2760
    %v2795 = vadd.f32 %v2741, %v2764
    %v2796 = vadd.f32 %v2742, %v2768
    %v2797 = vadd.f32 %v2743, %v2756
    %v2798 = vadd.f32 %v2744, %v2760
    %v2799 = vadd.f32 %v2745, %v2764
    %v2800 = vadd.f32 %v2746, %v2768
    %v2801 = vadd.f32 %v2747, %v2756
    %v2802 = vadd.f32 %v2748, %v2760
    %v2803 = vadd.f32 %v2749, %v2764
    %v2804 = vadd.f32 %v2750, %v2768
    %v2805 = vmax.f32 %v2773, %v2774
    %v2806 = vmax.f32 %v2805, %v2775
    %v2807 = vmax.f32 %v2806, %v2776
    %2808 = vmax.xlane.f32.xlu0 %v2807
    %v2809 = vpop.xlane.xlu0 %2808
    %v2810 = vmax.f32 %v2777, %v2778
    %v2811 = vmax.f32 %v2810, %v2779
    %v2812 = vmax.f32 %v2811, %v2780
    %2813 = vmax.xlane.f32.xlu0 %v2812
    %v2814 = vpop.xlane.xlu0 %2813
    %v2815 = vmax.f32 %v2781, %v2782
    %v2816 = vmax.f32 %v2815, %v2783
    %v2817 = vmax.f32 %v2816, %v2784
    %2818 = vmax.xlane.f32.xlu0 %v2817
    %v2819 = vpop.xlane.xlu0 %2818
    %v2820 = vmax.f32 %v2785, %v2786
    %v2821 = vmax.f32 %v2820, %v2787
    %v2822 = vmax.f32 %v2821, %v2788
    %2823 = vmax.xlane.f32.xlu0 %v2822
    %v2824 = vpop.xlane.xlu0 %2823
    %v2825 = vmax.f32 %v2789, %v2790
    %v2826 = vmax.f32 %v2825, %v2791
    %v2827 = vmax.f32 %v2826, %v2792
    %2828 = vmax.xlane.f32.xlu0 %v2827
    %v2829 = vpop.xlane.xlu0 %2828
    %v2830 = vmax.f32 %v2793, %v2794
    %v2831 = vmax.f32 %v2830, %v2795
    %v2832 = vmax.f32 %v2831, %v2796
    %2833 = vmax.xlane.f32.xlu0 %v2832
    %v2834 = vpop.xlane.xlu0 %2833
    %v2835 = vmax.f32 %v2797, %v2798
    %v2836 = vmax.f32 %v2835, %v2799
    %v2837 = vmax.f32 %v2836, %v2800
    %2838 = vmax.xlane.f32.xlu0 %v2837
    %v2839 = vpop.xlane.xlu0 %2838
    %v2840 = vmax.f32 %v2801, %v2802
    %v2841 = vmax.f32 %v2840, %v2803
    %v2842 = vmax.f32 %v2841, %v2804
    %2843 = vmax.xlane.f32.xlu0 %v2842
    %v2844 = vpop.xlane.xlu0 %2843
    %v2845 = vsub.f32 %v2773, %v2809
    %v2846 = vsub.f32 %v2774, %v2809
    %v2847 = vsub.f32 %v2775, %v2809
    %v2848 = vsub.f32 %v2776, %v2809
    %v2849 = vsub.f32 %v2777, %v2814
    %v2850 = vsub.f32 %v2778, %v2814
    %v2851 = vsub.f32 %v2779, %v2814
    %v2852 = vsub.f32 %v2780, %v2814
    %v2853 = vsub.f32 %v2781, %v2819
    %v2854 = vsub.f32 %v2782, %v2819
    %v2855 = vsub.f32 %v2783, %v2819
    %v2856 = vsub.f32 %v2784, %v2819
    %v2857 = vsub.f32 %v2785, %v2824
    %v2858 = vsub.f32 %v2786, %v2824
    %v2859 = vsub.f32 %v2787, %v2824
    %v2860 = vsub.f32 %v2788, %v2824
    %v2861 = vsub.f32 %v2789, %v2829
    %v2862 = vsub.f32 %v2790, %v2829
    %v2863 = vsub.f32 %v2791, %v2829
    %v2864 = vsub.f32 %v2792, %v2829
    %v2865 = vsub.f32 %v2793, %v2834
    %v2866 = vsub.f32 %v2794, %v2834
    %v2867 = vsub.f32 %v2795, %v2834
    %v2868 = vsub.f32 %v2796, %v2834
    %v2869 = vsub.f32 %v2797, %v2839
    %v2870 = vsub.f32 %v2798, %v2839
    %v2871 = vsub.f32 %v2799, %v2839
    %v2872 = vsub.f32 %v2800, %v2839
    %v2873 = vsub.f32 %v2801, %v2844
    %v2874 = vsub.f32 %v2802, %v2844
    %v2875 = vsub.f32 %v2803, %v2844
    %v2876 = vsub.f32 %v2804, %v2844
    %v2877 = vmul.f32 %v2845, 1.442695
    %v2878 = vpow.pop %v2877
    %v2879 = vmul.f32 %v2846, 1.442695
    %v2880 = vpow.pop %v2879
    %v2881 = vmul.f32 %v2847, 1.442695
    %v2882 = vpow.pop %v2881
    %v2883 = vmul.f32 %v2848, 1.442695
    %v2884 = vpow.pop %v2883
    %v2885 = vmul.f32 %v2849, 1.442695
    %v2886 = vpow.pop %v2885
    %v2887 = vmul.f32 %v2850, 1.442695
    %v2888 = vpow.pop %v2887
    %v2889 = vmul.f32 %v2851, 1.442695
    %v2890 = vpow.pop %v2889
    %v2891 = vmul.f32 %v2852, 1.442695
    %v2892 = vpow.pop %v2891
    %v2893 = vmul.f32 %v2853, 1.442695
    %v2894 = vpow.pop %v2893
    %v2895 = vmul.f32 %v2854, 1.442695
    %v2896 = vpow.pop %v2895
    %v2897 = vmul.f32 %v2855, 1.442695
    %v2898 = vpow.pop %v2897
    %v2899 = vmul.f32 %v2856, 1.442695
    %v2900 = vpow.pop %v2899
    %v2901 = vmul.f32 %v2857, 1.442695
    %v2902 = vpow.pop %v2901
    %v2903 = vmul.f32 %v2858, 1.442695
    %v2904 = vpow.pop %v2903
    %v2905 = vmul.f32 %v2859, 1.442695
    %v2906 = vpow.pop %v2905
    %v2907 = vmul.f32 %v2860, 1.442695
    %v2908 = vpow.pop %v2907
    %v2909 = vmul.f32 %v2861, 1.442695
    %v2910 = vpow.pop %v2909
    %v2911 = vmul.f32 %v2862, 1.442695
    %v2912 = vpow.pop %v2911
    %v2913 = vmul.f32 %v2863, 1.442695
    %v2914 = vpow.pop %v2913
    %v2915 = vmul.f32 %v2864, 1.442695
    %v2916 = vpow.pop %v2915
    %v2917 = vmul.f32 %v2865, 1.442695
    %v2918 = vpow.pop %v2917
    %v2919 = vmul.f32 %v2866, 1.442695
    %v2920 = vpow.pop %v2919
    %v2921 = vmul.f32 %v2867, 1.442695
    %v2922 = vpow.pop %v2921
    %v2923 = vmul.f32 %v2868, 1.442695
    %v2924 = vpow.pop %v2923
    %v2925 = vmul.f32 %v2869, 1.442695
    %v2926 = vpow.pop %v2925
    %v2927 = vmul.f32 %v2870, 1.442695
    %v2928 = vpow.pop %v2927
    %v2929 = vmul.f32 %v2871, 1.442695
    %v2930 = vpow.pop %v2929
    %v2931 = vmul.f32 %v2872, 1.442695
    %v2932 = vpow.pop %v2931
    %v2933 = vmul.f32 %v2873, 1.442695
    %v2934 = vpow.pop %v2933
    %v2935 = vmul.f32 %v2874, 1.442695
    %v2936 = vpow.pop %v2935
    %v2937 = vmul.f32 %v2875, 1.442695
    %v2938 = vpow.pop %v2937
    %v2939 = vmul.f32 %v2876, 1.442695
    %v2940 = vpow.pop %v2939
    %v2941 = vld [vmem:[%s5] sm:$0xff]
    %v2942 = vld [vmem:[%s5 + $0x8] sm:$0xff]
    %v2943 = vld [vmem:[%s5 + $0x10] sm:$0xff]
    %v2944 = vld [vmem:[%s5 + $0x18] sm:$0xff]
    %v2945 = vld [vmem:[%s5 + $0x20] sm:$0xff]
    %v2946 = vld [vmem:[%s5 + $0x28] sm:$0xff]
    %v2947 = vld [vmem:[%s5 + $0x30] sm:$0xff]
    %v2948 = vld [vmem:[%s5 + $0x38] sm:$0xff]
    %v2949 = vld [vmem:[%s5 + $0x40] sm:$0xff]
    %v2950 = vld [vmem:[%s5 + $0x48] sm:$0xff]
    %v2951 = vld [vmem:[%s5 + $0x50] sm:$0xff]
    %v2952 = vld [vmem:[%s5 + $0x58] sm:$0xff]
    %v2953 = vld [vmem:[%s5 + $0x60] sm:$0xff]
    %v2954 = vld [vmem:[%s5 + $0x68] sm:$0xff]
    %v2955 = vld [vmem:[%s5 + $0x70] sm:$0xff]
    %v2956 = vld [vmem:[%s5 + $0x78] sm:$0xff]
    %v2957 = vld [vmem:[%s5 + $0x80] sm:$0xff]
    %v2958 = vld [vmem:[%s5 + $0x88] sm:$0xff]
    %v2959 = vld [vmem:[%s5 + $0x90] sm:$0xff]
    %v2960 = vld [vmem:[%s5 + $0x98] sm:$0xff]
    %v2961 = vld [vmem:[%s5 + $0xa0] sm:$0xff]
    %v2962 = vld [vmem:[%s5 + $0xa8] sm:$0xff]
    %v2963 = vld [vmem:[%s5 + $0xb0] sm:$0xff]
    %v2964 = vld [vmem:[%s5 + $0xb8] sm:$0xff]
    %v2965 = vld [vmem:[%s5 + $0xc0] sm:$0xff]
    %v2966 = vld [vmem:[%s5 + $0xc8] sm:$0xff]
    %v2967 = vld [vmem:[%s5 + $0xd0] sm:$0xff]
    %v2968 = vld [vmem:[%s5 + $0xd8] sm:$0xff]
    %v2969 = vld [vmem:[%s5 + $0xe0] sm:$0xff]
    %v2970 = vld [vmem:[%s5 + $0xe8] sm:$0xff]
    %v2971 = vld [vmem:[%s5 + $0xf0] sm:$0xff]
    %v2972 = vld [vmem:[%s5 + $0xf8] sm:$0xff]
    %v2973 = vld [vmem:[%s5 + $0x100] sm:$0xff]
    %v2974 = vld [vmem:[%s5 + $0x108] sm:$0xff]
    %v2975 = vld [vmem:[%s5 + $0x110] sm:$0xff]
    %v2976 = vld [vmem:[%s5 + $0x118] sm:$0xff]
    %v2977 = vld [vmem:[%s5 + $0x120] sm:$0xff]
    %v2978 = vld [vmem:[%s5 + $0x128] sm:$0xff]
    %v2979 = vld [vmem:[%s5 + $0x130] sm:$0xff]
    %v2980 = vld [vmem:[%s5 + $0x138] sm:$0xff]
    %v2981 = vld [vmem:[%s5 + $0x140] sm:$0xff]
    %v2982 = vld [vmem:[%s5 + $0x148] sm:$0xff]
    %v2983 = vld [vmem:[%s5 + $0x150] sm:$0xff]
    %v2984 = vld [vmem:[%s5 + $0x158] sm:$0xff]
    %v2985 = vld [vmem:[%s5 + $0x160] sm:$0xff]
    %v2986 = vld [vmem:[%s5 + $0x168] sm:$0xff]
    %v2987 = vld [vmem:[%s5 + $0x170] sm:$0xff]
    %v2988 = vld [vmem:[%s5 + $0x178] sm:$0xff]
    %v2989 = vld [vmem:[%s5 + $0x180] sm:$0xff]
    %v2990 = vld [vmem:[%s5 + $0x188] sm:$0xff]
    %v2991 = vld [vmem:[%s5 + $0x190] sm:$0xff]
    %v2992 = vld [vmem:[%s5 + $0x198] sm:$0xff]
    %v2993 = vld [vmem:[%s5 + $0x1a0] sm:$0xff]
    %v2994 = vld [vmem:[%s5 + $0x1a8] sm:$0xff]
    %v2995 = vld [vmem:[%s5 + $0x1b0] sm:$0xff]
    %v2996 = vld [vmem:[%s5 + $0x1b8] sm:$0xff]
    %v2997 = vld [vmem:[%s5 + $0x1c0] sm:$0xff]
    %v2998 = vld [vmem:[%s5 + $0x1c8] sm:$0xff]
    %v2999 = vld [vmem:[%s5 + $0x1d0] sm:$0xff]
    %v3000 = vld [vmem:[%s5 + $0x1d8] sm:$0xff]
    %v3001 = vld [vmem:[%s5 + $0x1e0] sm:$0xff]
    %v3002 = vld [vmem:[%s5 + $0x1e8] sm:$0xff]
    %v3003 = vld [vmem:[%s5 + $0x1f0] sm:$0xff]
    %v3004 = vld [vmem:[%s5 + $0x1f8] sm:$0xff]
    %3005 = vmatprep.subr.mxu0 0.0
    %3006 = vmatpush1.msra.mxu0 %v2941
    %3007 = vmatprep.subr.mxu0 0.0
    %3008 = vmatpush1.msra.mxu0 %v2942
    %3009 = vmatprep.subr.mxu0 0.0
    %3010 = vmatpush1.msra.mxu0 %v2943
    %3011 = vmatprep.subr.mxu0 0.0
    %3012 = vmatpush1.msra.mxu0 %v2944
    %3013 = vmatprep.subr.mxu0 0.0
    %3014 = vmatpush1.msra.mxu0 %v2945
    %3015 = vmatprep.subr.mxu0 0.0
    %3016 = vmatpush1.msra.mxu0 %v2946
    %3017 = vmatprep.subr.mxu0 0.0
    %3018 = vmatpush1.msra.mxu0 %v2947
    %3019 = vmatprep.subr.mxu0 0.0
    %3020 = vmatpush1.msra.mxu0 %v2948
    %3021 = vmatprep.subr.mxu0 0.0
    %3022 = vmatpush1.msra.mxu0 %v2949
    %3023 = vmatprep.subr.mxu0 0.0
    %3024 = vmatpush1.msra.mxu0 %v2950
    %3025 = vmatprep.subr.mxu0 0.0
    %3026 = vmatpush1.msra.mxu0 %v2951
    %3027 = vmatprep.subr.mxu0 0.0
    %3028 = vmatpush1.msra.mxu0 %v2952
    %3029 = vmatprep.subr.mxu0 0.0
    %3030 = vmatpush1.msra.mxu0 %v2953
    %3031 = vmatprep.subr.mxu0 0.0
    %3032 = vmatpush1.msra.mxu0 %v2954
    %3033 = vmatprep.subr.mxu0 0.0
    %3034 = vmatpush1.msra.mxu0 %v2955
    %3035 = vmatprep.subr.mxu0 0.0
    %3036 = vmatpush1.msra.mxu0 %v2956
    %3037 = vmatprep.subr.mxu0 0.0
    %3038 = vmatpush1.msra.mxu0 %v2957
    %3039 = vmatprep.subr.mxu0 0.0
    %3040 = vmatpush1.msra.mxu0 %v2958
    %3041 = vmatprep.subr.mxu0 0.0
    %3042 = vmatpush1.msra.mxu0 %v2959
    %3043 = vmatprep.subr.mxu0 0.0
    %3044 = vmatpush1.msra.mxu0 %v2960
    %3045 = vmatprep.subr.mxu0 0.0
    %3046 = vmatpush1.msra.mxu0 %v2961
    %3047 = vmatprep.subr.mxu0 0.0
    %3048 = vmatpush1.msra.mxu0 %v2962
    %3049 = vmatprep.subr.mxu0 0.0
    %3050 = vmatpush1.msra.mxu0 %v2963
    %3051 = vmatprep.subr.mxu0 0.0
    %3052 = vmatpush1.msra.mxu0 %v2964
    %3053 = vmatprep.subr.mxu0 0.0
    %3054 = vmatpush1.msra.mxu0 %v2965
    %3055 = vmatprep.subr.mxu0 0.0
    %3056 = vmatpush1.msra.mxu0 %v2966
    %3057 = vmatprep.subr.mxu0 0.0
    %3058 = vmatpush1.msra.mxu0 %v2967
    %3059 = vmatprep.subr.mxu0 0.0
    %3060 = vmatpush1.msra.mxu0 %v2968
    %3061 = vmatprep.subr.mxu0 0.0
    %3062 = vmatpush1.msra.mxu0 %v2969
    %3063 = vmatprep.subr.mxu0 0.0
    %3064 = vmatpush1.msra.mxu0 %v2970
    %3065 = vmatprep.subr.mxu0 0.0
    %3066 = vmatpush1.msra.mxu0 %v2971
    %3067 = vmatprep.subr.mxu0 0.0
    %3068 = vmatpush1.msra.mxu0 %v2972
    %3069 = vmatprep.mubr.f32.mxu0 %v2880
    %3070 = vmatmul.mubr.f32.gmra.mrb[0].mxu0 %v2878
    %v3071 = vpop.f32.mrb[0].mxu0
    %v3072 = vadd.f32 0.0, %v3071
    %v3073 = vpop.f32.mrb[0].mxu0
    %3074 = vmatprep.mubr.f32.mxu0 %v2888
    %3075 = vmatmul.mubr.f32.gmra.mrb[0].mxu0 %v2886
    %v3076 = vpop.f32.mrb[0].mxu0
    %v3077 = vadd.f32 0.0, %v3076
    %v3078 = vpop.f32.mrb[0].mxu0
    %3079 = vmatprep.mubr.f32.mxu0 %v2896
    %3080 = vmatmul.mubr.f32.gmra.mrb[0].mxu0 %v2894
    %v3081 = vpop.f32.mrb[0].mxu0
    %v3082 = vadd.f32 0.0, %v3081
    %v3083 = vpop.f32.mrb[0].mxu0
    %3084 = vmatprep.mubr.f32.mxu0 %v2904
    %3085 = vmatmul.mubr.f32.gmra.mrb[0].mxu0 %v2902
    %v3086 = vpop.f32.mrb[0].mxu0
    %v3087 = vadd.f32 0.0, %v3086
    %v3088 = vpop.f32.mrb[0].mxu0
    %3089 = vmatprep.mubr.f32.mxu0 %v2912
    %3090 = vmatmul.mubr.f32.gmra.mrb[0].mxu0 %v2910
    %v3091 = vpop.f32.mrb[0].mxu0
    %v3092 = vadd.f32 0.0, %v3091
    %v3093 = vpop.f32.mrb[0].mxu0
    %3094 = vmatprep.mubr.f32.mxu0 %v2920
    %3095 = vmatmul.mubr.f32.gmra.mrb[0].mxu0 %v2918
    %v3096 = vpop.f32.mrb[0].mxu0
    %v3097 = vadd.f32 0.0, %v3096
    %v3098 = vpop.f32.mrb[0].mxu0
    %3099 = vmatprep.mubr.f32.mxu0 %v2928
    %3100 = vmatmul.mubr.f32.gmra.mrb[0].mxu0 %v2926
    %v3101 = vpop.f32.mrb[0].mxu0
    %v3102 = vadd.f32 0.0, %v3101
    %v3103 = vpop.f32.mrb[0].mxu0
    %3104 = vmatprep.mubr.f32.mxu0 %v2936
    %3105 = vmatmul.mubr.f32.gmra.mrb[0].mxu0 %v2934
    %v3106 = vpop.f32.mrb[0].mxu0
    %v3107 = vadd.f32 0.0, %v3106
    %v3108 = vpop.f32.mrb[0].mxu0
    %3109 = vdwg.mxu0
    %3110 = vmatprep.subr.mxu0 0.0
    %3111 = vmatpush1.msra.mxu0 %v2973
    %3112 = vmatprep.subr.mxu0 0.0
    %3113 = vmatpush1.msra.mxu0 %v2974
    %3114 = vmatprep.subr.mxu0 0.0
    %3115 = vmatpush1.msra.mxu0 %v2975
    %3116 = vmatprep.subr.mxu0 0.0
    %3117 = vmatpush1.msra.mxu0 %v2976
    %3118 = vmatprep.subr.mxu0 0.0
    %3119 = vmatpush1.msra.mxu0 %v2977
    %3120 = vmatprep.subr.mxu0 0.0
    %3121 = vmatpush1.msra.mxu0 %v2978
    %3122 = vmatprep.subr.mxu0 0.0
    %3123 = vmatpush1.msra.mxu0 %v2979
    %3124 = vmatprep.subr.mxu0 0.0
    %3125 = vmatpush1.msra.mxu0 %v2980
    %3126 = vmatprep.subr.mxu0 0.0
    %3127 = vmatpush1.msra.mxu0 %v2981
    %3128 = vmatprep.subr.mxu0 0.0
    %3129 = vmatpush1.msra.mxu0 %v2982
    %3130 = vmatprep.subr.mxu0 0.0
    %3131 = vmatpush1.msra.mxu0 %v2983
    %3132 = vmatprep.subr.mxu0 0.0
    %3133 = vmatpush1.msra.mxu0 %v2984
    %3134 = vmatprep.subr.mxu0 0.0
    %3135 = vmatpush1.msra.mxu0 %v2985
    %3136 = vmatprep.subr.mxu0 0.0
    %3137 = vmatpush1.msra.mxu0 %v2986
    %3138 = vmatprep.subr.mxu0 0.0
    %3139 = vmatpush1.msra.mxu0 %v2987
    %3140 = vmatprep.subr.mxu0 0.0
    %3141 = vmatpush1.msra.mxu0 %v2988
    %3142 = vmatprep.subr.mxu0 0.0
    %3143 = vmatpush1.msra.mxu0 %v2989
    %3144 = vmatprep.subr.mxu0 0.0
    %3145 = vmatpush1.msra.mxu0 %v2990
    %3146 = vmatprep.subr.mxu0 0.0
    %3147 = vmatpush1.msra.mxu0 %v2991
    %3148 = vmatprep.subr.mxu0 0.0
    %3149 = vmatpush1.msra.mxu0 %v2992
    %3150 = vmatprep.subr.mxu0 0.0
    %3151 = vmatpush1.msra.mxu0 %v2993
    %3152 = vmatprep.subr.mxu0 0.0
    %3153 = vmatpush1.msra.mxu0 %v2994
    %3154 = vmatprep.subr.mxu0 0.0
    %3155 = vmatpush1.msra.mxu0 %v2995
    %3156 = vmatprep.subr.mxu0 0.0
    %3157 = vmatpush1.msra.mxu0 %v2996
    %3158 = vmatprep.subr.mxu0 0.0
    %3159 = vmatpush1.msra.mxu0 %v2997
    %3160 = vmatprep.subr.mxu0 0.0
    %3161 = vmatpush1.msra.mxu0 %v2998
    %3162 = vmatprep.subr.mxu0 0.0
    %3163 = vmatpush1.msra.mxu0 %v2999
    %3164 = vmatprep.subr.mxu0 0.0
    %3165 = vmatpush1.msra.mxu0 %v3000
    %3166 = vmatprep.subr.mxu0 0.0
    %3167 = vmatpush1.msra.mxu0 %v3001
    %3168 = vmatprep.subr.mxu0 0.0
    %3169 = vmatpush1.msra.mxu0 %v3002
    %3170 = vmatprep.subr.mxu0 0.0
    %3171 = vmatpush1.msra.mxu0 %v3003
    %3172 = vmatprep.subr.mxu0 0.0
    %3173 = vmatpush1.msra.mxu0 %v3004
    %3174 = vmatprep.mubr.f32.mxu0 %v2884
    %3175 = vmatmul.mubr.f32.gmra.mrb[0].mxu0 %v2882
    %v3176 = vpop.f32.mrb[0].mxu0
    %v3177 = vadd.f32 %v3072, %v3176
    %v3178 = vpop.f32.mrb[0].mxu0
    %3179 = vmatprep.mubr.f32.mxu0 %v2892
    %3180 = vmatmul.mubr.f32.gmra.mrb[0].mxu0 %v2890
    %v3181 = vpop.f32.mrb[0].mxu0
    %v3182 = vadd.f32 %v3077, %v3181
    %v3183 = vpop.f32.mrb[0].mxu0
    %3184 = vmatprep.mubr.f32.mxu0 %v2900
    %3185 = vmatmul.mubr.f32.gmra.mrb[0].mxu0 %v2898
    %v3186 = vpop.f32.mrb[0].mxu0
    %v3187 = vadd.f32 %v3082, %v3186
    %v3188 = vpop.f32.mrb[0].mxu0
    %3189 = vmatprep.mubr.f32.mxu0 %v2908
    %3190 = vmatmul.mubr.f32.gmra.mrb[0].mxu0 %v2906
    %v3191 = vpop.f32.mrb[0].mxu0
    %v3192 = vadd.f32 %v3087, %v3191
    %v3193 = vpop.f32.mrb[0].mxu0
    %3194 = vmatprep.mubr.f32.mxu0 %v2916
    %3195 = vmatmul.mubr.f32.gmra.mrb[0].mxu0 %v2914
    %v3196 = vpop.f32.mrb[0].mxu0
    %v3197 = vadd.f32 %v3092, %v3196
    %v3198 = vpop.f32.mrb[0].mxu0
    %3199 = vmatprep.mubr.f32.mxu0 %v2924
    %3200 = vmatmul.mubr.f32.gmra.mrb[0].mxu0 %v2922
    %v3201 = vpop.f32.mrb[0].mxu0
    %v3202 = vadd.f32 %v3097, %v3201
    %v3203 = vpop.f32.mrb[0].mxu0
    %3204 = vmatprep.mubr.f32.mxu0 %v2932
    %3205 = vmatmul.mubr.f32.gmra.mrb[0].mxu0 %v2930
    %v3206 = vpop.f32.mrb[0].mxu0
    %v3207 = vadd.f32 %v3102, %v3206
    %v3208 = vpop.f32.mrb[0].mxu0
    %3209 = vmatprep.mubr.f32.mxu0 %v2940
    %3210 = vmatmul.mubr.f32.gmra.mrb[0].mxu0 %v2938
    %v3211 = vpop.f32.mrb[0].mxu0
    %v3212 = vadd.f32 %v3107, %v3211
    %v3213 = vpop.f32.mrb[0].mxu0
    %3214 = vdwg.mxu0
    %3215 = vmatprep.subr.mxu0 0.0
    %3216 = vmatpush1.msra.mxu0 %v2349
    %3217 = vmatprep.subr.mxu0 0.0
    %3218 = vmatpush1.msra.mxu0 %v2350
    %3219 = vmatprep.subr.mxu0 0.0
    %3220 = vmatpush1.msra.mxu0 %v2351
    %3221 = vmatprep.subr.mxu0 0.0
    %3222 = vmatpush1.msra.mxu0 %v2352
    %3223 = vmatprep.subr.mxu0 0.0
    %3224 = vmatpush1.msra.mxu0 %v2353
    %3225 = vmatprep.subr.mxu0 0.0
    %3226 = vmatpush1.msra.mxu0 %v2354
    %3227 = vmatprep.subr.mxu0 0.0
    %3228 = vmatpush1.msra.mxu0 %v2355
    %3229 = vmatprep.subr.mxu0 0.0
    %3230 = vmatpush1.msra.mxu0 %v2356
    %3231 = vmatprep.subr.mxu0 0.0
    %3232 = vmatpush1.msra.mxu0 %v2357
    %3233 = vmatprep.subr.mxu0 0.0
    %3234 = vmatpush1.msra.mxu0 %v2358
    %3235 = vmatprep.subr.mxu0 0.0
    %3236 = vmatpush1.msra.mxu0 %v2359
    %3237 = vmatprep.subr.mxu0 0.0
    %3238 = vmatpush1.msra.mxu0 %v2360
    %3239 = vmatprep.subr.mxu0 0.0
    %3240 = vmatpush1.msra.mxu0 %v2361
    %3241 = vmatprep.subr.mxu0 0.0
    %3242 = vmatpush1.msra.mxu0 %v2362
    %3243 = vmatprep.subr.mxu0 0.0
    %3244 = vmatpush1.msra.mxu0 %v2363
    %3245 = vmatprep.subr.mxu0 0.0
    %3246 = vmatpush1.msra.mxu0 %v2364
    %3247 = vmatprep.subr.mxu0 0.0
    %3248 = vmatpush1.msra.mxu0 %v2365
    %3249 = vmatprep.subr.mxu0 0.0
    %3250 = vmatpush1.msra.mxu0 %v2366
    %3251 = vmatprep.subr.mxu0 0.0
    %3252 = vmatpush1.msra.mxu0 %v2367
    %3253 = vmatprep.subr.mxu0 0.0
    %3254 = vmatpush1.msra.mxu0 %v2368
    %3255 = vmatprep.subr.mxu0 0.0
    %3256 = vmatpush1.msra.mxu0 %v2369
    %3257 = vmatprep.subr.mxu0 0.0
    %3258 = vmatpush1.msra.mxu0 %v2370
    %3259 = vmatprep.subr.mxu0 0.0
    %3260 = vmatpush1.msra.mxu0 %v2371
    %3261 = vmatprep.subr.mxu0 0.0
    %3262 = vmatpush1.msra.mxu0 %v2372
    %3263 = vmatprep.subr.mxu0 0.0
    %3264 = vmatpush1.msra.mxu0 %v2373
    %3265 = vmatprep.subr.mxu0 0.0
    %3266 = vmatpush1.msra.mxu0 %v2374
    %3267 = vmatprep.subr.mxu0 0.0
    %3268 = vmatpush1.msra.mxu0 %v2375
    %3269 = vmatprep.subr.mxu0 0.0
    %3270 = vmatpush1.msra.mxu0 %v2376
    %3271 = vmatprep.subr.mxu0 0.0
    %3272 = vmatpush1.msra.mxu0 %v2377
    %3273 = vmatprep.subr.mxu0 0.0
    %3274 = vmatpush1.msra.mxu0 %v2378
    %3275 = vmatprep.subr.mxu0 0.0
    %3276 = vmatpush1.msra.mxu0 %v2379
    %3277 = vmatprep.subr.mxu0 0.0
    %3278 = vmatpush1.msra.mxu0 %v2380
    %3279 = vmatprep.mubr.f32.mxu0 %v2880
    %3280 = vmatmul.mubr.f32.gmra.mrb[0].mxu0 %v2878
    %v3281 = vpop.f32.mrb[0].mxu0
    %v3282 = vadd.f32 0.0, %v3281
    %v3283 = vpop.f32.mrb[0].mxu0
    %3284 = vmatprep.mubr.f32.mxu0 %v2888
    %3285 = vmatmul.mubr.f32.gmra.mrb[0].mxu0 %v2886
    %v3286 = vpop.f32.mrb[0].mxu0
    %v3287 = vadd.f32 0.0, %v3286
    %v3288 = vpop.f32.mrb[0].mxu0
    %3289 = vmatprep.mubr.f32.mxu0 %v2896
    %3290 = vmatmul.mubr.f32.gmra.mrb[0].mxu0 %v2894
    %v3291 = vpop.f32.mrb[0].mxu0
    %v3292 = vadd.f32 0.0, %v3291
    %v3293 = vpop.f32.mrb[0].mxu0
    %3294 = vmatprep.mubr.f32.mxu0 %v2904
    %3295 = vmatmul.mubr.f32.gmra.mrb[0].mxu0 %v2902
    %v3296 = vpop.f32.mrb[0].mxu0
    %v3297 = vadd.f32 0.0, %v3296
    %v3298 = vpop.f32.mrb[0].mxu0
    %3299 = vmatprep.mubr.f32.mxu0 %v2912
    %3300 = vmatmul.mubr.f32.gmra.mrb[0].mxu0 %v2910
    %v3301 = vpop.f32.mrb[0].mxu0
    %v3302 = vadd.f32 0.0, %v3301
    %v3303 = vpop.f32.mrb[0].mxu0
    %3304 = vmatprep.mubr.f32.mxu0 %v2920
    %3305 = vmatmul.mubr.f32.gmra.mrb[0].mxu0 %v2918
    %v3306 = vpop.f32.mrb[0].mxu0
    %v3307 = vadd.f32 0.0, %v3306
    %v3308 = vpop.f32.mrb[0].mxu0
    %3309 = vmatprep.mubr.f32.mxu0 %v2928
    %3310 = vmatmul.mubr.f32.gmra.mrb[0].mxu0 %v2926
    %v3311 = vpop.f32.mrb[0].mxu0
    %v3312 = vadd.f32 0.0, %v3311
    %v3313 = vpop.f32.mrb[0].mxu0
    %3314 = vmatprep.mubr.f32.mxu0 %v2936
    %3315 = vmatmul.mubr.f32.gmra.mrb[0].mxu0 %v2934
    %v3316 = vpop.f32.mrb[0].mxu0
    %v3317 = vadd.f32 0.0, %v3316
    %v3318 = vpop.f32.mrb[0].mxu0
    %3319 = vdwg.mxu0
    %3320 = vmatprep.subr.mxu0 0.0
    %3321 = vmatpush1.msra.mxu0 %v2381
    %3322 = vmatprep.subr.mxu0 0.0
    %3323 = vmatpush1.msra.mxu0 %v2382
    %3324 = vmatprep.subr.mxu0 0.0
    %3325 = vmatpush1.msra.mxu0 %v2383
    %3326 = vmatprep.subr.mxu0 0.0
    %3327 = vmatpush1.msra.mxu0 %v2384
    %3328 = vmatprep.subr.mxu0 0.0
    %3329 = vmatpush1.msra.mxu0 %v2385
    %3330 = vmatprep.subr.mxu0 0.0
    %3331 = vmatpush1.msra.mxu0 %v2386
    %3332 = vmatprep.subr.mxu0 0.0
    %3333 = vmatpush1.msra.mxu0 %v2387
    %3334 = vmatprep.subr.mxu0 0.0
    %3335 = vmatpush1.msra.mxu0 %v2388
    %3336 = vmatprep.subr.mxu0 0.0
    %3337 = vmatpush1.msra.mxu0 %v2389
    %3338 = vmatprep.subr.mxu0 0.0
    %3339 = vmatpush1.msra.mxu0 %v2390
    %3340 = vmatprep.subr.mxu0 0.0
    %3341 = vmatpush1.msra.mxu0 %v2391
    %3342 = vmatprep.subr.mxu0 0.0
    %3343 = vmatpush1.msra.mxu0 %v2392
    %3344 = vmatprep.subr.mxu0 0.0
    %3345 = vmatpush1.msra.mxu0 %v2393
    %3346 = vmatprep.subr.mxu0 0.0
    %3347 = vmatpush1.msra.mxu0 %v2394
    %3348 = vmatprep.subr.mxu0 0.0
    %3349 = vmatpush1.msra.mxu0 %v2395
    %3350 = vmatprep.subr.mxu0 0.0
    %3351 = vmatpush1.msra.mxu0 %v2396
    %3352 = vmatprep.subr.mxu0 0.0
    %3353 = vmatpush1.msra.mxu0 %v2397
    %3354 = vmatprep.subr.mxu0 0.0
    %3355 = vmatpush1.msra.mxu0 %v2398
    %3356 = vmatprep.subr.mxu0 0.0
    %3357 = vmatpush1.msra.mxu0 %v2399
    %3358 = vmatprep.subr.mxu0 0.0
    %3359 = vmatpush1.msra.mxu0 %v2400
    %3360 = vmatprep.subr.mxu0 0.0
    %3361 = vmatpush1.msra.mxu0 %v2401
    %3362 = vmatprep.subr.mxu0 0.0
    %3363 = vmatpush1.msra.mxu0 %v2402
    %3364 = vmatprep.subr.mxu0 0.0
    %3365 = vmatpush1.msra.mxu0 %v2403
    %3366 = vmatprep.subr.mxu0 0.0
    %3367 = vmatpush1.msra.mxu0 %v2404
    %3368 = vmatprep.subr.mxu0 0.0
    %3369 = vmatpush1.msra.mxu0 %v2405
    %3370 = vmatprep.subr.mxu0 0.0
    %3371 = vmatpush1.msra.mxu0 %v2406
    %3372 = vmatprep.subr.mxu0 0.0
    %3373 = vmatpush1.msra.mxu0 %v2407
    %3374 = vmatprep.subr.mxu0 0.0
    %3375 = vmatpush1.msra.mxu0 %v2408
    %3376 = vmatprep.subr.mxu0 0.0
    %3377 = vmatpush1.msra.mxu0 %v2409
    %3378 = vmatprep.subr.mxu0 0.0
    %3379 = vmatpush1.msra.mxu0 %v2410
    %3380 = vmatprep.subr.mxu0 0.0
    %3381 = vmatpush1.msra.mxu0 %v2411
    %3382 = vmatprep.subr.mxu0 0.0
    %3383 = vmatpush1.msra.mxu0 %v2412
    %3384 = vmatprep.mubr.f32.mxu0 %v2884
    %3385 = vmatmul.mubr.f32.gmra.mrb[0].mxu0 %v2882
    %v3386 = vpop.f32.mrb[0].mxu0
    %v3387 = vadd.f32 %v3282, %v3386
    %v3388 = vpop.f32.mrb[0].mxu0
    %3389 = vmatprep.mubr.f32.mxu0 %v2892
    %3390 = vmatmul.mubr.f32.gmra.mrb[0].mxu0 %v2890
    %v3391 = vpop.f32.mrb[0].mxu0
    %v3392 = vadd.f32 %v3287, %v3391
    %v3393 = vpop.f32.mrb[0].mxu0
    %3394 = vmatprep.mubr.f32.mxu0 %v2900
    %3395 = vmatmul.mubr.f32.gmra.mrb[0].mxu0 %v2898
    %v3396 = vpop.f32.mrb[0].mxu0
    %v3397 = vadd.f32 %v3292, %v3396
    %v3398 = vpop.f32.mrb[0].mxu0
    %3399 = vmatprep.mubr.f32.mxu0 %v2908
    %3400 = vmatmul.mubr.f32.gmra.mrb[0].mxu0 %v2906
    %v3401 = vpop.f32.mrb[0].mxu0
    %v3402 = vadd.f32 %v3297, %v3401
    %v3403 = vpop.f32.mrb[0].mxu0
    %3404 = vmatprep.mubr.f32.mxu0 %v2916
    %3405 = vmatmul.mubr.f32.gmra.mrb[0].mxu0 %v2914
    %v3406 = vpop.f32.mrb[0].mxu0
    %v3407 = vadd.f32 %v3302, %v3406
    %v3408 = vpop.f32.mrb[0].mxu0
    %3409 = vmatprep.mubr.f32.mxu0 %v2924
    %3410 = vmatmul.mubr.f32.gmra.mrb[0].mxu0 %v2922
    %v3411 = vpop.f32.mrb[0].mxu0
    %v3412 = vadd.f32 %v3307, %v3411
    %v3413 = vpop.f32.mrb[0].mxu0
    %3414 = vmatprep.mubr.f32.mxu0 %v2932
    %3415 = vmatmul.mubr.f32.gmra.mrb[0].mxu0 %v2930
    %v3416 = vpop.f32.mrb[0].mxu0
    %v3417 = vadd.f32 %v3312, %v3416
    %v3418 = vpop.f32.mrb[0].mxu0
    %3419 = vmatprep.mubr.f32.mxu0 %v2940
    %3420 = vmatmul.mubr.f32.gmra.mrb[0].mxu0 %v2938
    %v3421 = vpop.f32.mrb[0].mxu0
    %v3422 = vadd.f32 %v3317, %v3421
    %v3423 = vpop.f32.mrb[0].mxu0
    %3424 = vdwg.mxu0
    %v3425 = vld [vmem:[%s6] sm:$0xff]
    %vm3426 = vcmask 64512
    %v3428 = vsel %vm3426, %v3177, 0
    %v3431 = vsel %vm3426, %v3182, 0
    %v3434 = vsel %vm3426, %v3187, 0
    %v3437 = vsel %vm3426, %v3192, 0
    %v3440 = vsel %vm3426, %v3197, 0
    %v3443 = vsel %vm3426, %v3202, 0
    %v3446 = vsel %vm3426, %v3207, 0
    %v3449 = vsel %vm3426, %v3212, 0
    %3451 = vmatprep.subr.mxu0 0.0
    %3452 = vmatpush1.msra.mxu0 %v3425
    %3453 = vmatprep.subr.mxu0 0.0
    %3454 = vmatpush1.msra.mxu0 0.0
    %3455 = vmatprep.subr.mxu0 0.0
    %3456 = vmatpush1.msra.mxu0 0.0
    %3457 = vmatprep.subr.mxu0 0.0
    %3458 = vmatpush1.msra.mxu0 0.0
    %3459 = vmatprep.subr.mxu0 0.0
    %3460 = vmatpush1.msra.mxu0 0.0
    %3461 = vmatprep.subr.mxu0 0.0
    %3462 = vmatpush1.msra.mxu0 0.0
    %3463 = vmatprep.subr.mxu0 0.0
    %3464 = vmatpush1.msra.mxu0 0.0
    %3465 = vmatprep.subr.mxu0 0.0
    %3466 = vmatpush1.msra.mxu0 0.0
    %3467 = vmatprep.subr.mxu0 0.0
    %3468 = vmatpush1.msra.mxu0 0.0
    %3469 = vmatprep.subr.mxu0 0.0
    %3470 = vmatpush1.msra.mxu0 0.0
    %3471 = vmatprep.subr.mxu0 0.0
    %3472 = vmatpush1.msra.mxu0 0.0
    %3473 = vmatprep.subr.mxu0 0.0
    %3474 = vmatpush1.msra.mxu0 0.0
    %3475 = vmatprep.subr.mxu0 0.0
    %3476 = vmatpush1.msra.mxu0 0.0
    %3477 = vmatprep.subr.mxu0 0.0
    %3478 = vmatpush1.msra.mxu0 0.0
    %3479 = vmatprep.subr.mxu0 0.0
    %3480 = vmatpush1.msra.mxu0 0.0
    %3481 = vmatprep.subr.mxu0 0.0
    %3482 = vmatpush1.msra.mxu0 0.0
    %3483 = vmatprep.subr.mxu0 0.0
    %3484 = vmatpush1.msra.mxu0 0.0
    %3485 = vmatprep.subr.mxu0 0.0
    %3486 = vmatpush1.msra.mxu0 0.0
    %3487 = vmatprep.subr.mxu0 0.0
    %3488 = vmatpush1.msra.mxu0 0.0
    %3489 = vmatprep.subr.mxu0 0.0
    %3490 = vmatpush1.msra.mxu0 0.0
    %3491 = vmatprep.subr.mxu0 0.0
    %3492 = vmatpush1.msra.mxu0 0.0
    %3493 = vmatprep.subr.mxu0 0.0
    %3494 = vmatpush1.msra.mxu0 0.0
    %3495 = vmatprep.subr.mxu0 0.0
    %3496 = vmatpush1.msra.mxu0 0.0
    %3497 = vmatprep.subr.mxu0 0.0
    %3498 = vmatpush1.msra.mxu0 0.0
    %3499 = vmatprep.subr.mxu0 0.0
    %3500 = vmatpush1.msra.mxu0 0.0
    %3501 = vmatprep.subr.mxu0 0.0
    %3502 = vmatpush1.msra.mxu0 0.0
    %3503 = vmatprep.subr.mxu0 0.0
    %3504 = vmatpush1.msra.mxu0 0.0
    %3505 = vmatprep.subr.mxu0 0.0
    %3506 = vmatpush1.msra.mxu0 0.0
    %3507 = vmatprep.subr.mxu0 0.0
    %3508 = vmatpush1.msra.mxu0 0.0
    %3509 = vmatprep.subr.mxu0 0.0
    %3510 = vmatpush1.msra.mxu0 0.0
    %3511 = vmatprep.subr.mxu0 0.0
    %3512 = vmatpush1.msra.mxu0 0.0
    %3513 = vmatprep.subr.mxu0 0.0
    %3514 = vmatpush1.msra.mxu0 0.0
    %3515 = vmatprep.mubr.f32.mxu0 0.0
    %3516 = vmatmul.mubr.f32.gmra.mrb[0].mxu0 %v3428
    %v3517 = vpop.f32.mrb[0].mxu0
    %v3518 = vadd.f32 0.0, %v3517
    %v3519 = vpop.f32.mrb[0].mxu0
    %3520 = vmatprep.mubr.f32.mxu0 0.0
    %3521 = vmatmul.mubr.f32.gmra.mrb[0].mxu0 %v3431
    %v3522 = vpop.f32.mrb[0].mxu0
    %v3523 = vadd.f32 0.0, %v3522
    %v3524 = vpop.f32.mrb[0].mxu0
    %3525 = vmatprep.mubr.f32.mxu0 0.0
    %3526 = vmatmul.mubr.f32.gmra.mrb[0].mxu0 %v3434
    %v3527 = vpop.f32.mrb[0].mxu0
    %v3528 = vadd.f32 0.0, %v3527
    %v3529 = vpop.f32.mrb[0].mxu0
    %3530 = vmatprep.mubr.f32.mxu0 0.0
    %3531 = vmatmul.mubr.f32.gmra.mrb[0].mxu0 %v3437
    %v3532 = vpop.f32.mrb[0].mxu0
    %v3533 = vadd.f32 0.0, %v3532
    %v3534 = vpop.f32.mrb[0].mxu0
    %3535 = vmatprep.mubr.f32.mxu0 0.0
    %3536 = vmatmul.mubr.f32.gmra.mrb[0].mxu0 %v3440
    %v3537 = vpop.f32.mrb[0].mxu0
    %v3538 = vadd.f32 0.0, %v3537
    %v3539 = vpop.f32.mrb[0].mxu0
    %3540 = vmatprep.mubr.f32.mxu0 0.0
    %3541 = vmatmul.mubr.f32.gmra.mrb[0].mxu0 %v3443
    %v3542 = vpop.f32.mrb[0].mxu0
    %v3543 = vadd.f32 0.0, %v3542
    %v3544 = vpop.f32.mrb[0].mxu0
    %3545 = vmatprep.mubr.f32.mxu0 0.0
    %3546 = vmatmul.mubr.f32.gmra.mrb[0].mxu0 %v3446
    %v3547 = vpop.f32.mrb[0].mxu0
    %v3548 = vadd.f32 0.0, %v3547
    %v3549 = vpop.f32.mrb[0].mxu0
    %3550 = vmatprep.mubr.f32.mxu0 0.0
    %3551 = vmatmul.mubr.f32.gmra.mrb[0].mxu0 %v3449
    %v3552 = vpop.f32.mrb[0].mxu0
    %v3553 = vadd.f32 0.0, %v3552
    %v3554 = vpop.f32.mrb[0].mxu0
    %3555 = vdwg.mxu0
    %v3556 = vrcp.pop %v3518
    %v3557 = vrcp.pop %v3523
    %v3558 = vrcp.pop %v3528
    %v3559 = vrcp.pop %v3533
    %v3560 = vrcp.pop %v3538
    %v3561 = vrcp.pop %v3543
    %v3562 = vrcp.pop %v3548
    %v3563 = vrcp.pop %v3553
    %v3564 = vmul.f32 %v3387, %v3556
    %v3565 = vmul.f32 %v3392, %v3557
    %v3566 = vmul.f32 %v3397, %v3558
    %v3567 = vmul.f32 %v3402, %v3559
    %v3568 = vmul.f32 %v3407, %v3560
    %v3569 = vmul.f32 %v3412, %v3561
    %v3570 = vmul.f32 %v3417, %v3562
    %v3571 = vmul.f32 %v3422, %v3563
    %v3572 = vld [vmem:[%s14] sm:$0xff]
    %v3573 = vld [vmem:[%s14 + $0x8] sm:$0xff]
    %v3574 = vld [vmem:[%s14 + $0x10] sm:$0xff]
    %v3575 = vld [vmem:[%s14 + $0x18] sm:$0xff]
    %v3576 = vld [vmem:[%s14 + $0x20] sm:$0xff]
    %v3577 = vld [vmem:[%s14 + $0x28] sm:$0xff]
    %v3578 = vld [vmem:[%s14 + $0x30] sm:$0xff]
    %v3579 = vld [vmem:[%s14 + $0x38] sm:$0xff]
    %v3580 = vld [vmem:[%s15] sm:$0x1]
    %v3582 = vlaneseq
    %v3583 = vshrl.u32 %v3582, 7
    %v3584 = vsub.s32 0, %v3583
    %v3585 = vrot.slane %v3580, %v3584
    %v3588 = vsel %vm331, %v3564, 0
    %v3591 = vsel %vm331, %v3565, 0
    %v3594 = vsel %vm331, %v3566, 0
    %v3597 = vsel %vm331, %v3567, 0
    %v3600 = vsel %vm331, %v3568, 0
    %v3603 = vsel %vm331, %v3569, 0
    %v3606 = vsel %vm331, %v3570, 0
    %v3609 = vsel %vm331, %v3571, 0
    %3611 = vmatprep.subr.mxu0 0.0
    %3612 = vmatpush1.msra.mxu0 %v3572
    %3613 = vmatprep.subr.mxu0 0.0
    %3614 = vmatpush1.msra.mxu0 %v3573
    %3615 = vmatprep.subr.mxu0 0.0
    %3616 = vmatpush1.msra.mxu0 %v3574
    %3617 = vmatprep.subr.mxu0 0.0
    %3618 = vmatpush1.msra.mxu0 %v3575
    %3619 = vmatprep.subr.mxu0 0.0
    %3620 = vmatpush1.msra.mxu0 %v3576
    %3621 = vmatprep.subr.mxu0 0.0
    %3622 = vmatpush1.msra.mxu0 %v3577
    %3623 = vmatprep.subr.mxu0 0.0
    %3624 = vmatpush1.msra.mxu0 %v3578
    %3625 = vmatprep.subr.mxu0 0.0
    %3626 = vmatpush1.msra.mxu0 %v3579
    %3627 = vmatprep.subr.mxu0 0.0
    %3628 = vmatpush1.msra.mxu0 0.0
    %3629 = vmatprep.subr.mxu0 0.0
    %3630 = vmatpush1.msra.mxu0 0.0
    %3631 = vmatprep.subr.mxu0 0.0
    %3632 = vmatpush1.msra.mxu0 0.0
    %3633 = vmatprep.subr.mxu0 0.0
    %3634 = vmatpush1.msra.mxu0 0.0
    %3635 = vmatprep.subr.mxu0 0.0
    %3636 = vmatpush1.msra.mxu0 0.0
    %3637 = vmatprep.subr.mxu0 0.0
    %3638 = vmatpush1.msra.mxu0 0.0
    %3639 = vmatprep.subr.mxu0 0.0
    %3640 = vmatpush1.msra.mxu0 0.0
    %3641 = vmatprep.subr.mxu0 0.0
    %3642 = vmatpush1.msra.mxu0 0.0
    %3643 = vmatprep.subr.mxu0 0.0
    %3644 = vmatpush1.msra.mxu0 0.0
    %3645 = vmatprep.subr.mxu0 0.0
    %3646 = vmatpush1.msra.mxu0 0.0
    %3647 = vmatprep.subr.mxu0 0.0
    %3648 = vmatpush1.msra.mxu0 0.0
    %3649 = vmatprep.subr.mxu0 0.0
    %3650 = vmatpush1.msra.mxu0 0.0
    %3651 = vmatprep.subr.mxu0 0.0
    %3652 = vmatpush1.msra.mxu0 0.0
    %3653 = vmatprep.subr.mxu0 0.0
    %3654 = vmatpush1.msra.mxu0 0.0
    %3655 = vmatprep.subr.mxu0 0.0
    %3656 = vmatpush1.msra.mxu0 0.0
    %3657 = vmatprep.subr.mxu0 0.0
    %3658 = vmatpush1.msra.mxu0 0.0
    %3659 = vmatprep.subr.mxu0 0.0
    %3660 = vmatpush1.msra.mxu0 0.0
    %3661 = vmatprep.subr.mxu0 0.0
    %3662 = vmatpush1.msra.mxu0 0.0
    %3663 = vmatprep.subr.mxu0 0.0
    %3664 = vmatpush1.msra.mxu0 0.0
    %3665 = vmatprep.subr.mxu0 0.0
    %3666 = vmatpush1.msra.mxu0 0.0
    %3667 = vmatprep.subr.mxu0 0.0
    %3668 = vmatpush1.msra.mxu0 0.0
    %3669 = vmatprep.subr.mxu0 0.0
    %3670 = vmatpush1.msra.mxu0 0.0
    %3671 = vmatprep.subr.mxu0 0.0
    %3672 = vmatpush1.msra.mxu0 0.0
    %3673 = vmatprep.subr.mxu0 0.0
    %3674 = vmatpush1.msra.mxu0 0.0
    %3675 = vmatprep.mubr.f32.mxu0 0.0
    %3676 = vmatmul.mubr.f32.gmra.mrb[0].mxu0 %v3588
    %v3677 = vpop.f32.mrb[0].mxu0
    %v3678 = vadd.f32 %v3585, %v3677
    %v3679 = vpop.f32.mrb[0].mxu0
    %3680 = vmatprep.mubr.f32.mxu0 0.0
    %3681 = vmatmul.mubr.f32.gmra.mrb[0].mxu0 %v3591
    %v3682 = vpop.f32.mrb[0].mxu0
    %v3683 = vadd.f32 %v3585, %v3682
    %v3684 = vpop.f32.mrb[0].mxu0
    %3685 = vmatprep.mubr.f32.mxu0 0.0
    %3686 = vmatmul.mubr.f32.gmra.mrb[0].mxu0 %v3594
    %v3687 = vpop.f32.mrb[0].mxu0
    %v3688 = vadd.f32 %v3585, %v3687
    %v3689 = vpop.f32.mrb[0].mxu0
    %3690 = vmatprep.mubr.f32.mxu0 0.0
    %3691 = vmatmul.mubr.f32.gmra.mrb[0].mxu0 %v3597
    %v3692 = vpop.f32.mrb[0].mxu0
    %v3693 = vadd.f32 %v3585, %v3692
    %v3694 = vpop.f32.mrb[0].mxu0
    %3695 = vmatprep.mubr.f32.mxu0 0.0
    %3696 = vmatmul.mubr.f32.gmra.mrb[0].mxu0 %v3600
    %v3697 = vpop.f32.mrb[0].mxu0
    %v3698 = vadd.f32 %v3585, %v3697
    %v3699 = vpop.f32.mrb[0].mxu0
    %3700 = vmatprep.mubr.f32.mxu0 0.0
    %3701 = vmatmul.mubr.f32.gmra.mrb[0].mxu0 %v3603
    %v3702 = vpop.f32.mrb[0].mxu0
    %v3703 = vadd.f32 %v3585, %v3702
    %v3704 = vpop.f32.mrb[0].mxu0
    %3705 = vmatprep.mubr.f32.mxu0 0.0
    %3706 = vmatmul.mubr.f32.gmra.mrb[0].mxu0 %v3606
    %v3707 = vpop.f32.mrb[0].mxu0
    %v3708 = vadd.f32 %v3585, %v3707
    %v3709 = vpop.f32.mrb[0].mxu0
    %3710 = vmatprep.mubr.f32.mxu0 0.0
    %3711 = vmatmul.mubr.f32.gmra.mrb[0].mxu0 %v3609
    %v3712 = vpop.f32.mrb[0].mxu0
    %v3713 = vadd.f32 %v3585, %v3712
    %v3714 = vpop.f32.mrb[0].mxu0
    %3715 = vdwg.mxu0
    %v3716 = vadd.f32 %v1944, %v3678
    %v3717 = vadd.f32 %v1945, %v3683
    %v3718 = vadd.f32 %v1946, %v3688
    %v3719 = vadd.f32 %v1947, %v3693
    %v3720 = vadd.f32 %v1948, %v3698
    %v3721 = vadd.f32 %v1949, %v3703
    %v3722 = vadd.f32 %v1950, %v3708
    %v3723 = vadd.f32 %v1951, %v3713
    %v3724 = vld [vmem:[%s16] sm:$0xff]
    %v3725 = vld [vmem:[%s16 + $0x8] sm:$0xff]
    %v3726 = vld [vmem:[%s16 + $0x10] sm:$0xff]
    %v3727 = vld [vmem:[%s16 + $0x18] sm:$0xff]
    %v3728 = vld [vmem:[%s16 + $0x20] sm:$0xff]
    %v3729 = vld [vmem:[%s16 + $0x28] sm:$0xff]
    %v3730 = vld [vmem:[%s16 + $0x30] sm:$0xff]
    %v3731 = vld [vmem:[%s16 + $0x38] sm:$0xff]
    %v3732 = vld [vmem:[#allocation8] sm:$0x1]
    %v3734 = vlaneseq
    %v3735 = vshrl.u32 %v3734, 7
    %v3736 = vsub.s32 0, %v3735
    %v3737 = vrot.slane %v3732, %v3736
    %v3740 = vsel %vm331, %v3716, 0
    %v3743 = vsel %vm331, %v3717, 0
    %v3746 = vsel %vm331, %v3718, 0
    %v3749 = vsel %vm331, %v3719, 0
    %v3752 = vsel %vm331, %v3720, 0
    %v3755 = vsel %vm331, %v3721, 0
    %v3758 = vsel %vm331, %v3722, 0
    %v3761 = vsel %vm331, %v3723, 0
    %3763 = vmatprep.subr.mxu0 0.0
    %3764 = vmatpush1.msra.mxu0 %v3724
    %3765 = vmatprep.subr.mxu0 0.0
    %3766 = vmatpush1.msra.mxu0 %v3725
    %3767 = vmatprep.subr.mxu0 0.0
    %3768 = vmatpush1.msra.mxu0 %v3726
    %3769 = vmatprep.subr.mxu0 0.0
    %3770 = vmatpush1.msra.mxu0 %v3727
    %3771 = vmatprep.subr.mxu0 0.0
    %3772 = vmatpush1.msra.mxu0 %v3728
    %3773 = vmatprep.subr.mxu0 0.0
    %3774 = vmatpush1.msra.mxu0 %v3729
    %3775 = vmatprep.subr.mxu0 0.0
    %3776 = vmatpush1.msra.mxu0 %v3730
    %3777 = vmatprep.subr.mxu0 0.0
    %3778 = vmatpush1.msra.mxu0 %v3731
    %3779 = vmatprep.subr.mxu0 0.0
    %3780 = vmatpush1.msra.mxu0 0.0
    %3781 = vmatprep.subr.mxu0 0.0
    %3782 = vmatpush1.msra.mxu0 0.0
    %3783 = vmatprep.subr.mxu0 0.0
    %3784 = vmatpush1.msra.mxu0 0.0
    %3785 = vmatprep.subr.mxu0 0.0
    %3786 = vmatpush1.msra.mxu0 0.0
    %3787 = vmatprep.subr.mxu0 0.0
    %3788 = vmatpush1.msra.mxu0 0.0
    %3789 = vmatprep.subr.mxu0 0.0
    %3790 = vmatpush1.msra.mxu0 0.0
    %3791 = vmatprep.subr.mxu0 0.0
    %3792 = vmatpush1.msra.mxu0 0.0
    %3793 = vmatprep.subr.mxu0 0.0
    %3794 = vmatpush1.msra.mxu0 0.0
    %3795 = vmatprep.subr.mxu0 0.0
    %3796 = vmatpush1.msra.mxu0 0.0
    %3797 = vmatprep.subr.mxu0 0.0
    %3798 = vmatpush1.msra.mxu0 0.0
    %3799 = vmatprep.subr.mxu0 0.0
    %3800 = vmatpush1.msra.mxu0 0.0
    %3801 = vmatprep.subr.mxu0 0.0
    %3802 = vmatpush1.msra.mxu0 0.0
    %3803 = vmatprep.subr.mxu0 0.0
    %3804 = vmatpush1.msra.mxu0 0.0
    %3805 = vmatprep.subr.mxu0 0.0
    %3806 = vmatpush1.msra.mxu0 0.0
    %3807 = vmatprep.subr.mxu0 0.0
    %3808 = vmatpush1.msra.mxu0 0.0
    %3809 = vmatprep.subr.mxu0 0.0
    %3810 = vmatpush1.msra.mxu0 0.0
    %3811 = vmatprep.subr.mxu0 0.0
    %3812 = vmatpush1.msra.mxu0 0.0
    %3813 = vmatprep.subr.mxu0 0.0
    %3814 = vmatpush1.msra.mxu0 0.0
    %3815 = vmatprep.subr.mxu0 0.0
    %3816 = vmatpush1.msra.mxu0 0.0
    %3817 = vmatprep.subr.mxu0 0.0
    %3818 = vmatpush1.msra.mxu0 0.0
    %3819 = vmatprep.subr.mxu0 0.0
    %3820 = vmatpush1.msra.mxu0 0.0
    %3821 = vmatprep.subr.mxu0 0.0
    %3822 = vmatpush1.msra.mxu0 0.0
    %3823 = vmatprep.subr.mxu0 0.0
    %3824 = vmatpush1.msra.mxu0 0.0
    %3825 = vmatprep.subr.mxu0 0.0
    %3826 = vmatpush1.msra.mxu0 0.0
    %3827 = vmatprep.mubr.f32.mxu0 0.0
    %3828 = vmatmul.mubr.f32.gmra.mrb[0].mxu0 %v3740
    %v3829 = vpop.f32.mrb[0].mxu0
    %v3830 = vadd.f32 %v3737, %v3829
    %v3831 = vpop.f32.mrb[0].mxu0
    %3832 = vmatprep.mubr.f32.mxu0 0.0
    %3833 = vmatmul.mubr.f32.gmra.mrb[0].mxu0 %v3743
    %v3834 = vpop.f32.mrb[0].mxu0
    %v3835 = vadd.f32 %v3737, %v3834
    %v3836 = vpop.f32.mrb[0].mxu0
    %3837 = vmatprep.mubr.f32.mxu0 0.0
    %3838 = vmatmul.mubr.f32.gmra.mrb[0].mxu0 %v3746
    %v3839 = vpop.f32.mrb[0].mxu0
    %v3840 = vadd.f32 %v3737, %v3839
    %v3841 = vpop.f32.mrb[0].mxu0
    %3842 = vmatprep.mubr.f32.mxu0 0.0
    %3843 = vmatmul.mubr.f32.gmra.mrb[0].mxu0 %v3749
    %v3844 = vpop.f32.mrb[0].mxu0
    %v3845 = vadd.f32 %v3737, %v3844
    %v3846 = vpop.f32.mrb[0].mxu0
    %3847 = vmatprep.mubr.f32.mxu0 0.0
    %3848 = vmatmul.mubr.f32.gmra.mrb[0].mxu0 %v3752
    %v3849 = vpop.f32.mrb[0].mxu0
    %v3850 = vadd.f32 %v3737, %v3849
    %v3851 = vpop.f32.mrb[0].mxu0
    %3852 = vmatprep.mubr.f32.mxu0 0.0
    %3853 = vmatmul.mubr.f32.gmra.mrb[0].mxu0 %v3755
    %v3854 = vpop.f32.mrb[0].mxu0
    %v3855 = vadd.f32 %v3737, %v3854
    %v3856 = vpop.f32.mrb[0].mxu0
    %3857 = vmatprep.mubr.f32.mxu0 0.0
    %3858 = vmatmul.mubr.f32.gmra.mrb[0].mxu0 %v3758
    %v3859 = vpop.f32.mrb[0].mxu0
    %v3860 = vadd.f32 %v3737, %v3859
    %v3861 = vpop.f32.mrb[0].mxu0
    %3862 = vmatprep.mubr.f32.mxu0 0.0
    %3863 = vmatmul.mubr.f32.gmra.mrb[0].mxu0 %v3761
    %v3864 = vpop.f32.mrb[0].mxu0
    %v3865 = vadd.f32 %v3737, %v3864
    %v3866 = vpop.f32.mrb[0].mxu0
    %3867 = vdwg.mxu0
    %v3868 = vmax.f32 %v3830, 0.0
    %v3869 = vmax.f32 %v3835, 0.0
    %v3870 = vmax.f32 %v3840, 0.0
    %v3871 = vmax.f32 %v3845, 0.0
    %v3872 = vmax.f32 %v3850, 0.0
    %v3873 = vmax.f32 %v3855, 0.0
    %v3874 = vmax.f32 %v3860, 0.0
    %v3875 = vmax.f32 %v3865, 0.0
    %v3876 = vld [vmem:[%s18] sm:$0xff]
    %v3877 = vld [vmem:[%s18 + $0x8] sm:$0xff]
    %v3878 = vld [vmem:[%s18 + $0x10] sm:$0xff]
    %v3879 = vld [vmem:[%s18 + $0x18] sm:$0xff]
    %v3880 = vld [vmem:[%s18 + $0x20] sm:$0xff]
    %v3881 = vld [vmem:[%s18 + $0x28] sm:$0xff]
    %v3882 = vld [vmem:[%s18 + $0x30] sm:$0xff]
    %v3883 = vld [vmem:[%s18 + $0x38] sm:$0xff]
    %v3884 = vld [vmem:[%s19] sm:$0x1]
    %v3886 = vlaneseq
    %v3887 = vshrl.u32 %v3886, 7
    %v3888 = vsub.s32 0, %v3887
    %v3889 = vrot.slane %v3884, %v3888
    %v3892 = vsel %vm331, %v3868, 0
    %v3895 = vsel %vm331, %v3869, 0
    %v3898 = vsel %vm331, %v3870, 0
    %v3901 = vsel %vm331, %v3871, 0
    %v3904 = vsel %vm331, %v3872, 0
    %v3907 = vsel %vm331, %v3873, 0
    %v3910 = vsel %vm331, %v3874, 0
    %v3913 = vsel %vm331, %v3875, 0
    %3915 = vmatprep.subr.mxu0 0.0
    %3916 = vmatpush1.msra.mxu0 %v3876
    %3917 = vmatprep.subr.mxu0 0.0
    %3918 = vmatpush1.msra.mxu0 %v3877
    %3919 = vmatprep.subr.mxu0 0.0
    %3920 = vmatpush1.msra.mxu0 %v3878
    %3921 = vmatprep.subr.mxu0 0.0
    %3922 = vmatpush1.msra.mxu0 %v3879
    %3923 = vmatprep.subr.mxu0 0.0
    %3924 = vmatpush1.msra.mxu0 %v3880
    %3925 = vmatprep.subr.mxu0 0.0
    %3926 = vmatpush1.msra.mxu0 %v3881
    %3927 = vmatprep.subr.mxu0 0.0
    %3928 = vmatpush1.msra.mxu0 %v3882
    %3929 = vmatprep.subr.mxu0 0.0
    %3930 = vmatpush1.msra.mxu0 %v3883
    %3931 = vmatprep.subr.mxu0 0.0
    %3932 = vmatpush1.msra.mxu0 0.0
    %3933 = vmatprep.subr.mxu0 0.0
    %3934 = vmatpush1.msra.mxu0 0.0
    %3935 = vmatprep.subr.mxu0 0.0
    %3936 = vmatpush1.msra.mxu0 0.0
    %3937 = vmatprep.subr.mxu0 0.0
    %3938 = vmatpush1.msra.mxu0 0.0
    %3939 = vmatprep.subr.mxu0 0.0
    %3940 = vmatpush1.msra.mxu0 0.0
    %3941 = vmatprep.subr.mxu0 0.0
    %3942 = vmatpush1.msra.mxu0 0.0
    %3943 = vmatprep.subr.mxu0 0.0
    %3944 = vmatpush1.msra.mxu0 0.0
    %3945 = vmatprep.subr.mxu0 0.0
    %3946 = vmatpush1.msra.mxu0 0.0
    %3947 = vmatprep.subr.mxu0 0.0
    %3948 = vmatpush1.msra.mxu0 0.0
    %3949 = vmatprep.subr.mxu0 0.0
    %3950 = vmatpush1.msra.mxu0 0.0
    %3951 = vmatprep.subr.mxu0 0.0
    %3952 = vmatpush1.msra.mxu0 0.0
    %3953 = vmatprep.subr.mxu0 0.0
    %3954 = vmatpush1.msra.mxu0 0.0
    %3955 = vmatprep.subr.mxu0 0.0
    %3956 = vmatpush1.msra.mxu0 0.0
    %3957 = vmatprep.subr.mxu0 0.0
    %3958 = vmatpush1.msra.mxu0 0.0
    %3959 = vmatprep.subr.mxu0 0.0
    %3960 = vmatpush1.msra.mxu0 0.0
    %3961 = vmatprep.subr.mxu0 0.0
    %3962 = vmatpush1.msra.mxu0 0.0
    %3963 = vmatprep.subr.mxu0 0.0
    %3964 = vmatpush1.msra.mxu0 0.0
    %3965 = vmatprep.subr.mxu0 0.0
    %3966 = vmatpush1.msra.mxu0 0.0
    %3967 = vmatprep.subr.mxu0 0.0
    %3968 = vmatpush1.msra.mxu0 0.0
    %3969 = vmatprep.subr.mxu0 0.0
    %3970 = vmatpush1.msra.mxu0 0.0
    %3971 = vmatprep.subr.mxu0 0.0
    %3972 = vmatpush1.msra.mxu0 0.0
    %3973 = vmatprep.subr.mxu0 0.0
    %3974 = vmatpush1.msra.mxu0 0.0
    %3975 = vmatprep.subr.mxu0 0.0
    %3976 = vmatpush1.msra.mxu0 0.0
    %3977 = vmatprep.subr.mxu0 0.0
    %3978 = vmatpush1.msra.mxu0 0.0
    %3979 = vmatprep.mubr.f32.mxu0 0.0
    %3980 = vmatmul.mubr.f32.gmra.mrb[0].mxu0 %v3892
    %v3981 = vpop.f32.mrb[0].mxu0
    %v3982 = vadd.f32 %v3889, %v3981
    %v3983 = vpop.f32.mrb[0].mxu0
    %3984 = vmatprep.mubr.f32.mxu0 0.0
    %3985 = vmatmul.mubr.f32.gmra.mrb[0].mxu0 %v3895
    %v3986 = vpop.f32.mrb[0].mxu0
    %v3987 = vadd.f32 %v3889, %v3986
    %v3988 = vpop.f32.mrb[0].mxu0
    %3989 = vmatprep.mubr.f32.mxu0 0.0
    %3990 = vmatmul.mubr.f32.gmra.mrb[0].mxu0 %v3898
    %v3991 = vpop.f32.mrb[0].mxu0
    %v3992 = vadd.f32 %v3889, %v3991
    %v3993 = vpop.f32.mrb[0].mxu0
    %3994 = vmatprep.mubr.f32.mxu0 0.0
    %3995 = vmatmul.mubr.f32.gmra.mrb[0].mxu0 %v3901
    %v3996 = vpop.f32.mrb[0].mxu0
    %v3997 = vadd.f32 %v3889, %v3996
    %v3998 = vpop.f32.mrb[0].mxu0
    %3999 = vmatprep.mubr.f32.mxu0 0.0
    %4000 = vmatmul.mubr.f32.gmra.mrb[0].mxu0 %v3904
    %v4001 = vpop.f32.mrb[0].mxu0
    %v4002 = vadd.f32 %v3889, %v4001
    %v4003 = vpop.f32.mrb[0].mxu0
    %4004 = vmatprep.mubr.f32.mxu0 0.0
    %4005 = vmatmul.mubr.f32.gmra.mrb[0].mxu0 %v3907
    %v4006 = vpop.f32.mrb[0].mxu0
    %v4007 = vadd.f32 %v3889, %v4006
    %v4008 = vpop.f32.mrb[0].mxu0
    %4009 = vmatprep.mubr.f32.mxu0 0.0
    %4010 = vmatmul.mubr.f32.gmra.mrb[0].mxu0 %v3910
    %v4011 = vpop.f32.mrb[0].mxu0
    %v4012 = vadd.f32 %v3889, %v4011
    %v4013 = vpop.f32.mrb[0].mxu0
    %4014 = vmatprep.mubr.f32.mxu0 0.0
    %4015 = vmatmul.mubr.f32.gmra.mrb[0].mxu0 %v3913
    %v4016 = vpop.f32.mrb[0].mxu0
    %v4017 = vadd.f32 %v3889, %v4016
    %v4018 = vpop.f32.mrb[0].mxu0
    %4019 = vdwg.mxu0
    %4020 = vst [vmem:[%s20] sm:$0xff] %v3982
    %4021 = vst [vmem:[%s20 + $0x8] sm:$0xff] %v3987
    %4022 = vst [vmem:[%s20 + $0x10] sm:$0xff] %v3992
    %4023 = vst [vmem:[%s20 + $0x18] sm:$0xff] %v3997
    %4024 = vst [vmem:[%s20 + $0x20] sm:$0xff] %v4002
    %4025 = vst [vmem:[%s20 + $0x28] sm:$0xff] %v4007
    %4026 = vst [vmem:[%s20 + $0x30] sm:$0xff] %v4012
    %4027 = vst [vmem:[%s20 + $0x38] sm:$0xff] %v4017
    // Predicated region
    $region98: #{temporal_graph_network.1} parent=1 // pred_check
      _
    $region99: #{temporal_graph_network.1} parent=1 // pred_check_branch
      %4029 = sbr.rel (0) target = $region101
    $region100: #{temporal_graph_network.1} parent=1 // pred_region
      _
    $region101: #{temporal_graph_network.1} parent=1 // pred_fallthru
      _
    // Predicated region
    $region102: #{temporal_graph_network.1} parent=1 // pred_check
      _
    $region103: #{temporal_graph_network.1} parent=1 // pred_check_branch
      %4031 = sbr.rel (0) target = $region105
    $region104: #{temporal_graph_network.1} parent=1 // pred_region
      _
    $region105: #{temporal_graph_network.1} parent=1 // pred_fallthru
      _
    %4032 = vsyncpa [#allocation4], 1
    %4033 = vsyncpa [#allocation6], 1
    %4034 = vsyncpa [#allocation9], 1

</llo_original>
